<compile_context>
chip_gen: v7x
topology: tpu7x:2x2x1
jax: 0.10.0
libtpu: 0.0.40
codegen_flags: <defaults>
</compile_context>

<pallas_src>
import math
import functools

import jax
import jax.numpy as jnp
from jax import lax
from jax.experimental import pallas as pl
from jax.experimental.pallas import tpu as pltpu


def _round_up(v, m):
    return ((v + m - 1) // m) * m


# --------------------------- stage 1: conv_reduce (1x1) ---------------------------

def _reduce_kernel(w_ref, x_ref, b_ref, o_ref):
    # one (batch, spatial-tile) grid step: (IC, C) @ (C, TN) + (IC, 1)
    y = jnp.dot(w_ref[...], x_ref[0], preferred_element_type=jnp.float32)
    o_ref[0] = (y + b_ref[...]).astype(o_ref.dtype)


def conv_reduce(x_flat, w, b):
    """x_flat: (B, C, H*W), w: (IC, C), b: (IC, 1) -> (B, IC, H*W)."""
    B, C, HW = x_flat.shape
    IC = w.shape[0]
    TN = HW if HW <= 2048 else 2048          # spatial tile (multiple of 128 at real shapes)
    assert HW % TN == 0, "spatial tile must divide H*W"
    return pl.pallas_call(
        _reduce_kernel,
        out_shape=jax.ShapeDtypeStruct((B, IC, HW), jnp.float32),
        grid_spec=pltpu.PrefetchScalarGridSpec(
            num_scalar_prefetch=0,
            grid=(B, HW // TN),
            in_specs=[
                pl.BlockSpec((IC, C), lambda bb, t: (0, 0)),        # weight stays resident
                pl.BlockSpec((1, C, TN), lambda bb, t: (bb, 0, t)),
                pl.BlockSpec((IC, 1), lambda bb, t: (0, 0)),
            ],
            out_specs=pl.BlockSpec((1, IC, TN), lambda bb, t: (bb, 0, t)),
        ),
        compiler_params=pltpu.CompilerParams(
            dimension_semantics=("parallel", "parallel")),
    )(w, x_flat, b)


# ------------------- stage 2: fused proj -> Gram -> GCN -> softmax -------------------

def _make_fused_branches_kernel(IC, H, W, branches, need_xr):
    """branches: list of dicts (r, s, n, M, Mp, use_patches); grid=(B,), per-batch body."""
    per = [6 if br['use_patches'] else 5 for br in branches]
    n_in = (1 if need_xr else 0) + sum(per)

    def kernel(*refs):
        in_refs, out_refs = refs[:n_in], refs[n_in:]
        pos = 1 if need_xr else 0
        xr3 = None
        for bi, br in enumerate(branches):
            r, s, n, M, Mp = br['r'], br['s'], br['n'], br['M'], br['Mp']

            if br['use_patches']:
                # stride > 1 branch: patch matrix built in the wrapper
                p_ref, wp_ref, bp_ref, w1_ref, b1_ref, w2_ref = in_refs[pos:pos + 6]
                pos += 6
                proj = jnp.dot(wp_ref[...], p_ref[0],
                               preferred_element_type=jnp.float32) + bp_ref[...]
            else:
                # unit-stride branch: in-kernel im2col via r*r contiguous window taps
                wpt_ref, bp_ref, w1_ref, b1_ref, w2_ref = in_refs[pos:pos + 5]
                pos += 5
                if xr3 is None:
                    xr3 = in_refs[0][0]                    # (IC, H, W)
                wpt = wpt_ref[...]                         # (r*r, IC, IC)
                acc = jnp.zeros((IC, M), jnp.float32)
                t = 0
                for dy in range(r):
                    for dx in range(r):
                        tap = xr3[:, dy:dy + n, dx:dx + n].reshape(IC, M)
                        acc = acc + jnp.dot(wpt[t], tap,
                                            preferred_element_type=jnp.float32)
                        t += 1
                proj = acc + bp_ref[...]                   # (IC, M)

            # per-channel Gram matrix  P @ P^T  (batched over IC)
            P = proj.reshape(IC, n, n)
            G3 = lax.dot_general(P, P, (((2,), (2,)), ((0,), (0,))),
                                 preferred_element_type=jnp.float32)   # (IC, n, n)
            G = G3.reshape(IC, M)
            if Mp > M:
                # pad once so the whole GCN chain + output store are 128-lane dense
                G = jnp.concatenate(
                    [G, jnp.zeros((IC, Mp - M), jnp.float32)], axis=1)

            # GCN conv1 (node mixing, weights pre-padded to Mp) + residual + ReLU
            Hh = lax.dot_general(G, w1_ref[...], (((1,), (1,)), ((), ())),
                                 preferred_element_type=jnp.float32) + b1_ref[...]
            Hh = jnp.maximum(Hh + G, 0.0)                  # (IC, Mp)

            # GCN conv2 (channel mixing)
            Y = jnp.dot(w2_ref[...], Hh, preferred_element_type=jnp.float32)

            # softmax over channels (rows); exact EUP reciprocal
            mx = jnp.max(Y, axis=0, keepdims=True)
            e = jnp.exp(Y - mx)
            ssum = jnp.sum(e, axis=0, keepdims=True)
            sm = e * pl.reciprocal(ssum, approx=False)

            out_refs[bi][0] = sm.astype(out_refs[bi].dtype)   # dense (IC, Mp) store

    return kernel


# ------------------------------- glue (JAX wrapper) -------------------------------

def im2col_bm(xr, r, s, n):
    """xr: (B, IC, H, W) -> (B, IC*r*r, n*n); rows ordered (c, dy, dx) to match
    PyTorch Conv2d weight.reshape(OC, IC*r*r)."""
    B, IC, H, W = xr.shape
    cols = [xr[:, :, dy:dy + s * n:s, dx:dx + s * n:s]
            for dy in range(r) for dx in range(r)]
    p = jnp.stack(cols, axis=2)                    # (B, IC, r*r, n, n)
    return p.reshape(B, IC * r * r, n * n)


def region_unit_config(channelin, size):
    if channelin > 320:
        inter = channelin // 16
    else:
        inter = channelin // 2
    if channelin == 6:
        inter = channelin
    if size > 16:
        r1, r2, r3 = 3, 5, 7
    else:
        r1, r2, r3 = 1, 2, 3
    s1 = r1                          # NOTE: matches PyTorch -- s1 is fixed BEFORE the
    s2 = math.ceil(r2 / 2)           # size==256 override of r1 below.
    s3 = math.ceil(r3 / 2)
    if size == 256:
        r1, r2, r3 = 5, 7, 9
        s2 = math.ceil(r2 / 2)
        s3 = math.ceil(r3 / 2)
    n1 = (size - r1) // s1 + 1
    n2 = (size - r2) // s2 + 1
    n3 = (size - r3) // s3 + 1
    return dict(inter=inter, rs=(r1, r2, r3), st=(s1, s2, s3), nodes=(n1, n2, n3))


def init_params(key, channelin, cfg):
    IC = cfg['inter']
    keys = jax.random.split(key, 20)

    def u(k, shape, fan_in):
        bound = 1.0 / math.sqrt(fan_in)
        return jax.random.uniform(k, shape, jnp.float32, -bound, bound)

    params = {}
    params['w_reduce'] = u(keys[0], (IC, channelin, 1, 1), channelin)
    params['b_reduce'] = u(keys[1], (IC,), channelin)
    ki = 2
    for i, rs in enumerate(cfg['rs'], start=1):
        fan = IC * rs * rs
        params[f'w_proj{i}'] = u(keys[ki], (IC, IC, rs, rs), fan); ki += 1
        params[f'b_proj{i}'] = u(keys[ki], (IC,), fan); ki += 1
    for i, n in enumerate(cfg['nodes'], start=1):
        M = n * n
        params[f'gcn{i}_w1'] = u(keys[ki], (M, M), M); ki += 1     # Conv1d(num_node, num_node, 1)
        params[f'gcn{i}_b1'] = u(keys[ki], (M,), M); ki += 1
        params[f'gcn{i}_w2'] = u(keys[ki], (IC, IC), IC); ki += 1  # Conv1d(IC, IC, 1, bias=False)
    return params


def region_unit_forward(x, params, cfg):
    B, C, H, W = x.shape
    IC = cfg['inter']
    HW = H * W

    # conv_reduce: grid over (batch, spatial tile); x indexed directly, no wrapper transpose
    # ((B,C,H,W)->(B,C,HW) is a free contiguous reshape).
    xr_flat = conv_reduce(x.reshape(B, C, HW),
                          params['w_reduce'].reshape(IC, C),
                          params['b_reduce'].reshape(IC, 1))
    xr = xr_flat.reshape(B, IC, H, W)

    branches, args, in_specs = [], [], []
    out_shapes, out_specs = [], []

    need_xr = any(s == 1 for s in cfg['st'])
    if need_xr:
        args.append(xr)
        in_specs.append(pl.BlockSpec((1, IC, H, W), lambda b: (b, 0, 0, 0)))

    for i, (r, s, n) in enumerate(zip(cfg['rs'], cfg['st'], cfg['nodes']), start=1):
        M = n * n
        Mp = _round_up(M, 128)
        use_patches = (s != 1)
        branches.append(dict(r=r, s=s, n=n, M=M, Mp=Mp, use_patches=use_patches))

        wp = params[f'w_proj{i}']                    # (IC, IC, r, r)
        bp = params[f'b_proj{i}'].reshape(IC, 1)
        w1 = params[f'gcn{i}_w1']                    # (M, M)
        b1 = params[f'gcn{i}_b1']                    # (M,)
        w2 = params[f'gcn{i}_w2']                    # (IC, IC)

        # lane-pad GCN weights so G/H/Y and the output store are 128-dense
        if Mp > M:
            w1p = jnp.zeros((Mp, Mp), jnp.float32).at[:M, :M].set(w1)
            b1p = jnp.zeros((1, Mp), jnp.float32).at[0, :M].set(b1)
        else:
            w1p, b1p = w1, b1.reshape(1, M)
        # TODO(synk): at production shapes (size=256) K-tile the (M,M) GCN conv1 over an
        # "arbitrary" grid axis with a VMEM f32 accumulator and explicit vmem_limit_bytes.

        if use_patches:
            # TODO(synk): production path = in-kernel im2col for the strided branch
            # (xr via pl.ANY + strided DMA taps) to avoid the r*r patch-matrix HBM blow-up.
            args.append(im2col_bm(xr, r, s, n))                       # (B, IC*r*r, M)
            in_specs.append(pl.BlockSpec((1, IC * r * r, M), lambda b: (b, 0, 0)))
            args.append(wp.reshape(IC, IC * r * r))
            in_specs.append(pl.BlockSpec((IC, IC * r * r), lambda b: (0, 0)))
        else:
            # unit-stride branch: taps extracted inside the kernel from xr
            args.append(jnp.transpose(wp, (2, 3, 0, 1)).reshape(r * r, IC, IC))
            in_specs.append(pl.BlockSpec((r * r, IC, IC), lambda b: (0, 0, 0)))

        args += [bp, w1p, b1p, w2]
        in_specs += [pl.BlockSpec((IC, 1), lambda b: (0, 0)),
                     pl.BlockSpec((Mp, Mp), lambda b: (0, 0)),
                     pl.BlockSpec((1, Mp), lambda b: (0, 0)),
                     pl.BlockSpec((IC, IC), lambda b: (0, 0))]

        out_shapes.append(jax.ShapeDtypeStruct((B, IC, Mp), jnp.float32))
        out_specs.append(pl.BlockSpec((1, IC, Mp), lambda b: (b, 0, 0)))

    kernel = _make_fused_branches_kernel(IC, H, W, branches, need_xr)
    padded = pl.pallas_call(
        kernel,
        out_shape=tuple(out_shapes),
        grid_spec=pltpu.PrefetchScalarGridSpec(
            num_scalar_prefetch=0, grid=(B,),
            in_specs=in_specs, out_specs=out_specs),
        compiler_params=pltpu.CompilerParams(
            dimension_semantics=("parallel",)),
    )(*args)

    outs = []
    for o, br in zip(padded, branches):
        n, M = br['n'], br['M']
        outs.append(o[:, :, :M].reshape(B, IC, n, n))
    return tuple(outs)


# ------------------------------ pure-JAX reference ------------------------------

def region_unit_ref(x, params, cfg):
    B, C, H, W = x.shape
    IC = cfg['inter']
    hi = lax.Precision.HIGHEST
    xr = (jnp.einsum('oc,bchw->bohw', params['w_reduce'].reshape(IC, C), x, precision=hi)
          + params['b_reduce'][None, :, None, None])
    outs = []
    for i, (r, s, n) in enumerate(zip(cfg['rs'], cfg['st'], cfg['nodes']), start=1):
        proj = lax.conv_general_dilated(
            xr, params[f'w_proj{i}'], (s, s), 'VALID',
            dimension_numbers=('NCHW', 'OIHW', 'NCHW'), precision=hi)
        proj = proj + params[f'b_proj{i}'][None, :, None, None]
        G = jnp.einsum('bcij,bckj->bcik', proj, proj, precision=hi).reshape(B, IC, n * n)
        Hh = (jnp.einsum('bcm,km->bck', G, params[f'gcn{i}_w1'], precision=hi)
              + params[f'gcn{i}_b1'][None, None, :])
        Hh = jax.nn.relu(Hh + G)
        Y = jnp.einsum('oc,bcm->bom', params[f'gcn{i}_w2'], Hh, precision=hi)
        outs.append(jax.nn.softmax(Y, axis=1).reshape(B, IC, n, n))
    return tuple(outs)


if __name__ == "__main__":
    key = jax.random.PRNGKey(0)
    channelin, size, batch = 8, 16, 2
    cfg = region_unit_config(channelin, size)          # IC=4, nodes=(16, 15, 7)
    kx, kp = jax.random.split(key)
    x = jax.random.normal(kx, (batch, channelin, size, size), jnp.float32)
    params = init_params(kp, channelin, cfg)

    fwd = jax.jit(functools.partial(region_unit_forward, cfg=cfg))
    outs = jax.block_until_ready(fwd(x, params))

    refs = region_unit_ref(x, params, cfg)
    for o, r_, n in zip(outs, refs, cfg['nodes']):
        assert o.shape == (batch, cfg['inter'], n, n), o.shape
        # exact reciprocal in the softmax -> channel sums are 1 to f32 rounding
        assert jnp.allclose(o.sum(axis=1), 1.0, atol=1e-3), "softmax channel sums"
        err = float(jnp.max(jnp.abs(o - r_)))
        # tolerance covers MXU f32 default-precision matmuls vs HIGHEST-precision reference
        assert jnp.allclose(o, r_, atol=1e-2, rtol=1e-2), f"max abs err {err}"
    print("KERNEL_OK")
</pallas_src>

<mosaic_0001>
module attributes {stable_mosaic.version = 11 : i64} {
  func.func @_reduce_kernel(%arg0: i32, %arg1: i32, %arg2: memref<4x8xf32, #tpu.memory_space<vmem>>, %arg3: memref<1x8x256xf32, #tpu.memory_space<vmem>>, %arg4: memref<4x1xf32, #tpu.memory_space<vmem>>, %arg5: memref<1x4x256xf32, #tpu.memory_space<vmem>>) attributes {dimension_semantics = [#tpu.dimension_semantics<parallel>, #tpu.dimension_semantics<parallel>], iteration_bounds = array<i64: 2, 1>, scalar_prefetch = 0 : i64, scratch_operands = 0 : i64, tpu.core_type = #tpu.core_type<tc>, window_params = [{pipeline_mode = #tpu.pipeline_mode<synchronous>, transform_indices = @transform_0, window_bounds = array<i64: 4, 8>}, {transform_indices = @transform_1, window_bounds = array<i64: 1, 8, 256>}, {pipeline_mode = #tpu.pipeline_mode<synchronous>, transform_indices = @transform_2, window_bounds = array<i64: 4, 1>}, {transform_indices = @transform_3, window_bounds = array<i64: 1, 4, 256>}]} {
    %c0 = arith.constant 0 : index
    %c0_0 = arith.constant 0 : index
    %0 = vector.load %arg2[%c0, %c0_0] : memref<4x8xf32, #tpu.memory_space<vmem>>, vector<4x8xf32>
    %c0_1 = arith.constant 0 : index
    %c0_2 = arith.constant 0 : index
    %c0_3 = arith.constant 0 : index
    %1 = vector.load %arg3[%c0_1, %c0_2, %c0_3] : memref<1x8x256xf32, #tpu.memory_space<vmem>>, vector<1x8x256xf32>
    %2 = vector.shape_cast %1 : vector<1x8x256xf32> to vector<8x256xf32>
    %cst = arith.constant dense<0.000000e+00> : vector<4x256xf32>
    %3 = tpu.matmul %0, %2, %cst {dimension_numbers = #tpu.dot_dimension_numbers<[1], [0], [0], [1], [0, 0, 1, 1], [], []>} : vector<4x8xf32>, vector<8x256xf32>, vector<4x256xf32> -> vector<4x256xf32>
    %c0_4 = arith.constant 0 : index
    %c0_5 = arith.constant 0 : index
    %4 = vector.load %arg4[%c0_4, %c0_5] : memref<4x1xf32, #tpu.memory_space<vmem>>, vector<4x1xf32>
    %5 = vector.broadcast %4 : vector<4x1xf32> to vector<4x256xf32>
    %6 = arith.addf %3, %5 : vector<4x256xf32>
    %c0_6 = arith.constant 0 : index
    %c0_7 = arith.constant 0 : index
    %c0_8 = arith.constant 0 : index
    %7 = vector.load %arg5[%c0_6, %c0_7, %c0_8] : memref<1x4x256xf32, #tpu.memory_space<vmem>>, vector<1x4x256xf32>
    %8 = vector.shape_cast %7 : vector<1x4x256xf32> to vector<4x256xf32>
    %9 = vector.shape_cast %6 : vector<4x256xf32> to vector<1x4x256xf32>
    tpu.vector_store %arg5[%c0_6, %c0_7, %c0_8], %9 {strides = array<i32>} : memref<1x4x256xf32, #tpu.memory_space<vmem>>, vector<1x4x256xf32>,
    return
  }
  func.func @transform_0(%arg0: i32, %arg1: i32) -> (i32, i32) {
    %c0_i32 = arith.constant 0 : i32
    %c0_i32_0 = arith.constant 0 : i32
    %c0_i32_1 = arith.constant 0 : i32
    return %c0_i32, %c0_i32_0 : i32, i32
  }
  func.func @transform_1(%arg0: i32, %arg1: i32) -> (i32, i32, i32) {
    %c0_i32 = arith.constant 0 : i32
    %c0_i32_0 = arith.constant 0 : i32
    return %arg0, %c0_i32, %arg1 : i32, i32, i32
  }
  func.func @transform_2(%arg0: i32, %arg1: i32) -> (i32, i32) {
    %c0_i32 = arith.constant 0 : i32
    %c0_i32_0 = arith.constant 0 : i32
    %c0_i32_1 = arith.constant 0 : i32
    return %c0_i32, %c0_i32_0 : i32, i32
  }
  func.func @transform_3(%arg0: i32, %arg1: i32) -> (i32, i32, i32) {
    %c0_i32 = arith.constant 0 : i32
    %c0_i32_0 = arith.constant 0 : i32
    return %arg0, %c0_i32, %arg1 : i32, i32, i32
  }
}

module attributes {stable_mosaic.version = 11 : i64} {
  func.func @kernel(%arg0: i32, %arg1: memref<1x4x16x16xf32, #tpu.memory_space<vmem>>, %arg2: memref<1x4x4xf32, #tpu.memory_space<vmem>>, %arg3: memref<4x1xf32, #tpu.memory_space<vmem>>, %arg4: memref<256x256xf32, #tpu.memory_space<vmem>>, %arg5: memref<1x256xf32, #tpu.memory_space<vmem>>, %arg6: memref<4x4xf32, #tpu.memory_space<vmem>>, %arg7: memref<4x4x4xf32, #tpu.memory_space<vmem>>, %arg8: memref<4x1xf32, #tpu.memory_space<vmem>>, %arg9: memref<256x256xf32, #tpu.memory_space<vmem>>, %arg10: memref<1x256xf32, #tpu.memory_space<vmem>>, %arg11: memref<4x4xf32, #tpu.memory_space<vmem>>, %arg12: memref<1x36x49xf32, #tpu.memory_space<vmem>>, %arg13: memref<4x36xf32, #tpu.memory_space<vmem>>, %arg14: memref<4x1xf32, #tpu.memory_space<vmem>>, %arg15: memref<128x128xf32, #tpu.memory_space<vmem>>, %arg16: memref<1x128xf32, #tpu.memory_space<vmem>>, %arg17: memref<4x4xf32, #tpu.memory_space<vmem>>, %arg18: memref<1x4x256xf32, #tpu.memory_space<vmem>>, %arg19: memref<1x4x256xf32, #tpu.memory_space<vmem>>, %arg20: memref<1x4x128xf32, #tpu.memory_space<vmem>>) attributes {dimension_semantics = [#tpu.dimension_semantics<parallel>], iteration_bounds = array<i64: 2>, scalar_prefetch = 0 : i64, scratch_operands = 0 : i64, tpu.core_type = #tpu.core_type<tc>, window_params = [{transform_indices = @transform_0, window_bounds = array<i64: 1, 4, 16, 16>}, {pipeline_mode = #tpu.pipeline_mode<synchronous>, transform_indices = @transform_1, window_bounds = array<i64: 1, 4, 4>}, {pipeline_mode = #tpu.pipeline_mode<synchronous>, transform_indices = @transform_2, window_bounds = array<i64: 4, 1>}, {pipeline_mode = #tpu.pipeline_mode<synchronous>, transform_indices = @transform_3, window_bounds = array<i64: 256, 256>}, {pipeline_mode = #tpu.pipeline_mode<synchronous>, transform_indices = @transform_4, window_bounds = array<i64: 1, 256>}, {pipeline_mode = #tpu.pipeline_mode<synchronous>, transform_indices = @transform_5, window_bounds = array<i64: 4, 4>}, {pipeline_mode = #tpu.pipeline_mode<synchronous>, transform_indices = @transform_6, window_bounds = array<i64: 4, 4, 4>}, {pipeline_mode = #tpu.pipeline_mode<synchronous>, transform_indices = @transform_7, window_bounds = array<i64: 4, 1>}, {pipeline_mode = #tpu.pipeline_mode<synchronous>, transform_indices = @transform_8, window_bounds = array<i64: 256, 256>}, {pipeline_mode = #tpu.pipeline_mode<synchronous>, transform_indices = @transform_9, window_bounds = array<i64: 1, 256>}, {pipeline_mode = #tpu.pipeline_mode<synchronous>, transform_indices = @transform_10, window_bounds = array<i64: 4, 4>}, {transform_indices = @transform_11, window_bounds = array<i64: 1, 36, 49>}, {pipeline_mode = #tpu.pipeline_mode<synchronous>, transform_indices = @transform_12, window_bounds = array<i64: 4, 36>}, {pipeline_mode = #tpu.pipeline_mode<synchronous>, transform_indices = @transform_13, window_bounds = array<i64: 4, 1>}, {pipeline_mode = #tpu.pipeline_mode<synchronous>, transform_indices = @transform_14, window_bounds = array<i64: 128, 128>}, {pipeline_mode = #tpu.pipeline_mode<synchronous>, transform_indices = @transform_15, window_bounds = array<i64: 1, 128>}, {pipeline_mode = #tpu.pipeline_mode<synchronous>, transform_indices = @transform_16, window_bounds = array<i64: 4, 4>}, {transform_indices = @transform_17, window_bounds = array<i64: 1, 4, 256>}, {transform_indices = @transform_18, window_bounds = array<i64: 1, 4, 256>}, {transform_indices = @transform_19, window_bounds = array<i64: 1, 4, 128>}]} {
    %c0 = arith.constant 0 : index
    %c0_0 = arith.constant 0 : index
    %c0_1 = arith.constant 0 : index
    %c0_2 = arith.constant 0 : index
    %0 = vector.load %arg1[%c0, %c0_0, %c0_1, %c0_2] : memref<1x4x16x16xf32, #tpu.memory_space<vmem>>, vector<1x4x16x16xf32>
    %1 = vector.shape_cast %0 : vector<1x4x16x16xf32> to vector<4x16x16xf32>
    %c0_3 = arith.constant 0 : index
    %c0_4 = arith.constant 0 : index
    %c0_5 = arith.constant 0 : index
    %2 = vector.load %arg2[%c0_3, %c0_4, %c0_5] : memref<1x4x4xf32, #tpu.memory_space<vmem>>, vector<1x4x4xf32>
    %cst = arith.constant 0.000000e+00 : f32
    %3 = vector.broadcast %cst : f32 to vector<4x256xf32>
    %4 = vector.shape_cast %1 : vector<4x16x16xf32> to vector<4x256xf32>
    %5 = vector.shape_cast %2 : vector<1x4x4xf32> to vector<4x4xf32>
    %cst_6 = arith.constant dense<0.000000e+00> : vector<4x256xf32>
    %6 = tpu.matmul %5, %4, %cst_6 {dimension_numbers = #tpu.dot_dimension_numbers<[1], [0], [0], [1], [0, 0, 1, 1], [], []>} : vector<4x4xf32>, vector<4x256xf32>, vector<4x256xf32> -> vector<4x256xf32>
    %7 = arith.addf %3, %6 : vector<4x256xf32>
    %c0_7 = arith.constant 0 : index
    %c0_8 = arith.constant 0 : index
    %8 = vector.load %arg3[%c0_7, %c0_8] : memref<4x1xf32, #tpu.memory_space<vmem>>, vector<4x1xf32>
    %9 = vector.broadcast %8 : vector<4x1xf32> to vector<4x256xf32>
    %10 = arith.addf %7, %9 : vector<4x256xf32>
    %11 = vector.shape_cast %10 : vector<4x256xf32> to vector<4x16x16xf32>
    %cst_9 = arith.constant dense<0.000000e+00> : vector<4x16x16xf32>
    %12 = tpu.matmul %11, %11, %cst_9 {dimension_numbers = #tpu.dot_dimension_numbers<[2], [2], [1], [1], [0, 0, 0, 1, 1, 1], [0], [0]>} : vector<4x16x16xf32>, vector<4x16x16xf32>, vector<4x16x16xf32> -> vector<4x16x16xf32>
    %13 = vector.shape_cast %12 : vector<4x16x16xf32> to vector<4x256xf32>
    %c0_10 = arith.constant 0 : index
    %c0_11 = arith.constant 0 : index
    %14 = vector.load %arg4[%c0_10, %c0_11] : memref<256x256xf32, #tpu.memory_space<vmem>>, vector<256x256xf32>
    %cst_12 = arith.constant dense<0.000000e+00> : vector<4x256xf32>
    %15 = tpu.matmul %13, %14, %cst_12 {dimension_numbers = #tpu.dot_dimension_numbers<[1], [1], [0], [0], [0, 0, 1, 0], [], []>} : vector<4x256xf32>, vector<256x256xf32>, vector<4x256xf32> -> vector<4x256xf32>
    %c0_13 = arith.constant 0 : index
    %c0_14 = arith.constant 0 : index
    %16 = vector.load %arg5[%c0_13, %c0_14] : memref<1x256xf32, #tpu.memory_space<vmem>>, vector<1x256xf32>
    %17 = vector.broadcast %16 : vector<1x256xf32> to vector<4x256xf32>
    %18 = arith.addf %15, %17 : vector<4x256xf32>
    %19 = arith.addf %18, %13 : vector<4x256xf32>
    %cst_15 = arith.constant 0.000000e+00 : f32
    %20 = vector.broadcast %cst_15 : f32 to vector<4x256xf32>
    %21 = arith.maximumf %19, %20 : vector<4x256xf32>
    %c0_16 = arith.constant 0 : index
    %c0_17 = arith.constant 0 : index
    %22 = vector.load %arg6[%c0_16, %c0_17] : memref<4x4xf32, #tpu.memory_space<vmem>>, vector<4x4xf32>
    %cst_18 = arith.constant dense<0.000000e+00> : vector<4x256xf32>
    %23 = tpu.matmul %22, %21, %cst_18 {dimension_numbers = #tpu.dot_dimension_numbers<[1], [0], [0], [1], [0, 0, 1, 1], [], []>} : vector<4x4xf32>, vector<4x256xf32>, vector<4x256xf32> -> vector<4x256xf32>
    %cst_19 = arith.constant dense<0xFF800000> : vector<256xf32>
    %24 = vector.multi_reduction <maximumf>, %23, %cst_19 [0] : vector<4x256xf32> to vector<256xf32>
    %25 = vector.shape_cast %24 : vector<256xf32> to vector<1x256xf32>
    %26 = vector.broadcast %25 : vector<1x256xf32> to vector<4x256xf32>
    %27 = arith.subf %23, %26 : vector<4x256xf32>
    %28 = math.exp %27 : vector<4x256xf32>
    %cst_20 = arith.constant dense<0.000000e+00> : vector<256xf32>
    %29 = vector.multi_reduction <add>, %28, %cst_20 [0] : vector<4x256xf32> to vector<256xf32>
    %30 = vector.shape_cast %29 : vector<256xf32> to vector<1x256xf32>
    %31 = tpu.reciprocal %30 : vector<1x256xf32> -> vector<1x256xf32>
    %32 = vector.broadcast %31 : vector<1x256xf32> to vector<4x256xf32>
    %33 = arith.mulf %28, %32 : vector<4x256xf32>
    %c0_21 = arith.constant 0 : index
    %c0_22 = arith.constant 0 : index
    %c0_23 = arith.constant 0 : index
    %34 = vector.load %arg18[%c0_21, %c0_22, %c0_23] : memref<1x4x256xf32, #tpu.memory_space<vmem>>, vector<1x4x256xf32>
    %35 = vector.shape_cast %34 : vector<1x4x256xf32> to vector<4x256xf32>
    %36 = vector.shape_cast %33 : vector<4x256xf32> to vector<1x4x256xf32>
    tpu.vector_store %arg18[%c0_21, %c0_22, %c0_23], %36 {strides = array<i32>} : memref<1x4x256xf32, #tpu.memory_space<vmem>>, vector<1x4x256xf32>,
    %c0_24 = arith.constant 0 : index
    %c0_25 = arith.constant 0 : index
    %c0_26 = arith.constant 0 : index
    %37 = vector.load %arg7[%c0_24, %c0_25, %c0_26] : memref<4x4x4xf32, #tpu.memory_space<vmem>>, vector<4x4x4xf32>
    %cst_27 = arith.constant 0.000000e+00 : f32
    %38 = vector.broadcast %cst_27 : f32 to vector<4x225xf32>
    %39 = vector.extract_strided_slice %1 {offsets = [0, 0, 0], sizes = [4, 15, 15], strides = [1, 1, 1]} : vector<4x16x16xf32> to vector<4x15x15xf32>
    %40 = vector.shape_cast %39 : vector<4x15x15xf32> to vector<4x225xf32>
    %41 = vector.extract_strided_slice %37 {offsets = [0, 0, 0], sizes = [1, 4, 4], strides = [1, 1, 1]} : vector<4x4x4xf32> to vector<1x4x4xf32>
    %42 = vector.shape_cast %41 : vector<1x4x4xf32> to vector<4x4xf32>
    %cst_28 = arith.constant dense<0.000000e+00> : vector<4x225xf32>
    %43 = tpu.matmul %42, %40, %cst_28 {dimension_numbers = #tpu.dot_dimension_numbers<[1], [0], [0], [1], [0, 0, 1, 1], [], []>} : vector<4x4xf32>, vector<4x225xf32>, vector<4x225xf32> -> vector<4x225xf32>
    %44 = arith.addf %38, %43 : vector<4x225xf32>
    %45 = vector.extract_strided_slice %1 {offsets = [0, 0, 1], sizes = [4, 15, 15], strides = [1, 1, 1]} : vector<4x16x16xf32> to vector<4x15x15xf32>
    %46 = vector.shape_cast %45 : vector<4x15x15xf32> to vector<4x225xf32>
    %47 = vector.extract_strided_slice %37 {offsets = [1, 0, 0], sizes = [1, 4, 4], strides = [1, 1, 1]} : vector<4x4x4xf32> to vector<1x4x4xf32>
    %48 = vector.shape_cast %47 : vector<1x4x4xf32> to vector<4x4xf32>
    %cst_29 = arith.constant dense<0.000000e+00> : vector<4x225xf32>
    %49 = tpu.matmul %48, %46, %cst_29 {dimension_numbers = #tpu.dot_dimension_numbers<[1], [0], [0], [1], [0, 0, 1, 1], [], []>} : vector<4x4xf32>, vector<4x225xf32>, vector<4x225xf32> -> vector<4x225xf32>
    %50 = arith.addf %44, %49 : vector<4x225xf32>
    %51 = vector.extract_strided_slice %1 {offsets = [0, 1, 0], sizes = [4, 15, 15], strides = [1, 1, 1]} : vector<4x16x16xf32> to vector<4x15x15xf32>
    %52 = vector.shape_cast %51 : vector<4x15x15xf32> to vector<4x225xf32>
    %53 = vector.extract_strided_slice %37 {offsets = [2, 0, 0], sizes = [1, 4, 4], strides = [1, 1, 1]} : vector<4x4x4xf32> to vector<1x4x4xf32>
    %54 = vector.shape_cast %53 : vector<1x4x4xf32> to vector<4x4xf32>
    %cst_30 = arith.constant dense<0.000000e+00> : vector<4x225xf32>
    %55 = tpu.matmul %54, %52, %cst_30 {dimension_numbers = #tpu.dot_dimension_numbers<[1], [0], [0], [1], [0, 0, 1, 1], [], []>} : vector<4x4xf32>, vector<4x225xf32>, vector<4x225xf32> -> vector<4x225xf32>
    %56 = arith.addf %50, %55 : vector<4x225xf32>
    %57 = vector.extract_strided_slice %1 {offsets = [0, 1, 1], sizes = [4, 15, 15], strides = [1, 1, 1]} : vector<4x16x16xf32> to vector<4x15x15xf32>
    %58 = vector.shape_cast %57 : vector<4x15x15xf32> to vector<4x225xf32>
    %59 = vector.extract_strided_slice %37 {offsets = [3, 0, 0], sizes = [1, 4, 4], strides = [1, 1, 1]} : vector<4x4x4xf32> to vector<1x4x4xf32>
    %60 = vector.shape_cast %59 : vector<1x4x4xf32> to vector<4x4xf32>
    %cst_31 = arith.constant dense<0.000000e+00> : vector<4x225xf32>
    %61 = tpu.matmul %60, %58, %cst_31 {dimension_numbers = #tpu.dot_dimension_numbers<[1], [0], [0], [1], [0, 0, 1, 1], [], []>} : vector<4x4xf32>, vector<4x225xf32>, vector<4x225xf32> -> vector<4x225xf32>
    %62 = arith.addf %56, %61 : vector<4x225xf32>
    %c0_32 = arith.constant 0 : index
    %c0_33 = arith.constant 0 : index
    %63 = vector.load %arg8[%c0_32, %c0_33] : memref<4x1xf32, #tpu.memory_space<vmem>>, vector<4x1xf32>
    %64 = vector.broadcast %63 : vector<4x1xf32> to vector<4x225xf32>
    %65 = arith.addf %62, %64 : vector<4x225xf32>
    %66 = vector.shape_cast %65 : vector<4x225xf32> to vector<4x15x15xf32>
    %cst_34 = arith.constant dense<0.000000e+00> : vector<4x15x15xf32>
    %67 = tpu.matmul %66, %66, %cst_34 {dimension_numbers = #tpu.dot_dimension_numbers<[2], [2], [1], [1], [0, 0, 0, 1, 1, 1], [0], [0]>} : vector<4x15x15xf32>, vector<4x15x15xf32>, vector<4x15x15xf32> -> vector<4x15x15xf32>
    %68 = vector.shape_cast %67 : vector<4x15x15xf32> to vector<4x225xf32>
    %cst_35 = arith.constant 0.000000e+00 : f32
    %69 = vector.broadcast %cst_35 : f32 to vector<4x31xf32>
    %70 = tpu.concatenate %68, %69 in 1 : vector<4x225xf32>, vector<4x31xf32> -> vector<4x256xf32>
    %c0_36 = arith.constant 0 : index
    %c0_37 = arith.constant 0 : index
    %71 = vector.load %arg9[%c0_36, %c0_37] : memref<256x256xf32, #tpu.memory_space<vmem>>, vector<256x256xf32>
    %cst_38 = arith.constant dense<0.000000e+00> : vector<4x256xf32>
    %72 = tpu.matmul %70, %71, %cst_38 {dimension_numbers = #tpu.dot_dimension_numbers<[1], [1], [0], [0], [0, 0, 1, 0], [], []>} : vector<4x256xf32>, vector<256x256xf32>, vector<4x256xf32> -> vector<4x256xf32>
    %c0_39 = arith.constant 0 : index
    %c0_40 = arith.constant 0 : index
    %73 = vector.load %arg10[%c0_39, %c0_40] : memref<1x256xf32, #tpu.memory_space<vmem>>, vector<1x256xf32>
    %74 = vector.broadcast %73 : vector<1x256xf32> to vector<4x256xf32>
    %75 = arith.addf %72, %74 : vector<4x256xf32>
    %76 = arith.addf %75, %70 : vector<4x256xf32>
    %cst_41 = arith.constant 0.000000e+00 : f32
    %77 = vector.broadcast %cst_41 : f32 to vector<4x256xf32>
    %78 = arith.maximumf %76, %77 : vector<4x256xf32>
    %c0_42 = arith.constant 0 : index
    %c0_43 = arith.constant 0 : index
    %79 = vector.load %arg11[%c0_42, %c0_43] : memref<4x4xf32, #tpu.memory_space<vmem>>, vector<4x4xf32>
    %cst_44 = arith.constant dense<0.000000e+00> : vector<4x256xf32>
    %80 = tpu.matmul %79, %78, %cst_44 {dimension_numbers = #tpu.dot_dimension_numbers<[1], [0], [0], [1], [0, 0, 1, 1], [], []>} : vector<4x4xf32>, vector<4x256xf32>, vector<4x256xf32> -> vector<4x256xf32>
    %cst_45 = arith.constant dense<0xFF800000> : vector<256xf32>
    %81 = vector.multi_reduction <maximumf>, %80, %cst_45 [0] : vector<4x256xf32> to vector<256xf32>
    %82 = vector.shape_cast %81 : vector<256xf32> to vector<1x256xf32>
    %83 = vector.broadcast %82 : vector<1x256xf32> to vector<4x256xf32>
    %84 = arith.subf %80, %83 : vector<4x256xf32>
    %85 = math.exp %84 : vector<4x256xf32>
    %cst_46 = arith.constant dense<0.000000e+00> : vector<256xf32>
    %86 = vector.multi_reduction <add>, %85, %cst_46 [0] : vector<4x256xf32> to vector<256xf32>
    %87 = vector.shape_cast %86 : vector<256xf32> to vector<1x256xf32>
    %88 = tpu.reciprocal %87 : vector<1x256xf32> -> vector<1x256xf32>
    %89 = vector.broadcast %88 : vector<1x256xf32> to vector<4x256xf32>
    %90 = arith.mulf %85, %89 : vector<4x256xf32>
    %c0_47 = arith.constant 0 : index
    %c0_48 = arith.constant 0 : index
    %c0_49 = arith.constant 0 : index
    %91 = vector.load %arg19[%c0_47, %c0_48, %c0_49] : memref<1x4x256xf32, #tpu.memory_space<vmem>>, vector<1x4x256xf32>
    %92 = vector.shape_cast %91 : vector<1x4x256xf32> to vector<4x256xf32>
    %93 = vector.shape_cast %90 : vector<4x256xf32> to vector<1x4x256xf32>
    tpu.vector_store %arg19[%c0_47, %c0_48, %c0_49], %93 {strides = array<i32>} : memref<1x4x256xf32, #tpu.memory_space<vmem>>, vector<1x4x256xf32>,
    %c0_50 = arith.constant 0 : index
    %c0_51 = arith.constant 0 : index
    %94 = vector.load %arg13[%c0_50, %c0_51] : memref<4x36xf32, #tpu.memory_space<vmem>>, vector<4x36xf32>
    %c0_52 = arith.constant 0 : index
    %c0_53 = arith.constant 0 : index
    %c0_54 = arith.constant 0 : index
    %95 = vector.load %arg12[%c0_52, %c0_53, %c0_54] : memref<1x36x49xf32, #tpu.memory_space<vmem>>, vector<1x36x49xf32>
    %96 = vector.shape_cast %95 : vector<1x36x49xf32> to vector<36x49xf32>
    %cst_55 = arith.constant dense<0.000000e+00> : vector<4x49xf32>
    %97 = tpu.matmul %94, %96, %cst_55 {dimension_numbers = #tpu.dot_dimension_numbers<[1], [0], [0], [1], [0, 0, 1, 1], [], []>} : vector<4x36xf32>, vector<36x49xf32>, vector<4x49xf32> -> vector<4x49xf32>
    %c0_56 = arith.constant 0 : index
    %c0_57 = arith.constant 0 : index
    %98 = vector.load %arg14[%c0_56, %c0_57] : memref<4x1xf32, #tpu.memory_space<vmem>>, vector<4x1xf32>
    %99 = vector.broadcast %98 : vector<4x1xf32> to vector<4x49xf32>
    %100 = arith.addf %97, %99 : vector<4x49xf32>
    %101 = vector.shape_cast %100 : vector<4x49xf32> to vector<4x7x7xf32>
    %cst_58 = arith.constant dense<0.000000e+00> : vector<4x7x7xf32>
    %102 = tpu.matmul %101, %101, %cst_58 {dimension_numbers = #tpu.dot_dimension_numbers<[2], [2], [1], [1], [0, 0, 0, 1, 1, 1], [0], [0]>} : vector<4x7x7xf32>, vector<4x7x7xf32>, vector<4x7x7xf32> -> vector<4x7x7xf32>
    %103 = vector.shape_cast %102 : vector<4x7x7xf32> to vector<4x49xf32>
    %cst_59 = arith.constant 0.000000e+00 : f32
    %104 = vector.broadcast %cst_59 : f32 to vector<4x79xf32>
    %105 = tpu.concatenate %103, %104 in 1 : vector<4x49xf32>, vector<4x79xf32> -> vector<4x128xf32>
    %c0_60 = arith.constant 0 : index
    %c0_61 = arith.constant 0 : index
    %106 = vector.load %arg15[%c0_60, %c0_61] : memref<128x128xf32, #tpu.memory_space<vmem>>, vector<128x128xf32>
    %cst_62 = arith.constant dense<0.000000e+00> : vector<4x128xf32>
    %107 = tpu.matmul %105, %106, %cst_62 {dimension_numbers = #tpu.dot_dimension_numbers<[1], [1], [0], [0], [0, 0, 1, 0], [], []>} : vector<4x128xf32>, vector<128x128xf32>, vector<4x128xf32> -> vector<4x128xf32>
    %c0_63 = arith.constant 0 : index
    %c0_64 = arith.constant 0 : index
    %108 = vector.load %arg16[%c0_63, %c0_64] : memref<1x128xf32, #tpu.memory_space<vmem>>, vector<1x128xf32>
    %109 = vector.broadcast %108 : vector<1x128xf32> to vector<4x128xf32>
    %110 = arith.addf %107, %109 : vector<4x128xf32>
    %111 = arith.addf %110, %105 : vector<4x128xf32>
    %cst_65 = arith.constant 0.000000e+00 : f32
    %112 = vector.broadcast %cst_65 : f32 to vector<4x128xf32>
    %113 = arith.maximumf %111, %112 : vector<4x128xf32>
    %c0_66 = arith.constant 0 : index
    %c0_67 = arith.constant 0 : index
    %114 = vector.load %arg17[%c0_66, %c0_67] : memref<4x4xf32, #tpu.memory_space<vmem>>, vector<4x4xf32>
    %cst_68 = arith.constant dense<0.000000e+00> : vector<4x128xf32>
    %115 = tpu.matmul %114, %113, %cst_68 {dimension_numbers = #tpu.dot_dimension_numbers<[1], [0], [0], [1], [0, 0, 1, 1], [], []>} : vector<4x4xf32>, vector<4x128xf32>, vector<4x128xf32> -> vector<4x128xf32>
    %cst_69 = arith.constant dense<0xFF800000> : vector<128xf32>
    %116 = vector.multi_reduction <maximumf>, %115, %cst_69 [0] : vector<4x128xf32> to vector<128xf32>
    %117 = vector.shape_cast %116 : vector<128xf32> to vector<1x128xf32>
    %118 = vector.broadcast %117 : vector<1x128xf32> to vector<4x128xf32>
    %119 = arith.subf %115, %118 : vector<4x128xf32>
    %120 = math.exp %119 : vector<4x128xf32>
    %cst_70 = arith.constant dense<0.000000e+00> : vector<128xf32>
    %121 = vector.multi_reduction <add>, %120, %cst_70 [0] : vector<4x128xf32> to vector<128xf32>
    %122 = vector.shape_cast %121 : vector<128xf32> to vector<1x128xf32>
    %123 = tpu.reciprocal %122 : vector<1x128xf32> -> vector<1x128xf32>
    %124 = vector.broadcast %123 : vector<1x128xf32> to vector<4x128xf32>
    %125 = arith.mulf %120, %124 : vector<4x128xf32>
    %c0_71 = arith.constant 0 : index
    %c0_72 = arith.constant 0 : index
    %c0_73 = arith.constant 0 : index
    %126 = vector.load %arg20[%c0_71, %c0_72, %c0_73] : memref<1x4x128xf32, #tpu.memory_space<vmem>>, vector<1x4x128xf32>
    %127 = vector.shape_cast %126 : vector<1x4x128xf32> to vector<4x128xf32>
    %128 = vector.shape_cast %125 : vector<4x128xf32> to vector<1x4x128xf32>
    tpu.vector_store %arg20[%c0_71, %c0_72, %c0_73], %128 {strides = array<i32>} : memref<1x4x128xf32, #tpu.memory_space<vmem>>, vector<1x4x128xf32>,
    return
  }
  func.func @transform_0(%arg0: i32) -> (i32, i32, i32, i32) {
    %c0_i32 = arith.constant 0 : i32
    %c0_i32_0 = arith.constant 0 : i32
    %c0_i32_1 = arith.constant 0 : i32
    %c0_i32_2 = arith.constant 0 : i32
    return %arg0, %c0_i32, %c0_i32_0, %c0_i32_1 : i32, i32, i32, i32
  }
  func.func @transform_1(%arg0: i32) -> (i32, i32, i32) {
    %c0_i32 = arith.constant 0 : i32
    %c0_i32_0 = arith.constant 0 : i32
    %c0_i32_1 = arith.constant 0 : i32
    %c0_i32_2 = arith.constant 0 : i32
    return %c0_i32, %c0_i32_0, %c0_i32_1 : i32, i32, i32
  }
  func.func @transform_2(%arg0: i32) -> (i32, i32) {
    %c0_i32 = arith.constant 0 : i32
    %c0_i32_0 = arith.constant 0 : i32
    %c0_i32_1 = arith.constant 0 : i32
    return %c0_i32, %c0_i32_0 : i32, i32
  }
  func.func @transform_3(%arg0: i32) -> (i32, i32) {
    %c0_i32 = arith.constant 0 : i32
    %c0_i32_0 = arith.constant 0 : i32
    %c0_i32_1 = arith.constant 0 : i32
    return %c0_i32, %c0_i32_0 : i32, i32
  }
  func.func @transform_4(%arg0: i32) -> (i32, i32) {
    %c0_i32 = arith.constant 0 : i32
    %c0_i32_0 = arith.constant 0 : i32
    %c0_i32_1 = arith.constant 0 : i32
    return %c0_i32, %c0_i32_0 : i32, i32
  }
  func.func @transform_5(%arg0: i32) -> (i32, i32) {
    %c0_i32 = arith.constant 0 : i32
    %c0_i32_0 = arith.constant 0 : i32
    %c0_i32_1 = arith.constant 0 : i32
    return %c0_i32, %c0_i32_0 : i32, i32
  }
  func.func @transform_6(%arg0: i32) -> (i32, i32, i32) {
    %c0_i32 = arith.constant 0 : i32
    %c0_i32_0 = arith.constant 0 : i32
    %c0_i32_1 = arith.constant 0 : i32
    %c0_i32_2 = arith.constant 0 : i32
    return %c0_i32, %c0_i32_0, %c0_i32_1 : i32, i32, i32
  }
  func.func @transform_7(%arg0: i32) -> (i32, i32) {
    %c0_i32 = arith.constant 0 : i32
    %c0_i32_0 = arith.constant 0 : i32
    %c0_i32_1 = arith.constant 0 : i32
    return %c0_i32, %c0_i32_0 : i32, i32
  }
  func.func @transform_8(%arg0: i32) -> (i32, i32) {
    %c0_i32 = arith.constant 0 : i32
    %c0_i32_0 = arith.constant 0 : i32
    %c0_i32_1 = arith.constant 0 : i32
    return %c0_i32, %c0_i32_0 : i32, i32
  }
  func.func @transform_9(%arg0: i32) -> (i32, i32) {
    %c0_i32 = arith.constant 0 : i32
    %c0_i32_0 = arith.constant 0 : i32
    %c0_i32_1 = arith.constant 0 : i32
    return %c0_i32, %c0_i32_0 : i32, i32
  }
  func.func @transform_10(%arg0: i32) -> (i32, i32) {
    %c0_i32 = arith.constant 0 : i32
    %c0_i32_0 = arith.constant 0 : i32
    %c0_i32_1 = arith.constant 0 : i32
    return %c0_i32, %c0_i32_0 : i32, i32
  }
  func.func @transform_11(%arg0: i32) -> (i32, i32, i32) {
    %c0_i32 = arith.constant 0 : i32
    %c0_i32_0 = arith.constant 0 : i32
    %c0_i32_1 = arith.constant 0 : i32
    return %arg0, %c0_i32, %c0_i32_0 : i32, i32, i32
  }
  func.func @transform_12(%arg0: i32) -> (i32, i32) {
    %c0_i32 = arith.constant 0 : i32
    %c0_i32_0 = arith.constant 0 : i32
    %c0_i32_1 = arith.constant 0 : i32
    return %c0_i32, %c0_i32_0 : i32, i32
  }
  func.func @transform_13(%arg0: i32) -> (i32, i32) {
    %c0_i32 = arith.constant 0 : i32
    %c0_i32_0 = arith.constant 0 : i32
    %c0_i32_1 = arith.constant 0 : i32
    return %c0_i32, %c0_i32_0 : i32, i32
  }
  func.func @transform_14(%arg0: i32) -> (i32, i32) {
    %c0_i32 = arith.constant 0 : i32
    %c0_i32_0 = arith.constant 0 : i32
    %c0_i32_1 = arith.constant 0 : i32
    return %c0_i32, %c0_i32_0 : i32, i32
  }
  func.func @transform_15(%arg0: i32) -> (i32, i32) {
    %c0_i32 = arith.constant 0 : i32
    %c0_i32_0 = arith.constant 0 : i32
    %c0_i32_1 = arith.constant 0 : i32
    return %c0_i32, %c0_i32_0 : i32, i32
  }
  func.func @transform_16(%arg0: i32) -> (i32, i32) {
    %c0_i32 = arith.constant 0 : i32
    %c0_i32_0 = arith.constant 0 : i32
    %c0_i32_1 = arith.constant 0 : i32
    return %c0_i32, %c0_i32_0 : i32, i32
  }
  func.func @transform_17(%arg0: i32) -> (i32, i32, i32) {
    %c0_i32 = arith.constant 0 : i32
    %c0_i32_0 = arith.constant 0 : i32
    %c0_i32_1 = arith.constant 0 : i32
    return %arg0, %c0_i32, %c0_i32_0 : i32, i32, i32
  }
  func.func @transform_18(%arg0: i32) -> (i32, i32, i32) {
    %c0_i32 = arith.constant 0 : i32
    %c0_i32_0 = arith.constant 0 : i32
    %c0_i32_1 = arith.constant 0 : i32
    return %arg0, %c0_i32, %c0_i32_0 : i32, i32, i32
  }
  func.func @transform_19(%arg0: i32) -> (i32, i32, i32) {
    %c0_i32 = arith.constant 0 : i32
    %c0_i32_0 = arith.constant 0 : i32
    %c0_i32_1 = arith.constant 0 : i32
    return %arg0, %c0_i32, %c0_i32_0 : i32, i32, i32
  }
}

</mosaic_0001>

<llo_original>
// kernel: region_unit_forward.2
$region0: #{region_unit_forward.2}
  #allocation0 [shape = 'u32[]', space=smem, size = 0x4, offset = 0x4, fixed_abs, tag = 'smem constant byte address 0x4 - core index']
  #allocation1 [shape = 'u32[144,128]{1,0:T(1,128)}', space=vmem, size = 0x12000, scoped, tag = 'internal scratch']
  %s0 = inlined_call_operand.vmem [shape: f32[4,8], index: 0, kind: input, shape index: {}]
  %s1 = inlined_call_operand.vmem [shape: f32[2,8,256], index: 1, kind: input, shape index: {}]
  %s2 = inlined_call_operand.vmem [shape: f32[4,1], index: 2, kind: input, shape index: {}]
  %s3 = inlined_call_operand.vmem [shape: f32[2,4,256], index: 3, kind: output, shape index: {}]
  %s4 = sld [smem:[#allocation0]]
  $region45: #{region_unit_forward.2} parent=0
    _
  %s6 = ssub.s32 1, %s4
  %s7 = scalar_select 0, %s6, %s4
  loop: start=0, step=1, limit=4
  $region2: #{region_unit_forward.2} parent=0 // loop_pre_header
    _
  $region3: #{region_unit_forward.2} parent=0 // loop_header
    %s9 = sphi 0, %s13
    %p10 = scmp.ge.s32.totalorder %s9, 4
    %s16 = sphi 0, %s28
    %s17 = sphi 0, %s24
    %s18 = sphi 0, %s16
    %s19 = sphi 0, %s17
    %s20 = sphi 0, %s18
    %s21 = sphi 0, %s19
    %s29 = sphi 0, %s29
    %s31 = sphi 0, %s29
    %s32 = sphi 0, %s31
    %s46 = sphi 0, %s32
    %s54 = sphi 0, %s56
    %s57 = sphi 0, %s54
    %s58 = sphi 0, %s57
    %s74 = sphi 0, %s58
    %s78 = sphi 0, %s78
    %s80 = sphi 0, %s78
    %s81 = sphi 0, %s80
    %s95 = sphi 0, %s81
    %s103 = sphi 0, %s105
    %s106 = sphi 0, %s103
    %s107 = sphi 0, %s106
    %s123 = sphi 0, %s107
  $region4: #{region_unit_forward.2} parent=0 // loop_header_branch
    %12 = sbr.rel (%p10) target = $region8
  $region5: #{region_unit_forward.2} parent=0 // loop_body
    %s14 = ssub.s32 %s9, 1
    %s15 = ssub.s32 %s9, 2
    %s22 = sadd.s32 1, %s17
    %p23 = scmp.ge.s32.totalorder %s22, 1
    %s24 = scalar_select %p23, 0, %s22
    %s25 = sadd.s32 1, %s16
    %s26 = scalar_select %p23, %s25, %s16
    %p27 = scmp.ge.s32.totalorder %s26, 2
    %s28 = scalar_select %p27, 0, %s26
    %s30 = sadd.s32 %s29, 1
    %p33 = scmp.eq.s32.totalorder %s9, 1
    %p34 = scmp.ne.s32.totalorder %s29, %s31
    %p35 = scmp.eq.s32.totalorder %s9, 0
    %p36 = por %p34, %p35
    %p37 = scmp.ne.s32.totalorder %s29, %s31
    %p38 = scmp.eq.s32.totalorder %s14, 1
    %p39 = por %p37, %p38
    %p40 = scmp.ne.s32.totalorder %s31, %s32
    %p41 = scmp.eq.s32.totalorder %s14, 0
    %p42 = por %p40, %p41
    %p43 = scmp.ne.s32.totalorder %s31, %s32
    %p44 = scmp.eq.s32.totalorder %s15, 1
    %p45 = por %p43, %p44
    %p47 = scmp.ne.s32.totalorder %s32, %s46
    %p48 = scmp.eq.s32.totalorder %s15, 0
    %p49 = por %p47, %p48
    %s50 = ssub.s32 %s16, %s28
    %s51 = ssub.s32 %s17, %s24
    %s52 = sor.u32 %s50, %s51
    %p53 = scmp.eq.s32.totalorder %s52, 0
    %s55 = sadd.s32 %s54, 1
    %s56 = scalar_select %p53, %s54, %s55
    %p59 = pneg %p53
    %p60 = scmp.eq.s32.totalorder %s9, 1
    %p61 = por %p59, %p60
    %p62 = scmp.ne.s32.totalorder %s54, %s57
    %p63 = scmp.eq.s32.totalorder %s9, 0
    %p64 = por %p62, %p63
    %p65 = scmp.ne.s32.totalorder %s54, %s57
    %p66 = scmp.eq.s32.totalorder %s14, 1
    %p67 = por %p65, %p66
    %p68 = scmp.ne.s32.totalorder %s57, %s58
    %p69 = scmp.eq.s32.totalorder %s14, 0
    %p70 = por %p68, %p69
    %p71 = scmp.ne.s32.totalorder %s57, %s58
    %p72 = scmp.eq.s32.totalorder %s15, 1
    %p73 = por %p71, %p72
    %p75 = scmp.ne.s32.totalorder %s58, %s74
    %p76 = scmp.eq.s32.totalorder %s15, 0
    %p77 = por %p75, %p76
    %s79 = sadd.s32 %s78, 1
    %p82 = scmp.eq.s32.totalorder %s9, 1
    %p83 = scmp.ne.s32.totalorder %s78, %s80
    %p84 = scmp.eq.s32.totalorder %s9, 0
    %p85 = por %p83, %p84
    %p86 = scmp.ne.s32.totalorder %s78, %s80
    %p87 = scmp.eq.s32.totalorder %s14, 1
    %p88 = por %p86, %p87
    %p89 = scmp.ne.s32.totalorder %s80, %s81
    %p90 = scmp.eq.s32.totalorder %s14, 0
    %p91 = por %p89, %p90
    %p92 = scmp.ne.s32.totalorder %s80, %s81
    %p93 = scmp.eq.s32.totalorder %s15, 1
    %p94 = por %p92, %p93
    %p96 = scmp.ne.s32.totalorder %s81, %s95
    %p97 = scmp.eq.s32.totalorder %s15, 0
    %p98 = por %p96, %p97
    %s99 = ssub.s32 %s16, %s28
    %s100 = ssub.s32 %s17, %s24
    %s101 = sor.u32 %s99, %s100
    %p102 = scmp.eq.s32.totalorder %s101, 0
    %s104 = sadd.s32 %s103, 1
    %s105 = scalar_select %p102, %s103, %s104
    %p108 = pneg %p102
    %p109 = scmp.eq.s32.totalorder %s9, 1
    %p110 = por %p108, %p109
    %p111 = scmp.ne.s32.totalorder %s103, %s106
    %p112 = scmp.eq.s32.totalorder %s9, 0
    %p113 = por %p111, %p112
    %p114 = scmp.ne.s32.totalorder %s103, %s106
    %p115 = scmp.eq.s32.totalorder %s14, 1
    %p116 = por %p114, %p115
    %p117 = scmp.ne.s32.totalorder %s106, %s107
    %p118 = scmp.eq.s32.totalorder %s14, 0
    %p119 = por %p117, %p118
    %p120 = scmp.ne.s32.totalorder %s106, %s107
    %p121 = scmp.eq.s32.totalorder %s15, 1
    %p122 = por %p120, %p121
    %p124 = scmp.ne.s32.totalorder %s107, %s123
    %p125 = scmp.eq.s32.totalorder %s15, 0
    %p126 = por %p124, %p125
    %p127 = scmp.le.s32.totalorder 1, %s9
    %p128 = scmp.lt.s32.totalorder %s9, 3
    %p129 = pnand %p127, %p128
    %p130 = pneg %p129
    // Predicated region
    $region9: #{region_unit_forward.2} parent=5 // pred_check
      _
    $region10: #{region_unit_forward.2} parent=5 // pred_check_branch
      %132 = sbr.rel (%p129) target = $region12
    $region11: #{region_unit_forward.2} parent=5 // pred_region
      %s133 = ssub.s32 %s9, 1
      // Predicated region
      $region13: #{region_unit_forward.2} parent=11 // pred_check
        %p134 = pneg %p42
      $region14: #{region_unit_forward.2} parent=11 // pred_check_branch
        %136 = sbr.rel (%p134) target = $region16
      $region15: #{region_unit_forward.2} parent=11 // pred_region
        _
      $region16: #{region_unit_forward.2} parent=11 // pred_fallthru
        _
      // Predicated region
      $region17: #{region_unit_forward.2} parent=11 // pred_check
        %p137 = pneg %p91
      $region18: #{region_unit_forward.2} parent=11 // pred_check_branch
        %139 = sbr.rel (%p137) target = $region20
      $region19: #{region_unit_forward.2} parent=11 // pred_region
        _
      $region20: #{region_unit_forward.2} parent=11 // pred_fallthru
        _
    $region12: #{region_unit_forward.2} parent=5 // pred_fallthru
      _
    %p140 = scmp.lt.s32.totalorder %s9, 2
    // Predicated region
    $region21: #{region_unit_forward.2} parent=5 // pred_check
      %p141 = pneg %p140
    $region22: #{region_unit_forward.2} parent=5 // pred_check_branch
      %143 = sbr.rel (%p141) target = $region24
    $region23: #{region_unit_forward.2} parent=5 // pred_region
      // Predicated region
      $region25: #{region_unit_forward.2} parent=23 // pred_check
        %p144 = pneg %p64
      $region26: #{region_unit_forward.2} parent=23 // pred_check_branch
        %146 = sbr.rel (%p144) target = $region28
      $region27: #{region_unit_forward.2} parent=23 // pred_region
        %s147 = smul.u32 2, %s17
        %p148 = scmp.lt.s32.totalorder %s16, 1
        %s149 = scalar_select %p148, %s16, 1
        %p150 = scmp.lt.s32.totalorder %s147, 1
        %s151 = scalar_select %p150, %s147, 1
        %s152 = smul.addr %s149, 2
        %s153 = sadd.s32 %s151, %s152
        %s154 = smul.addr %s153, 8
        %s155 = scalar_lea.vmem %s1, %s154
        %s156 = smul.u32 2, %s17
      $region28: #{region_unit_forward.2} parent=23 // pred_fallthru
        _
    $region24: #{region_unit_forward.2} parent=5 // pred_fallthru
      _
    %p157 = scmp.le.s32.totalorder 1, %s9
    %p158 = scmp.lt.s32.totalorder %s9, 3
    %p159 = pnand %p157, %p158
    %p160 = pneg %p159
    // Predicated region
    $region29: #{region_unit_forward.2} parent=5 // pred_check
      _
    $region30: #{region_unit_forward.2} parent=5 // pred_check_branch
      %162 = sbr.rel (%p159) target = $region32
    $region31: #{region_unit_forward.2} parent=5 // pred_region
      %s163 = ssub.s32 %s9, 1
      %p164 = pneg %p42
      %p165 = pneg %p39
      %s166 = smul.u32 2, %s19
      %p167 = scmp.lt.s32.totalorder %s18, 1
      %s168 = scalar_select %p167, %s18, 1
      %p169 = scmp.lt.s32.totalorder %s166, 1
      %s170 = scalar_select %p169, %s166, 1
      %s171 = smul.addr %s168, 2
      %s172 = sadd.s32 %s170, %s171
      %s173 = smul.addr %s172, 8
      %s174 = scalar_lea.vmem %s1, %s173
      %p175 = pneg %p70
      %p176 = pneg %p67
      %p177 = pneg %p91
      %p178 = pneg %p88
      %p179 = pneg %p119
      %p180 = pneg %p116
      %s181 = smul.u32 2, %s19
      %p182 = scmp.lt.s32.totalorder %s18, 1
      %s183 = scalar_select %p182, %s18, 1
      %p184 = scmp.lt.s32.totalorder %s181, 1
      %s185 = scalar_select %p184, %s181, 1
      %s186 = smul.addr %s183, 2
      %s187 = sadd.s32 %s185, %s186
      %s188 = smul.addr %s187, 4
      %s189 = scalar_lea.vmem %s3, %s188
      %s190 = smul.u32 2, %s19
      %p191 = scmp.lt.s32.totalorder %s18, 1
      %s192 = scalar_select %p191, %s18, 1
      %p193 = scmp.lt.s32.totalorder %s190, 1
      %s194 = scalar_select %p193, %s190, 1
      %s195 = smul.addr %s192, 2
      %s196 = sadd.s32 %s194, %s195
      %s197 = smul.addr %s196, 8
      %s198 = scalar_lea.vmem %s1, %s197
      %s199 = smul.u32 2, %s19
      %s200 = smul.u32 2, %s19
      %p201 = scmp.lt.s32.totalorder %s18, 1
      %s202 = scalar_select %p201, %s18, 1
      %p203 = scmp.lt.s32.totalorder %s200, 1
      %s204 = scalar_select %p203, %s200, 1
      %s205 = smul.addr %s202, 2
      %s206 = sadd.s32 %s204, %s205
      %s207 = smul.addr %s206, 4
      %s208 = scalar_lea.vmem %s3, %s207
      %s209 = smul.u32 2, %s19
      %v210 = vld [vmem:[%s0] sm:$0xf]
      %v211 = vld [vmem:[%s198] sm:$0xff]
      %v212 = vld [vmem:[%s198 + $0x8] sm:$0xff]
      %v213 = vld [vmem:[%s2] sm:$0xf]
      %215 = vset.pattern.permute.xlu0 0
      %216 = vperm.xlu0 %215, %v213
      %v217 = vpop.permute.xlu0 %216
      %vm219 = vcmask 64512
      %v221 = vsel %vm219, %v210, 0
      %223 = vmatprep.subr.mxu0 %v212
      %224 = vmatpush1.msra.mxu0 %v211
      %225 = vmatprep.subr.mxu0 0.0
      %226 = vmatpush1.msra.mxu0 0.0
      %227 = vmatprep.subr.mxu0 0.0
      %228 = vmatpush1.msra.mxu0 0.0
      %229 = vmatprep.subr.mxu0 0.0
      %230 = vmatpush1.msra.mxu0 0.0
      %231 = vmatprep.subr.mxu0 0.0
      %232 = vmatpush1.msra.mxu0 0.0
      %233 = vmatprep.subr.mxu0 0.0
      %234 = vmatpush1.msra.mxu0 0.0
      %235 = vmatprep.subr.mxu0 0.0
      %236 = vmatpush1.msra.mxu0 0.0
      %237 = vmatprep.subr.mxu0 0.0
      %238 = vmatpush1.msra.mxu0 0.0
      %239 = vmatprep.subr.mxu0 0.0
      %240 = vmatpush1.msra.mxu0 0.0
      %241 = vmatprep.subr.mxu0 0.0
      %242 = vmatpush1.msra.mxu0 0.0
      %243 = vmatprep.subr.mxu0 0.0
      %244 = vmatpush1.msra.mxu0 0.0
      %245 = vmatprep.subr.mxu0 0.0
      %246 = vmatpush1.msra.mxu0 0.0
      %247 = vmatprep.subr.mxu0 0.0
      %248 = vmatpush1.msra.mxu0 0.0
      %249 = vmatprep.subr.mxu0 0.0
      %250 = vmatpush1.msra.mxu0 0.0
      %251 = vmatprep.subr.mxu0 0.0
      %252 = vmatpush1.msra.mxu0 0.0
      %253 = vmatprep.subr.mxu0 0.0
      %254 = vmatpush1.msra.mxu0 0.0
      %255 = vmatprep.subr.mxu0 0.0
      %256 = vmatpush1.msra.mxu0 0.0
      %257 = vmatprep.subr.mxu0 0.0
      %258 = vmatpush1.msra.mxu0 0.0
      %259 = vmatprep.subr.mxu0 0.0
      %260 = vmatpush1.msra.mxu0 0.0
      %261 = vmatprep.subr.mxu0 0.0
      %262 = vmatpush1.msra.mxu0 0.0
      %263 = vmatprep.subr.mxu0 0.0
      %264 = vmatpush1.msra.mxu0 0.0
      %265 = vmatprep.subr.mxu0 0.0
      %266 = vmatpush1.msra.mxu0 0.0
      %267 = vmatprep.subr.mxu0 0.0
      %268 = vmatpush1.msra.mxu0 0.0
      %269 = vmatprep.subr.mxu0 0.0
      %270 = vmatpush1.msra.mxu0 0.0
      %271 = vmatprep.subr.mxu0 0.0
      %272 = vmatpush1.msra.mxu0 0.0
      %273 = vmatprep.subr.mxu0 0.0
      %274 = vmatpush1.msra.mxu0 0.0
      %275 = vmatprep.subr.mxu0 0.0
      %276 = vmatpush1.msra.mxu0 0.0
      %277 = vmatprep.subr.mxu0 0.0
      %278 = vmatpush1.msra.mxu0 0.0
      %279 = vmatprep.subr.mxu0 0.0
      %280 = vmatpush1.msra.mxu0 0.0
      %281 = vmatprep.subr.mxu0 0.0
      %282 = vmatpush1.msra.mxu0 0.0
      %283 = vmatprep.subr.mxu0 0.0
      %284 = vmatpush1.msra.mxu0 0.0
      %285 = vmatprep.subr.mxu0 0.0
      %286 = vmatpush1.msra.mxu0 0.0
      %287 = vmatprep.mubr.f32.mxu0 0.0
      %288 = vmatmul.mubr.f32.gmra.mrb[0].mxu0 %v221
      %v289 = vpop.f32.mrb[0].mxu0
      %v290 = vadd.f32 %v217, %v289
      %v291 = vpop.f32.mrb[0].mxu0
      %v292 = vadd.f32 %v217, %v291
      %293 = vdwg.mxu0
      %v296 = vcombine.low %v290, %v292
      %298 = vst [vmem:[%s208] sm:$0xff] %v296
      %s299 = smul.u32 2, %s19
      %p300 = scmp.lt.s32.totalorder %s18, 1
      %s301 = scalar_select %p300, %s18, 1
      %p302 = scmp.lt.s32.totalorder %s299, 1
      %s303 = scalar_select %p302, %s299, 1
      %s304 = smul.addr %s301, 2
      %s305 = sadd.s32 %s303, %s304
      %s306 = smul.addr %s305, 4
      %s307 = scalar_lea.vmem %s3, %s306
      // Predicated region
      $region33: #{region_unit_forward.2} parent=31 // pred_check
        %p308 = pneg %p116
      $region34: #{region_unit_forward.2} parent=31 // pred_check_branch
        %310 = sbr.rel (%p308) target = $region36
      $region35: #{region_unit_forward.2} parent=31 // pred_region
        %s311 = smul.u32 2, %s19
      $region36: #{region_unit_forward.2} parent=31 // pred_fallthru
        _
    $region32: #{region_unit_forward.2} parent=5 // pred_fallthru
      _
    %p312 = scmp.le.s32.totalorder 2, %s9
    // Predicated region
    $region37: #{region_unit_forward.2} parent=5 // pred_check
      %p313 = pneg %p312
    $region38: #{region_unit_forward.2} parent=5 // pred_check_branch
      %315 = sbr.rel (%p313) target = $region40
    $region39: #{region_unit_forward.2} parent=5 // pred_region
      %s316 = ssub.s32 %s9, 2
      // Predicated region
      $region41: #{region_unit_forward.2} parent=39 // pred_check
        %p317 = pneg %p122
      $region42: #{region_unit_forward.2} parent=39 // pred_check_branch
        %319 = sbr.rel (%p317) target = $region44
      $region43: #{region_unit_forward.2} parent=39 // pred_region
        %s320 = smul.u32 2, %s21
        %p321 = scmp.lt.s32.totalorder %s20, 1
        %s322 = scalar_select %p321, %s20, 1
        %p323 = scmp.lt.s32.totalorder %s320, 1
        %s324 = scalar_select %p323, %s320, 1
        %s325 = smul.addr %s322, 2
        %s326 = sadd.s32 %s324, %s325
        %s327 = smul.addr %s326, 4
        %s328 = scalar_lea.vmem %s3, %s327
      $region44: #{region_unit_forward.2} parent=39 // pred_fallthru
        _
    $region40: #{region_unit_forward.2} parent=5 // pred_fallthru
      _
  $region6: #{region_unit_forward.2} parent=0 // loop_footer
    %s13 = sadd.s32 1, %s9
  $region7: #{region_unit_forward.2} parent=0 // loop_footer_branch
    %8 = sbr.rel target = $region3
  $region8: #{region_unit_forward.2} parent=0 // loop_exit
    _

// kernel: region_unit_forward.3
$region0: #{region_unit_forward.3}
  #allocation0 [shape = 'u32[]', space=smem, size = 0x4, offset = 0x4, fixed_abs, tag = 'smem constant byte address 0x4 - core index']
  #allocation1 [shape = 'u32[144,128]{1,0:T(1,128)}', space=vmem, size = 0x12000, scoped, tag = 'internal scratch']
  %s0 = inlined_call_operand.vmem [shape: f32[2,4,16,16], index: 0, kind: input, shape index: {}]
  %s1 = inlined_call_operand.vmem [shape: f32[1,4,4], index: 1, kind: input, shape index: {}]
  %s2 = inlined_call_operand.vmem [shape: f32[4,1], index: 2, kind: input, shape index: {}]
  %s3 = inlined_call_operand.vmem [shape: f32[256,256], index: 3, kind: input, shape index: {}]
  %s4 = inlined_call_operand.vmem [shape: f32[1,256], index: 4, kind: input, shape index: {}]
  %s5 = inlined_call_operand.vmem [shape: f32[4,4], index: 5, kind: input, shape index: {}]
  %s6 = inlined_call_operand.vmem [shape: f32[4,4,4], index: 6, kind: input, shape index: {}]
  %s7 = inlined_call_operand.vmem [shape: f32[4,1], index: 7, kind: input, shape index: {}]
  %s8 = inlined_call_operand.vmem [shape: f32[256,256], index: 8, kind: input, shape index: {}]
  %s9 = inlined_call_operand.vmem [shape: f32[1,256], index: 9, kind: input, shape index: {}]
  %s10 = inlined_call_operand.vmem [shape: f32[4,4], index: 10, kind: input, shape index: {}]
  %s11 = inlined_call_operand.vmem [shape: f32[2,36,49], index: 11, kind: input, shape index: {}]
  %s12 = inlined_call_operand.vmem [shape: f32[4,36], index: 12, kind: input, shape index: {}]
  %s13 = inlined_call_operand.vmem [shape: f32[4,1], index: 13, kind: input, shape index: {}]
  %s14 = inlined_call_operand.vmem [shape: f32[128,128], index: 14, kind: input, shape index: {}]
  %s15 = inlined_call_operand.vmem [shape: f32[1,128], index: 15, kind: input, shape index: {}]
  %s16 = inlined_call_operand.vmem [shape: f32[4,4], index: 16, kind: input, shape index: {}]
  %s17 = inlined_call_operand.vmem [shape: f32[2,4,256], index: 17, kind: output, shape index: {0}]
  %s18 = inlined_call_operand.vmem [shape: f32[2,4,256], index: 18, kind: output, shape index: {1}]
  %s19 = inlined_call_operand.vmem [shape: f32[2,4,128], index: 19, kind: output, shape index: {2}]
  %20 = xla_tuple %s17, %s18, %s19
  %s21 = sld [smem:[#allocation0]]
  $region117: #{region_unit_forward.3} parent=0
    _
  %s23 = ssub.s32 1, %s21
  %s24 = scalar_select 0, %s23, %s21
  loop: start=0, step=1, limit=4
  $region2: #{region_unit_forward.3} parent=0 // loop_pre_header
    _
  $region3: #{region_unit_forward.3} parent=0 // loop_header
    %s26 = sphi 0, %s30
    %p27 = scmp.ge.s32.totalorder %s26, 4
    %s36 = sphi 0, %s38
    %s39 = sphi 0, %s36
    %s40 = sphi 0, %s39
    %s56 = sphi 0, %s40
    %s60 = sphi 0, %s60
    %s62 = sphi 0, %s60
    %s63 = sphi 0, %s62
    %s77 = sphi 0, %s63
    %s81 = sphi 0, %s81
    %s83 = sphi 0, %s81
    %s84 = sphi 0, %s83
    %s98 = sphi 0, %s84
    %s102 = sphi 0, %s102
    %s104 = sphi 0, %s102
    %s105 = sphi 0, %s104
    %s119 = sphi 0, %s105
    %s123 = sphi 0, %s123
    %s125 = sphi 0, %s123
    %s126 = sphi 0, %s125
    %s140 = sphi 0, %s126
    %s144 = sphi 0, %s144
    %s146 = sphi 0, %s144
    %s147 = sphi 0, %s146
    %s161 = sphi 0, %s147
    %s165 = sphi 0, %s165
    %s167 = sphi 0, %s165
    %s168 = sphi 0, %s167
    %s182 = sphi 0, %s168
    %s186 = sphi 0, %s186
    %s188 = sphi 0, %s186
    %s189 = sphi 0, %s188
    %s203 = sphi 0, %s189
    %s207 = sphi 0, %s207
    %s209 = sphi 0, %s207
    %s210 = sphi 0, %s209
    %s224 = sphi 0, %s210
    %s228 = sphi 0, %s228
    %s230 = sphi 0, %s228
    %s231 = sphi 0, %s230
    %s245 = sphi 0, %s231
    %s249 = sphi 0, %s249
    %s251 = sphi 0, %s249
    %s252 = sphi 0, %s251
    %s266 = sphi 0, %s252
    %s272 = sphi 0, %s274
    %s275 = sphi 0, %s272
    %s276 = sphi 0, %s275
    %s292 = sphi 0, %s276
    %s296 = sphi 0, %s296
    %s298 = sphi 0, %s296
    %s299 = sphi 0, %s298
    %s313 = sphi 0, %s299
    %s317 = sphi 0, %s317
    %s319 = sphi 0, %s317
    %s320 = sphi 0, %s319
    %s334 = sphi 0, %s320
    %s338 = sphi 0, %s338
    %s340 = sphi 0, %s338
    %s341 = sphi 0, %s340
    %s355 = sphi 0, %s341
    %s359 = sphi 0, %s359
    %s361 = sphi 0, %s359
    %s362 = sphi 0, %s361
    %s376 = sphi 0, %s362
    %s380 = sphi 0, %s380
    %s382 = sphi 0, %s380
    %s383 = sphi 0, %s382
    %s397 = sphi 0, %s383
    %s403 = sphi 0, %s405
    %s406 = sphi 0, %s403
    %s407 = sphi 0, %s406
    %s423 = sphi 0, %s407
    %s429 = sphi 0, %s431
    %s432 = sphi 0, %s429
    %s433 = sphi 0, %s432
    %s449 = sphi 0, %s433
    %s455 = sphi 0, %s457
    %s458 = sphi 0, %s455
    %s459 = sphi 0, %s458
    %s475 = sphi 0, %s459
  $region4: #{region_unit_forward.3} parent=0 // loop_header_branch
    %29 = sbr.rel (%p27) target = $region8
  $region5: #{region_unit_forward.3} parent=0 // loop_body
    %s31 = ssub.s32 %s26, 1
    %s32 = ssub.s32 %s26, 2
    %s33 = sadd.s32 %s26, 1
    %s34 = ssub.s32 %s26, %s33
    %p35 = scmp.eq.s32.totalorder %s34, 0
    %s37 = sadd.s32 %s36, 1
    %s38 = scalar_select %p35, %s36, %s37
    %p41 = pneg %p35
    %p42 = scmp.eq.s32.totalorder %s26, 1
    %p43 = por %p41, %p42
    %p44 = scmp.ne.s32.totalorder %s36, %s39
    %p45 = scmp.eq.s32.totalorder %s26, 0
    %p46 = por %p44, %p45
    %p47 = scmp.ne.s32.totalorder %s36, %s39
    %p48 = scmp.eq.s32.totalorder %s31, 1
    %p49 = por %p47, %p48
    %p50 = scmp.ne.s32.totalorder %s39, %s40
    %p51 = scmp.eq.s32.totalorder %s31, 0
    %p52 = por %p50, %p51
    %p53 = scmp.ne.s32.totalorder %s39, %s40
    %p54 = scmp.eq.s32.totalorder %s32, 1
    %p55 = por %p53, %p54
    %p57 = scmp.ne.s32.totalorder %s40, %s56
    %p58 = scmp.eq.s32.totalorder %s32, 0
    %p59 = por %p57, %p58
    %s61 = sadd.s32 %s60, 1
    %p64 = scmp.eq.s32.totalorder %s26, 1
    %p65 = scmp.ne.s32.totalorder %s60, %s62
    %p66 = scmp.eq.s32.totalorder %s26, 0
    %p67 = por %p65, %p66
    %p68 = scmp.ne.s32.totalorder %s60, %s62
    %p69 = scmp.eq.s32.totalorder %s31, 1
    %p70 = por %p68, %p69
    %p71 = scmp.ne.s32.totalorder %s62, %s63
    %p72 = scmp.eq.s32.totalorder %s31, 0
    %p73 = por %p71, %p72
    %p74 = scmp.ne.s32.totalorder %s62, %s63
    %p75 = scmp.eq.s32.totalorder %s32, 1
    %p76 = por %p74, %p75
    %p78 = scmp.ne.s32.totalorder %s63, %s77
    %p79 = scmp.eq.s32.totalorder %s32, 0
    %p80 = por %p78, %p79
    %s82 = sadd.s32 %s81, 1
    %p85 = scmp.eq.s32.totalorder %s26, 1
    %p86 = scmp.ne.s32.totalorder %s81, %s83
    %p87 = scmp.eq.s32.totalorder %s26, 0
    %p88 = por %p86, %p87
    %p89 = scmp.ne.s32.totalorder %s81, %s83
    %p90 = scmp.eq.s32.totalorder %s31, 1
    %p91 = por %p89, %p90
    %p92 = scmp.ne.s32.totalorder %s83, %s84
    %p93 = scmp.eq.s32.totalorder %s31, 0
    %p94 = por %p92, %p93
    %p95 = scmp.ne.s32.totalorder %s83, %s84
    %p96 = scmp.eq.s32.totalorder %s32, 1
    %p97 = por %p95, %p96
    %p99 = scmp.ne.s32.totalorder %s84, %s98
    %p100 = scmp.eq.s32.totalorder %s32, 0
    %p101 = por %p99, %p100
    %s103 = sadd.s32 %s102, 1
    %p106 = scmp.eq.s32.totalorder %s26, 1
    %p107 = scmp.ne.s32.totalorder %s102, %s104
    %p108 = scmp.eq.s32.totalorder %s26, 0
    %p109 = por %p107, %p108
    %p110 = scmp.ne.s32.totalorder %s102, %s104
    %p111 = scmp.eq.s32.totalorder %s31, 1
    %p112 = por %p110, %p111
    %p113 = scmp.ne.s32.totalorder %s104, %s105
    %p114 = scmp.eq.s32.totalorder %s31, 0
    %p115 = por %p113, %p114
    %p116 = scmp.ne.s32.totalorder %s104, %s105
    %p117 = scmp.eq.s32.totalorder %s32, 1
    %p118 = por %p116, %p117
    %p120 = scmp.ne.s32.totalorder %s105, %s119
    %p121 = scmp.eq.s32.totalorder %s32, 0
    %p122 = por %p120, %p121
    %s124 = sadd.s32 %s123, 1
    %p127 = scmp.eq.s32.totalorder %s26, 1
    %p128 = scmp.ne.s32.totalorder %s123, %s125
    %p129 = scmp.eq.s32.totalorder %s26, 0
    %p130 = por %p128, %p129
    %p131 = scmp.ne.s32.totalorder %s123, %s125
    %p132 = scmp.eq.s32.totalorder %s31, 1
    %p133 = por %p131, %p132
    %p134 = scmp.ne.s32.totalorder %s125, %s126
    %p135 = scmp.eq.s32.totalorder %s31, 0
    %p136 = por %p134, %p135
    %p137 = scmp.ne.s32.totalorder %s125, %s126
    %p138 = scmp.eq.s32.totalorder %s32, 1
    %p139 = por %p137, %p138
    %p141 = scmp.ne.s32.totalorder %s126, %s140
    %p142 = scmp.eq.s32.totalorder %s32, 0
    %p143 = por %p141, %p142
    %s145 = sadd.s32 %s144, 1
    %p148 = scmp.eq.s32.totalorder %s26, 1
    %p149 = scmp.ne.s32.totalorder %s144, %s146
    %p150 = scmp.eq.s32.totalorder %s26, 0
    %p151 = por %p149, %p150
    %p152 = scmp.ne.s32.totalorder %s144, %s146
    %p153 = scmp.eq.s32.totalorder %s31, 1
    %p154 = por %p152, %p153
    %p155 = scmp.ne.s32.totalorder %s146, %s147
    %p156 = scmp.eq.s32.totalorder %s31, 0
    %p157 = por %p155, %p156
    %p158 = scmp.ne.s32.totalorder %s146, %s147
    %p159 = scmp.eq.s32.totalorder %s32, 1
    %p160 = por %p158, %p159
    %p162 = scmp.ne.s32.totalorder %s147, %s161
    %p163 = scmp.eq.s32.totalorder %s32, 0
    %p164 = por %p162, %p163
    %s166 = sadd.s32 %s165, 1
    %p169 = scmp.eq.s32.totalorder %s26, 1
    %p170 = scmp.ne.s32.totalorder %s165, %s167
    %p171 = scmp.eq.s32.totalorder %s26, 0
    %p172 = por %p170, %p171
    %p173 = scmp.ne.s32.totalorder %s165, %s167
    %p174 = scmp.eq.s32.totalorder %s31, 1
    %p175 = por %p173, %p174
    %p176 = scmp.ne.s32.totalorder %s167, %s168
    %p177 = scmp.eq.s32.totalorder %s31, 0
    %p178 = por %p176, %p177
    %p179 = scmp.ne.s32.totalorder %s167, %s168
    %p180 = scmp.eq.s32.totalorder %s32, 1
    %p181 = por %p179, %p180
    %p183 = scmp.ne.s32.totalorder %s168, %s182
    %p184 = scmp.eq.s32.totalorder %s32, 0
    %p185 = por %p183, %p184
    %s187 = sadd.s32 %s186, 1
    %p190 = scmp.eq.s32.totalorder %s26, 1
    %p191 = scmp.ne.s32.totalorder %s186, %s188
    %p192 = scmp.eq.s32.totalorder %s26, 0
    %p193 = por %p191, %p192
    %p194 = scmp.ne.s32.totalorder %s186, %s188
    %p195 = scmp.eq.s32.totalorder %s31, 1
    %p196 = por %p194, %p195
    %p197 = scmp.ne.s32.totalorder %s188, %s189
    %p198 = scmp.eq.s32.totalorder %s31, 0
    %p199 = por %p197, %p198
    %p200 = scmp.ne.s32.totalorder %s188, %s189
    %p201 = scmp.eq.s32.totalorder %s32, 1
    %p202 = por %p200, %p201
    %p204 = scmp.ne.s32.totalorder %s189, %s203
    %p205 = scmp.eq.s32.totalorder %s32, 0
    %p206 = por %p204, %p205
    %s208 = sadd.s32 %s207, 1
    %p211 = scmp.eq.s32.totalorder %s26, 1
    %p212 = scmp.ne.s32.totalorder %s207, %s209
    %p213 = scmp.eq.s32.totalorder %s26, 0
    %p214 = por %p212, %p213
    %p215 = scmp.ne.s32.totalorder %s207, %s209
    %p216 = scmp.eq.s32.totalorder %s31, 1
    %p217 = por %p215, %p216
    %p218 = scmp.ne.s32.totalorder %s209, %s210
    %p219 = scmp.eq.s32.totalorder %s31, 0
    %p220 = por %p218, %p219
    %p221 = scmp.ne.s32.totalorder %s209, %s210
    %p222 = scmp.eq.s32.totalorder %s32, 1
    %p223 = por %p221, %p222
    %p225 = scmp.ne.s32.totalorder %s210, %s224
    %p226 = scmp.eq.s32.totalorder %s32, 0
    %p227 = por %p225, %p226
    %s229 = sadd.s32 %s228, 1
    %p232 = scmp.eq.s32.totalorder %s26, 1
    %p233 = scmp.ne.s32.totalorder %s228, %s230
    %p234 = scmp.eq.s32.totalorder %s26, 0
    %p235 = por %p233, %p234
    %p236 = scmp.ne.s32.totalorder %s228, %s230
    %p237 = scmp.eq.s32.totalorder %s31, 1
    %p238 = por %p236, %p237
    %p239 = scmp.ne.s32.totalorder %s230, %s231
    %p240 = scmp.eq.s32.totalorder %s31, 0
    %p241 = por %p239, %p240
    %p242 = scmp.ne.s32.totalorder %s230, %s231
    %p243 = scmp.eq.s32.totalorder %s32, 1
    %p244 = por %p242, %p243
    %p246 = scmp.ne.s32.totalorder %s231, %s245
    %p247 = scmp.eq.s32.totalorder %s32, 0
    %p248 = por %p246, %p247
    %s250 = sadd.s32 %s249, 1
    %p253 = scmp.eq.s32.totalorder %s26, 1
    %p254 = scmp.ne.s32.totalorder %s249, %s251
    %p255 = scmp.eq.s32.totalorder %s26, 0
    %p256 = por %p254, %p255
    %p257 = scmp.ne.s32.totalorder %s249, %s251
    %p258 = scmp.eq.s32.totalorder %s31, 1
    %p259 = por %p257, %p258
    %p260 = scmp.ne.s32.totalorder %s251, %s252
    %p261 = scmp.eq.s32.totalorder %s31, 0
    %p262 = por %p260, %p261
    %p263 = scmp.ne.s32.totalorder %s251, %s252
    %p264 = scmp.eq.s32.totalorder %s32, 1
    %p265 = por %p263, %p264
    %p267 = scmp.ne.s32.totalorder %s252, %s266
    %p268 = scmp.eq.s32.totalorder %s32, 0
    %p269 = por %p267, %p268
    %s270 = ssub.s32 %s26, %s33
    %p271 = scmp.eq.s32.totalorder %s270, 0
    %s273 = sadd.s32 %s272, 1
    %s274 = scalar_select %p271, %s272, %s273
    %p277 = pneg %p271
    %p278 = scmp.eq.s32.totalorder %s26, 1
    %p279 = por %p277, %p278
    %p280 = scmp.ne.s32.totalorder %s272, %s275
    %p281 = scmp.eq.s32.totalorder %s26, 0
    %p282 = por %p280, %p281
    %p283 = scmp.ne.s32.totalorder %s272, %s275
    %p284 = scmp.eq.s32.totalorder %s31, 1
    %p285 = por %p283, %p284
    %p286 = scmp.ne.s32.totalorder %s275, %s276
    %p287 = scmp.eq.s32.totalorder %s31, 0
    %p288 = por %p286, %p287
    %p289 = scmp.ne.s32.totalorder %s275, %s276
    %p290 = scmp.eq.s32.totalorder %s32, 1
    %p291 = por %p289, %p290
    %p293 = scmp.ne.s32.totalorder %s276, %s292
    %p294 = scmp.eq.s32.totalorder %s32, 0
    %p295 = por %p293, %p294
    %s297 = sadd.s32 %s296, 1
    %p300 = scmp.eq.s32.totalorder %s26, 1
    %p301 = scmp.ne.s32.totalorder %s296, %s298
    %p302 = scmp.eq.s32.totalorder %s26, 0
    %p303 = por %p301, %p302
    %p304 = scmp.ne.s32.totalorder %s296, %s298
    %p305 = scmp.eq.s32.totalorder %s31, 1
    %p306 = por %p304, %p305
    %p307 = scmp.ne.s32.totalorder %s298, %s299
    %p308 = scmp.eq.s32.totalorder %s31, 0
    %p309 = por %p307, %p308
    %p310 = scmp.ne.s32.totalorder %s298, %s299
    %p311 = scmp.eq.s32.totalorder %s32, 1
    %p312 = por %p310, %p311
    %p314 = scmp.ne.s32.totalorder %s299, %s313
    %p315 = scmp.eq.s32.totalorder %s32, 0
    %p316 = por %p314, %p315
    %s318 = sadd.s32 %s317, 1
    %p321 = scmp.eq.s32.totalorder %s26, 1
    %p322 = scmp.ne.s32.totalorder %s317, %s319
    %p323 = scmp.eq.s32.totalorder %s26, 0
    %p324 = por %p322, %p323
    %p325 = scmp.ne.s32.totalorder %s317, %s319
    %p326 = scmp.eq.s32.totalorder %s31, 1
    %p327 = por %p325, %p326
    %p328 = scmp.ne.s32.totalorder %s319, %s320
    %p329 = scmp.eq.s32.totalorder %s31, 0
    %p330 = por %p328, %p329
    %p331 = scmp.ne.s32.totalorder %s319, %s320
    %p332 = scmp.eq.s32.totalorder %s32, 1
    %p333 = por %p331, %p332
    %p335 = scmp.ne.s32.totalorder %s320, %s334
    %p336 = scmp.eq.s32.totalorder %s32, 0
    %p337 = por %p335, %p336
    %s339 = sadd.s32 %s338, 1
    %p342 = scmp.eq.s32.totalorder %s26, 1
    %p343 = scmp.ne.s32.totalorder %s338, %s340
    %p344 = scmp.eq.s32.totalorder %s26, 0
    %p345 = por %p343, %p344
    %p346 = scmp.ne.s32.totalorder %s338, %s340
    %p347 = scmp.eq.s32.totalorder %s31, 1
    %p348 = por %p346, %p347
    %p349 = scmp.ne.s32.totalorder %s340, %s341
    %p350 = scmp.eq.s32.totalorder %s31, 0
    %p351 = por %p349, %p350
    %p352 = scmp.ne.s32.totalorder %s340, %s341
    %p353 = scmp.eq.s32.totalorder %s32, 1
    %p354 = por %p352, %p353
    %p356 = scmp.ne.s32.totalorder %s341, %s355
    %p357 = scmp.eq.s32.totalorder %s32, 0
    %p358 = por %p356, %p357
    %s360 = sadd.s32 %s359, 1
    %p363 = scmp.eq.s32.totalorder %s26, 1
    %p364 = scmp.ne.s32.totalorder %s359, %s361
    %p365 = scmp.eq.s32.totalorder %s26, 0
    %p366 = por %p364, %p365
    %p367 = scmp.ne.s32.totalorder %s359, %s361
    %p368 = scmp.eq.s32.totalorder %s31, 1
    %p369 = por %p367, %p368
    %p370 = scmp.ne.s32.totalorder %s361, %s362
    %p371 = scmp.eq.s32.totalorder %s31, 0
    %p372 = por %p370, %p371
    %p373 = scmp.ne.s32.totalorder %s361, %s362
    %p374 = scmp.eq.s32.totalorder %s32, 1
    %p375 = por %p373, %p374
    %p377 = scmp.ne.s32.totalorder %s362, %s376
    %p378 = scmp.eq.s32.totalorder %s32, 0
    %p379 = por %p377, %p378
    %s381 = sadd.s32 %s380, 1
    %p384 = scmp.eq.s32.totalorder %s26, 1
    %p385 = scmp.ne.s32.totalorder %s380, %s382
    %p386 = scmp.eq.s32.totalorder %s26, 0
    %p387 = por %p385, %p386
    %p388 = scmp.ne.s32.totalorder %s380, %s382
    %p389 = scmp.eq.s32.totalorder %s31, 1
    %p390 = por %p388, %p389
    %p391 = scmp.ne.s32.totalorder %s382, %s383
    %p392 = scmp.eq.s32.totalorder %s31, 0
    %p393 = por %p391, %p392
    %p394 = scmp.ne.s32.totalorder %s382, %s383
    %p395 = scmp.eq.s32.totalorder %s32, 1
    %p396 = por %p394, %p395
    %p398 = scmp.ne.s32.totalorder %s383, %s397
    %p399 = scmp.eq.s32.totalorder %s32, 0
    %p400 = por %p398, %p399
    %s401 = ssub.s32 %s26, %s33
    %p402 = scmp.eq.s32.totalorder %s401, 0
    %s404 = sadd.s32 %s403, 1
    %s405 = scalar_select %p402, %s403, %s404
    %p408 = pneg %p402
    %p409 = scmp.eq.s32.totalorder %s26, 1
    %p410 = por %p408, %p409
    %p411 = scmp.ne.s32.totalorder %s403, %s406
    %p412 = scmp.eq.s32.totalorder %s26, 0
    %p413 = por %p411, %p412
    %p414 = scmp.ne.s32.totalorder %s403, %s406
    %p415 = scmp.eq.s32.totalorder %s31, 1
    %p416 = por %p414, %p415
    %p417 = scmp.ne.s32.totalorder %s406, %s407
    %p418 = scmp.eq.s32.totalorder %s31, 0
    %p419 = por %p417, %p418
    %p420 = scmp.ne.s32.totalorder %s406, %s407
    %p421 = scmp.eq.s32.totalorder %s32, 1
    %p422 = por %p420, %p421
    %p424 = scmp.ne.s32.totalorder %s407, %s423
    %p425 = scmp.eq.s32.totalorder %s32, 0
    %p426 = por %p424, %p425
    %s427 = ssub.s32 %s26, %s33
    %p428 = scmp.eq.s32.totalorder %s427, 0
    %s430 = sadd.s32 %s429, 1
    %s431 = scalar_select %p428, %s429, %s430
    %p434 = pneg %p428
    %p435 = scmp.eq.s32.totalorder %s26, 1
    %p436 = por %p434, %p435
    %p437 = scmp.ne.s32.totalorder %s429, %s432
    %p438 = scmp.eq.s32.totalorder %s26, 0
    %p439 = por %p437, %p438
    %p440 = scmp.ne.s32.totalorder %s429, %s432
    %p441 = scmp.eq.s32.totalorder %s31, 1
    %p442 = por %p440, %p441
    %p443 = scmp.ne.s32.totalorder %s432, %s433
    %p444 = scmp.eq.s32.totalorder %s31, 0
    %p445 = por %p443, %p444
    %p446 = scmp.ne.s32.totalorder %s432, %s433
    %p447 = scmp.eq.s32.totalorder %s32, 1
    %p448 = por %p446, %p447
    %p450 = scmp.ne.s32.totalorder %s433, %s449
    %p451 = scmp.eq.s32.totalorder %s32, 0
    %p452 = por %p450, %p451
    %s453 = ssub.s32 %s26, %s33
    %p454 = scmp.eq.s32.totalorder %s453, 0
    %s456 = sadd.s32 %s455, 1
    %s457 = scalar_select %p454, %s455, %s456
    %p460 = pneg %p454
    %p461 = scmp.eq.s32.totalorder %s26, 1
    %p462 = por %p460, %p461
    %p463 = scmp.ne.s32.totalorder %s455, %s458
    %p464 = scmp.eq.s32.totalorder %s26, 0
    %p465 = por %p463, %p464
    %p466 = scmp.ne.s32.totalorder %s455, %s458
    %p467 = scmp.eq.s32.totalorder %s31, 1
    %p468 = por %p466, %p467
    %p469 = scmp.ne.s32.totalorder %s458, %s459
    %p470 = scmp.eq.s32.totalorder %s31, 0
    %p471 = por %p469, %p470
    %p472 = scmp.ne.s32.totalorder %s458, %s459
    %p473 = scmp.eq.s32.totalorder %s32, 1
    %p474 = por %p472, %p473
    %p476 = scmp.ne.s32.totalorder %s459, %s475
    %p477 = scmp.eq.s32.totalorder %s32, 0
    %p478 = por %p476, %p477
    %p479 = scmp.le.s32.totalorder 1, %s26
    %p480 = scmp.lt.s32.totalorder %s26, 3
    %p481 = pnand %p479, %p480
    %p482 = pneg %p481
    // Predicated region
    $region9: #{region_unit_forward.3} parent=5 // pred_check
      _
    $region10: #{region_unit_forward.3} parent=5 // pred_check_branch
      %484 = sbr.rel (%p481) target = $region12
    $region11: #{region_unit_forward.3} parent=5 // pred_region
      %s485 = ssub.s32 %s26, 1
      // Predicated region
      $region13: #{region_unit_forward.3} parent=11 // pred_check
        %p486 = pneg %p73
      $region14: #{region_unit_forward.3} parent=11 // pred_check_branch
        %488 = sbr.rel (%p486) target = $region16
      $region15: #{region_unit_forward.3} parent=11 // pred_region
        _
      $region16: #{region_unit_forward.3} parent=11 // pred_fallthru
        _
      // Predicated region
      $region17: #{region_unit_forward.3} parent=11 // pred_check
        %p489 = pneg %p94
      $region18: #{region_unit_forward.3} parent=11 // pred_check_branch
        %491 = sbr.rel (%p489) target = $region20
      $region19: #{region_unit_forward.3} parent=11 // pred_region
        _
      $region20: #{region_unit_forward.3} parent=11 // pred_fallthru
        _
      // Predicated region
      $region21: #{region_unit_forward.3} parent=11 // pred_check
        %p492 = pneg %p115
      $region22: #{region_unit_forward.3} parent=11 // pred_check_branch
        %494 = sbr.rel (%p492) target = $region24
      $region23: #{region_unit_forward.3} parent=11 // pred_region
        _
      $region24: #{region_unit_forward.3} parent=11 // pred_fallthru
        _
      // Predicated region
      $region25: #{region_unit_forward.3} parent=11 // pred_check
        %p495 = pneg %p136
      $region26: #{region_unit_forward.3} parent=11 // pred_check_branch
        %497 = sbr.rel (%p495) target = $region28
      $region27: #{region_unit_forward.3} parent=11 // pred_region
        _
      $region28: #{region_unit_forward.3} parent=11 // pred_fallthru
        _
      // Predicated region
      $region29: #{region_unit_forward.3} parent=11 // pred_check
        %p498 = pneg %p157
      $region30: #{region_unit_forward.3} parent=11 // pred_check_branch
        %500 = sbr.rel (%p498) target = $region32
      $region31: #{region_unit_forward.3} parent=11 // pred_region
        _
      $region32: #{region_unit_forward.3} parent=11 // pred_fallthru
        _
      // Predicated region
      $region33: #{region_unit_forward.3} parent=11 // pred_check
        %p501 = pneg %p178
      $region34: #{region_unit_forward.3} parent=11 // pred_check_branch
        %503 = sbr.rel (%p501) target = $region36
      $region35: #{region_unit_forward.3} parent=11 // pred_region
        _
      $region36: #{region_unit_forward.3} parent=11 // pred_fallthru
        _
      // Predicated region
      $region37: #{region_unit_forward.3} parent=11 // pred_check
        %p504 = pneg %p199
      $region38: #{region_unit_forward.3} parent=11 // pred_check_branch
        %506 = sbr.rel (%p504) target = $region40
      $region39: #{region_unit_forward.3} parent=11 // pred_region
        _
      $region40: #{region_unit_forward.3} parent=11 // pred_fallthru
        _
      // Predicated region
      $region41: #{region_unit_forward.3} parent=11 // pred_check
        %p507 = pneg %p220
      $region42: #{region_unit_forward.3} parent=11 // pred_check_branch
        %509 = sbr.rel (%p507) target = $region44
      $region43: #{region_unit_forward.3} parent=11 // pred_region
        _
      $region44: #{region_unit_forward.3} parent=11 // pred_fallthru
        _
      // Predicated region
      $region45: #{region_unit_forward.3} parent=11 // pred_check
        %p510 = pneg %p241
      $region46: #{region_unit_forward.3} parent=11 // pred_check_branch
        %512 = sbr.rel (%p510) target = $region48
      $region47: #{region_unit_forward.3} parent=11 // pred_region
        _
      $region48: #{region_unit_forward.3} parent=11 // pred_fallthru
        _
      // Predicated region
      $region49: #{region_unit_forward.3} parent=11 // pred_check
        %p513 = pneg %p262
      $region50: #{region_unit_forward.3} parent=11 // pred_check_branch
        %515 = sbr.rel (%p513) target = $region52
      $region51: #{region_unit_forward.3} parent=11 // pred_region
        _
      $region52: #{region_unit_forward.3} parent=11 // pred_fallthru
        _
      // Predicated region
      $region53: #{region_unit_forward.3} parent=11 // pred_check
        %p516 = pneg %p309
      $region54: #{region_unit_forward.3} parent=11 // pred_check_branch
        %518 = sbr.rel (%p516) target = $region56
      $region55: #{region_unit_forward.3} parent=11 // pred_region
        _
      $region56: #{region_unit_forward.3} parent=11 // pred_fallthru
        _
      // Predicated region
      $region57: #{region_unit_forward.3} parent=11 // pred_check
        %p519 = pneg %p330
      $region58: #{region_unit_forward.3} parent=11 // pred_check_branch
        %521 = sbr.rel (%p519) target = $region60
      $region59: #{region_unit_forward.3} parent=11 // pred_region
        _
      $region60: #{region_unit_forward.3} parent=11 // pred_fallthru
        _
      // Predicated region
      $region61: #{region_unit_forward.3} parent=11 // pred_check
        %p522 = pneg %p351
      $region62: #{region_unit_forward.3} parent=11 // pred_check_branch
        %524 = sbr.rel (%p522) target = $region64
      $region63: #{region_unit_forward.3} parent=11 // pred_region
        _
      $region64: #{region_unit_forward.3} parent=11 // pred_fallthru
        _
      // Predicated region
      $region65: #{region_unit_forward.3} parent=11 // pred_check
        %p525 = pneg %p372
      $region66: #{region_unit_forward.3} parent=11 // pred_check_branch
        %527 = sbr.rel (%p525) target = $region68
      $region67: #{region_unit_forward.3} parent=11 // pred_region
        _
      $region68: #{region_unit_forward.3} parent=11 // pred_fallthru
        _
      // Predicated region
      $region69: #{region_unit_forward.3} parent=11 // pred_check
        %p528 = pneg %p393
      $region70: #{region_unit_forward.3} parent=11 // pred_check_branch
        %530 = sbr.rel (%p528) target = $region72
      $region71: #{region_unit_forward.3} parent=11 // pred_region
        _
      $region72: #{region_unit_forward.3} parent=11 // pred_fallthru
        _
    $region12: #{region_unit_forward.3} parent=5 // pred_fallthru
      _
    %p531 = scmp.lt.s32.totalorder %s26, 2
    // Predicated region
    $region73: #{region_unit_forward.3} parent=5 // pred_check
      %p532 = pneg %p531
    $region74: #{region_unit_forward.3} parent=5 // pred_check_branch
      %534 = sbr.rel (%p532) target = $region76
    $region75: #{region_unit_forward.3} parent=5 // pred_region
      // Predicated region
      $region77: #{region_unit_forward.3} parent=75 // pred_check
        %p535 = pneg %p46
      $region78: #{region_unit_forward.3} parent=75 // pred_check_branch
        %537 = sbr.rel (%p535) target = $region80
      $region79: #{region_unit_forward.3} parent=75 // pred_region
        %p538 = scmp.lt.s32.totalorder %s26, 1
        %s539 = scalar_select %p538, %s26, 1
        %s540 = smul.addr %s539, 8
        %s541 = smul.addr %s540, 8
        %s542 = scalar_lea.vmem %s0, %s541
      $region80: #{region_unit_forward.3} parent=75 // pred_fallthru
        _
      // Predicated region
      $region81: #{region_unit_forward.3} parent=75 // pred_check
        %p543 = pneg %p282
      $region82: #{region_unit_forward.3} parent=75 // pred_check_branch
        %545 = sbr.rel (%p543) target = $region84
      $region83: #{region_unit_forward.3} parent=75 // pred_region
        %p546 = scmp.lt.s32.totalorder %s26, 1
        %s547 = scalar_select %p546, %s26, 1
        %s548 = smul.addr %s547, 5
        %s549 = smul.addr %s548, 8
        %s550 = scalar_lea.vmem %s11, %s549
      $region84: #{region_unit_forward.3} parent=75 // pred_fallthru
        _
    $region76: #{region_unit_forward.3} parent=5 // pred_fallthru
      _
    %p551 = scmp.le.s32.totalorder 1, %s26
    %p552 = scmp.lt.s32.totalorder %s26, 3
    %p553 = pnand %p551, %p552
    %p554 = pneg %p553
    // Predicated region
    $region85: #{region_unit_forward.3} parent=5 // pred_check
      _
    $region86: #{region_unit_forward.3} parent=5 // pred_check_branch
      %556 = sbr.rel (%p553) target = $region88
    $region87: #{region_unit_forward.3} parent=5 // pred_region
      %s557 = ssub.s32 %s26, 1
      %p558 = scmp.lt.s32.totalorder %s31, 1
      %s559 = scalar_select %p558, %s31, 1
      %s560 = smul.addr %s559, 8
      %s561 = smul.addr %s560, 8
      %s562 = scalar_lea.vmem %s0, %s561
      %p563 = pneg %p52
      %p564 = pneg %p49
      %p565 = pneg %p73
      %p566 = pneg %p70
      %p567 = pneg %p94
      %p568 = pneg %p91
      %p569 = pneg %p115
      %p570 = pneg %p112
      %p571 = pneg %p136
      %p572 = pneg %p133
      %p573 = pneg %p157
      %p574 = pneg %p154
      %p575 = pneg %p178
      %p576 = pneg %p175
      %p577 = pneg %p199
      %p578 = pneg %p196
      %p579 = pneg %p220
      %p580 = pneg %p217
      %p581 = pneg %p241
      %p582 = pneg %p238
      %p583 = pneg %p262
      %p584 = pneg %p259
      %p585 = scmp.lt.s32.totalorder %s31, 1
      %s586 = scalar_select %p585, %s31, 1
      %s587 = smul.addr %s586, 5
      %s588 = smul.addr %s587, 8
      %s589 = scalar_lea.vmem %s11, %s588
      %p590 = pneg %p288
      %p591 = pneg %p285
      %p592 = pneg %p309
      %p593 = pneg %p306
      %p594 = pneg %p330
      %p595 = pneg %p327
      %p596 = pneg %p351
      %p597 = pneg %p348
      %p598 = pneg %p372
      %p599 = pneg %p369
      %p600 = pneg %p393
      %p601 = pneg %p390
      %p602 = pneg %p419
      %p603 = pneg %p416
      %p604 = scmp.lt.s32.totalorder %s31, 1
      %s605 = scalar_select %p604, %s31, 1
      %s606 = smul.addr %s605, 2
      %s607 = smul.addr %s606, 4
      %s608 = scalar_lea.vmem %s17, %s607
      %p609 = pneg %p445
      %p610 = pneg %p442
      %p611 = scmp.lt.s32.totalorder %s31, 1
      %s612 = scalar_select %p611, %s31, 1
      %s613 = smul.addr %s612, 2
      %s614 = smul.addr %s613, 4
      %s615 = scalar_lea.vmem %s18, %s614
      %p616 = pneg %p471
      %p617 = pneg %p468
      %p618 = scmp.lt.s32.totalorder %s31, 1
      %s619 = scalar_select %p618, %s31, 1
      %s620 = smul.addr %s619, 4
      %s621 = scalar_lea.vmem %s19, %s620
      %p622 = scmp.lt.s32.totalorder %s31, 1
      %s623 = scalar_select %p622, %s31, 1
      %s624 = smul.addr %s623, 8
      %s625 = smul.addr %s624, 8
      %s626 = scalar_lea.vmem %s0, %s625
      %p627 = scmp.lt.s32.totalorder %s31, 1
      %s628 = scalar_select %p627, %s31, 1
      %s629 = smul.addr %s628, 5
      %s630 = smul.addr %s629, 8
      %s631 = scalar_lea.vmem %s11, %s630
      %p632 = scmp.lt.s32.totalorder %s31, 1
      %s633 = scalar_select %p632, %s31, 1
      %s634 = smul.addr %s633, 2
      %s635 = smul.addr %s634, 4
      %s636 = scalar_lea.vmem %s17, %s635
      %p637 = scmp.lt.s32.totalorder %s31, 1
      %s638 = scalar_select %p637, %s31, 1
      %s639 = smul.addr %s638, 2
      %s640 = smul.addr %s639, 4
      %s641 = scalar_lea.vmem %s18, %s640
      %p642 = scmp.lt.s32.totalorder %s31, 1
      %s643 = scalar_select %p642, %s31, 1
      %s644 = smul.addr %s643, 4
      %s645 = scalar_lea.vmem %s19, %s644
      %v646 = vld [vmem:[%s626] sm:$0xff]
      %v647 = vld [vmem:[%s626 + $0x8] sm:$0xff]
      %v648 = vld [vmem:[%s626 + $0x10] sm:$0xff]
      %v649 = vld [vmem:[%s626 + $0x18] sm:$0xff]
      %v650 = vld [vmem:[%s626 + $0x20] sm:$0xff]
      %v651 = vld [vmem:[%s626 + $0x28] sm:$0xff]
      %v652 = vld [vmem:[%s626 + $0x30] sm:$0xff]
      %v653 = vld [vmem:[%s626 + $0x38] sm:$0xff]
      %v654 = vld [vmem:[%s1] sm:$0xf]
      %v655 = vcombine.low %v646, %v650
      %v656 = vcombine.high %v646, %v650
      %v658 = vunpack.c.l.s4 1983009808
      %v659 = vunpack.c.0.s8 %v658
      %v660 = vlaneseq
      %v661 = vshrl.u32 %v660, 7
      %v662 = vsub.s32 %v659, %v661
      %v663 = vrot.slane %v655, %v662
      %v665 = vunpack.c.l.s4 1983009808
      %v666 = vunpack.c.0.s8 %v665
      %v667 = vlaneseq
      %v668 = vshrl.u32 %v667, 7
      %v669 = vsub.s32 %v666, %v668
      %v670 = vrot.slane %v656, %v669
      %v671 = vcombine.low %v648, %v652
      %v672 = vcombine.high %v648, %v652
      %v674 = vunpack.c.l.s4 1983009808
      %v675 = vunpack.c.0.s8 %v674
      %v676 = vlaneseq
      %v677 = vshrl.u32 %v676, 7
      %v678 = vsub.s32 %v675, %v677
      %v679 = vrot.slane %v671, %v678
      %v681 = vunpack.c.l.s4 1983009808
      %v682 = vunpack.c.0.s8 %v681
      %v683 = vlaneseq
      %v684 = vshrl.u32 %v683, 7
      %v685 = vsub.s32 %v682, %v684
      %v686 = vrot.slane %v672, %v685
      %v687 = vcombine.low %v663, %v679
      %v688 = vcombine.high %v663, %v679
      %v690 = vunpack.c.l.s4 1934713408
      %v691 = vunpack.c.0.s8 %v690
      %v692 = vlaneseq
      %v693 = vshrl.u32 %v692, 7
      %v694 = vsub.s32 %v691, %v693
      %v695 = vrot.slane %v687, %v694
      %v697 = vunpack.c.l.s4 1934713408
      %v698 = vunpack.c.0.s8 %v697
      %v699 = vlaneseq
      %v700 = vshrl.u32 %v699, 7
      %v701 = vsub.s32 %v698, %v700
      %v702 = vrot.slane %v688, %v701
      %v703 = vcombine.low %v670, %v686
      %v704 = vcombine.high %v670, %v686
      %v706 = vunpack.c.l.s4 1934713408
      %v707 = vunpack.c.0.s8 %v706
      %v708 = vlaneseq
      %v709 = vshrl.u32 %v708, 7
      %v710 = vsub.s32 %v707, %v709
      %v711 = vrot.slane %v703, %v710
      %v713 = vunpack.c.l.s4 1934713408
      %v714 = vunpack.c.0.s8 %v713
      %v715 = vlaneseq
      %v716 = vshrl.u32 %v715, 7
      %v717 = vsub.s32 %v714, %v716
      %v718 = vrot.slane %v704, %v717
      %v719 = vcombine.high %v695, 0.0
      %v720 = vcombine.high %v702, 0.0
      %v721 = vcombine.high %v711, 0.0
      %v722 = vcombine.high %v718, 0.0
      %v723 = vcombine.low %v647, %v651
      %v724 = vcombine.high %v647, %v651
      %v726 = vunpack.c.l.s4 1983009808
      %v727 = vunpack.c.0.s8 %v726
      %v728 = vlaneseq
      %v729 = vshrl.u32 %v728, 7
      %v730 = vsub.s32 %v727, %v729
      %v731 = vrot.slane %v723, %v730
      %v733 = vunpack.c.l.s4 1983009808
      %v734 = vunpack.c.0.s8 %v733
      %v735 = vlaneseq
      %v736 = vshrl.u32 %v735, 7
      %v737 = vsub.s32 %v734, %v736
      %v738 = vrot.slane %v724, %v737
      %v739 = vcombine.low %v649, %v653
      %v740 = vcombine.high %v649, %v653
      %v742 = vunpack.c.l.s4 1983009808
      %v743 = vunpack.c.0.s8 %v742
      %v744 = vlaneseq
      %v745 = vshrl.u32 %v744, 7
      %v746 = vsub.s32 %v743, %v745
      %v747 = vrot.slane %v739, %v746
      %v749 = vunpack.c.l.s4 1983009808
      %v750 = vunpack.c.0.s8 %v749
      %v751 = vlaneseq
      %v752 = vshrl.u32 %v751, 7
      %v753 = vsub.s32 %v750, %v752
      %v754 = vrot.slane %v740, %v753
      %v755 = vcombine.low %v731, %v747
      %v756 = vcombine.high %v731, %v747
      %v758 = vunpack.c.l.s4 1934713408
      %v759 = vunpack.c.0.s8 %v758
      %v760 = vlaneseq
      %v761 = vshrl.u32 %v760, 7
      %v762 = vsub.s32 %v759, %v761
      %v763 = vrot.slane %v755, %v762
      %v765 = vunpack.c.l.s4 1934713408
      %v766 = vunpack.c.0.s8 %v765
      %v767 = vlaneseq
      %v768 = vshrl.u32 %v767, 7
      %v769 = vsub.s32 %v766, %v768
      %v770 = vrot.slane %v756, %v769
      %v771 = vcombine.low %v738, %v754
      %v772 = vcombine.high %v738, %v754
      %v774 = vunpack.c.l.s4 1934713408
      %v775 = vunpack.c.0.s8 %v774
      %v776 = vlaneseq
      %v777 = vshrl.u32 %v776, 7
      %v778 = vsub.s32 %v775, %v777
      %v779 = vrot.slane %v771, %v778
      %v781 = vunpack.c.l.s4 1934713408
      %v782 = vunpack.c.0.s8 %v781
      %v783 = vlaneseq
      %v784 = vshrl.u32 %v783, 7
      %v785 = vsub.s32 %v782, %v784
      %v786 = vrot.slane %v772, %v785
      %v787 = vcombine.high %v763, 0.0
      %v788 = vcombine.high %v770, 0.0
      %v789 = vcombine.high %v779, 0.0
      %v790 = vcombine.high %v786, 0.0
      %792 = vrot.lane.b32.xlu0 %v719, 16
      %v793 = vpop.permute.xlu0 %792
      %796 = vrot.lane.b32.xlu0 %v702, 32
      %v797 = vpop.permute.xlu0 %796
      %800 = vrot.lane.b32.xlu0 %v720, 48
      %v801 = vpop.permute.xlu0 %800
      %804 = vrot.lane.b32.xlu0 %v711, 64
      %v805 = vpop.permute.xlu0 %804
      %808 = vrot.lane.b32.xlu0 %v721, 80
      %v809 = vpop.permute.xlu0 %808
      %812 = vrot.lane.b32.xlu0 %v718, 96
      %v813 = vpop.permute.xlu0 %812
      %816 = vrot.lane.b32.xlu0 %v722, 112
      %v817 = vpop.permute.xlu0 %816
      %820 = vrot.lane.b32.xlu0 %v787, 16
      %v821 = vpop.permute.xlu0 %820
      %824 = vrot.lane.b32.xlu0 %v770, 32
      %v825 = vpop.permute.xlu0 %824
      %828 = vrot.lane.b32.xlu0 %v788, 48
      %v829 = vpop.permute.xlu0 %828
      %832 = vrot.lane.b32.xlu0 %v779, 64
      %v833 = vpop.permute.xlu0 %832
      %836 = vrot.lane.b32.xlu0 %v789, 80
      %v837 = vpop.permute.xlu0 %836
      %840 = vrot.lane.b32.xlu0 %v786, 96
      %v841 = vpop.permute.xlu0 %840
      %844 = vrot.lane.b32.xlu0 %v790, 112
      %v845 = vpop.permute.xlu0 %844
      %vm847 = vcmask 130048
      %v848 = vsel %vm847, %v695, %v793
      %vm849 = vcmask 261120
      %v850 = vsel %vm849, %v848, %v797
      %vm851 = vcmask 392192
      %v852 = vsel %vm851, %v850, %v801
      %vm853 = vcmask 523264
      %v854 = vsel %vm853, %v852, %v805
      %vm855 = vcmask 654336
      %v856 = vsel %vm855, %v854, %v809
      %vm857 = vcmask 785408
      %v858 = vsel %vm857, %v856, %v813
      %vm859 = vcmask 916480
      %v860 = vsel %vm859, %v858, %v817
      %v861 = vsel %vm847, %v763, %v821
      %v862 = vsel %vm849, %v861, %v825
      %v863 = vsel %vm851, %v862, %v829
      %v864 = vsel %vm853, %v863, %v833
      %v865 = vsel %vm855, %v864, %v837
      %v866 = vsel %vm857, %v865, %v841
      %v867 = vsel %vm859, %v866, %v845
      %v868 = vld [vmem:[%s2] sm:$0xf]
      %870 = vset.pattern.permute.xlu0 0
      %871 = vperm.xlu0 %870, %v868
      %v872 = vpop.permute.xlu0 %871
      %vm874 = vcmask 31744
      %v876 = vsel %vm874, %v654, 0
      %vm878 = vcmask 1043456
      %v880 = vsel %vm878, %v860, 0
      %v883 = vsel %vm878, %v867, 0
      %885 = vmatprep.subr.mxu0 %v883
      %886 = vmatpush1.msra.mxu0 %v880
      %887 = vmatprep.subr.mxu0 0.0
      %888 = vmatpush1.msra.mxu0 0.0
      %889 = vmatprep.subr.mxu0 0.0
      %890 = vmatpush1.msra.mxu0 0.0
      %891 = vmatprep.subr.mxu0 0.0
      %892 = vmatpush1.msra.mxu0 0.0
      %893 = vmatprep.subr.mxu0 0.0
      %894 = vmatpush1.msra.mxu0 0.0
      %895 = vmatprep.subr.mxu0 0.0
      %896 = vmatpush1.msra.mxu0 0.0
      %897 = vmatprep.subr.mxu0 0.0
      %898 = vmatpush1.msra.mxu0 0.0
      %899 = vmatprep.subr.mxu0 0.0
      %900 = vmatpush1.msra.mxu0 0.0
      %901 = vmatprep.subr.mxu0 0.0
      %902 = vmatpush1.msra.mxu0 0.0
      %903 = vmatprep.subr.mxu0 0.0
      %904 = vmatpush1.msra.mxu0 0.0
      %905 = vmatprep.subr.mxu0 0.0
      %906 = vmatpush1.msra.mxu0 0.0
      %907 = vmatprep.subr.mxu0 0.0
      %908 = vmatpush1.msra.mxu0 0.0
      %909 = vmatprep.subr.mxu0 0.0
      %910 = vmatpush1.msra.mxu0 0.0
      %911 = vmatprep.subr.mxu0 0.0
      %912 = vmatpush1.msra.mxu0 0.0
      %913 = vmatprep.subr.mxu0 0.0
      %914 = vmatpush1.msra.mxu0 0.0
      %915 = vmatprep.subr.mxu0 0.0
      %916 = vmatpush1.msra.mxu0 0.0
      %917 = vmatprep.subr.mxu0 0.0
      %918 = vmatpush1.msra.mxu0 0.0
      %919 = vmatprep.subr.mxu0 0.0
      %920 = vmatpush1.msra.mxu0 0.0
      %921 = vmatprep.subr.mxu0 0.0
      %922 = vmatpush1.msra.mxu0 0.0
      %923 = vmatprep.subr.mxu0 0.0
      %924 = vmatpush1.msra.mxu0 0.0
      %925 = vmatprep.subr.mxu0 0.0
      %926 = vmatpush1.msra.mxu0 0.0
      %927 = vmatprep.subr.mxu0 0.0
      %928 = vmatpush1.msra.mxu0 0.0
      %929 = vmatprep.subr.mxu0 0.0
      %930 = vmatpush1.msra.mxu0 0.0
      %931 = vmatprep.subr.mxu0 0.0
      %932 = vmatpush1.msra.mxu0 0.0
      %933 = vmatprep.subr.mxu0 0.0
      %934 = vmatpush1.msra.mxu0 0.0
      %935 = vmatprep.subr.mxu0 0.0
      %936 = vmatpush1.msra.mxu0 0.0
      %937 = vmatprep.subr.mxu0 0.0
      %938 = vmatpush1.msra.mxu0 0.0
      %939 = vmatprep.subr.mxu0 0.0
      %940 = vmatpush1.msra.mxu0 0.0
      %941 = vmatprep.subr.mxu0 0.0
      %942 = vmatpush1.msra.mxu0 0.0
      %943 = vmatprep.subr.mxu0 0.0
      %944 = vmatpush1.msra.mxu0 0.0
      %945 = vmatprep.subr.mxu0 0.0
      %946 = vmatpush1.msra.mxu0 0.0
      %947 = vmatprep.subr.mxu0 0.0
      %948 = vmatpush1.msra.mxu0 0.0
      %949 = vmatprep.mubr.f32.mxu0 0.0
      %950 = vmatmul.mubr.f32.gmra.mrb[0].mxu0 %v876
      %v951 = vpop.f32.mrb[0].mxu0
      %v952 = vadd.f32 %v872, %v951
      %v953 = vpop.f32.mrb[0].mxu0
      %v954 = vadd.f32 %v872, %v953
      %955 = vdwg.mxu0
      %957 = vrot.lane.b32.xlu0 %v952, 112
      %v958 = vpop.permute.xlu0 %957
      %960 = vrot.lane.b32.xlu0 %v952, 96
      %v961 = vpop.permute.xlu0 %960
      %963 = vrot.lane.b32.xlu0 %v952, 80
      %v964 = vpop.permute.xlu0 %963
      %966 = vrot.lane.b32.xlu0 %v952, 64
      %v967 = vpop.permute.xlu0 %966
      %969 = vrot.lane.b32.xlu0 %v952, 48
      %v970 = vpop.permute.xlu0 %969
      %972 = vrot.lane.b32.xlu0 %v952, 32
      %v973 = vpop.permute.xlu0 %972
      %975 = vrot.lane.b32.xlu0 %v952, 16
      %v976 = vpop.permute.xlu0 %975
      %979 = vrot.lane.b32.xlu0 %v954, 112
      %v980 = vpop.permute.xlu0 %979
      %982 = vrot.lane.b32.xlu0 %v954, 96
      %v983 = vpop.permute.xlu0 %982
      %985 = vrot.lane.b32.xlu0 %v954, 80
      %v986 = vpop.permute.xlu0 %985
      %988 = vrot.lane.b32.xlu0 %v954, 64
      %v989 = vpop.permute.xlu0 %988
      %991 = vrot.lane.b32.xlu0 %v954, 48
      %v992 = vpop.permute.xlu0 %991
      %994 = vrot.lane.b32.xlu0 %v954, 32
      %v995 = vpop.permute.xlu0 %994
      %997 = vrot.lane.b32.xlu0 %v954, 16
      %v998 = vpop.permute.xlu0 %997
      %v1000 = vcombine.low %v952, %v961
      %v1002 = vunpack.c.l.s4 1983009808
      %v1003 = vunpack.c.0.s8 %v1002
      %v1004 = vlaneseq
      %v1005 = vshrl.u32 %v1004, 7
      %v1006 = vsub.s32 %v1003, %v1005
      %v1007 = vrot.slane %v1000, %v1006
      %v1008 = vcombine.low %v958, %v964
      %v1010 = vunpack.c.l.s4 1983009808
      %v1011 = vunpack.c.0.s8 %v1010
      %v1012 = vlaneseq
      %v1013 = vshrl.u32 %v1012, 7
      %v1014 = vsub.s32 %v1011, %v1013
      %v1015 = vrot.slane %v1008, %v1014
      %v1016 = vcombine.low %v967, %v973
      %v1018 = vunpack.c.l.s4 1983009808
      %v1019 = vunpack.c.0.s8 %v1018
      %v1020 = vlaneseq
      %v1021 = vshrl.u32 %v1020, 7
      %v1022 = vsub.s32 %v1019, %v1021
      %v1023 = vrot.slane %v1016, %v1022
      %v1024 = vcombine.low %v970, %v976
      %v1026 = vunpack.c.l.s4 1983009808
      %v1027 = vunpack.c.0.s8 %v1026
      %v1028 = vlaneseq
      %v1029 = vshrl.u32 %v1028, 7
      %v1030 = vsub.s32 %v1027, %v1029
      %v1031 = vrot.slane %v1024, %v1030
      %v1032 = vcombine.low %v1007, %v1015
      %v1033 = vcombine.high %v1007, %v1015
      %v1035 = vunpack.c.l.s4 1934713408
      %v1036 = vunpack.c.0.s8 %v1035
      %v1037 = vlaneseq
      %v1038 = vshrl.u32 %v1037, 7
      %v1039 = vsub.s32 %v1036, %v1038
      %v1040 = vrot.slane %v1032, %v1039
      %v1042 = vunpack.c.l.s4 1934713408
      %v1043 = vunpack.c.0.s8 %v1042
      %v1044 = vlaneseq
      %v1045 = vshrl.u32 %v1044, 7
      %v1046 = vsub.s32 %v1043, %v1045
      %v1047 = vrot.slane %v1033, %v1046
      %v1048 = vcombine.low %v1023, %v1031
      %v1049 = vcombine.high %v1023, %v1031
      %v1051 = vunpack.c.l.s4 1934713408
      %v1052 = vunpack.c.0.s8 %v1051
      %v1053 = vlaneseq
      %v1054 = vshrl.u32 %v1053, 7
      %v1055 = vsub.s32 %v1052, %v1054
      %v1056 = vrot.slane %v1048, %v1055
      %v1058 = vunpack.c.l.s4 1934713408
      %v1059 = vunpack.c.0.s8 %v1058
      %v1060 = vlaneseq
      %v1061 = vshrl.u32 %v1060, 7
      %v1062 = vsub.s32 %v1059, %v1061
      %v1063 = vrot.slane %v1049, %v1062
      %v1064 = vcombine.low %v1040, %v1056
      %v1065 = vcombine.high %v1040, %v1056
      %v1066 = vcombine.low %v1047, %v1063
      %v1067 = vcombine.high %v1047, %v1063
      %v1068 = vcombine.low %v954, %v983
      %v1070 = vunpack.c.l.s4 1983009808
      %v1071 = vunpack.c.0.s8 %v1070
      %v1072 = vlaneseq
      %v1073 = vshrl.u32 %v1072, 7
      %v1074 = vsub.s32 %v1071, %v1073
      %v1075 = vrot.slane %v1068, %v1074
      %v1076 = vcombine.low %v980, %v986
      %v1078 = vunpack.c.l.s4 1983009808
      %v1079 = vunpack.c.0.s8 %v1078
      %v1080 = vlaneseq
      %v1081 = vshrl.u32 %v1080, 7
      %v1082 = vsub.s32 %v1079, %v1081
      %v1083 = vrot.slane %v1076, %v1082
      %v1084 = vcombine.low %v989, %v995
      %v1086 = vunpack.c.l.s4 1983009808
      %v1087 = vunpack.c.0.s8 %v1086
      %v1088 = vlaneseq
      %v1089 = vshrl.u32 %v1088, 7
      %v1090 = vsub.s32 %v1087, %v1089
      %v1091 = vrot.slane %v1084, %v1090
      %v1092 = vcombine.low %v992, %v998
      %v1094 = vunpack.c.l.s4 1983009808
      %v1095 = vunpack.c.0.s8 %v1094
      %v1096 = vlaneseq
      %v1097 = vshrl.u32 %v1096, 7
      %v1098 = vsub.s32 %v1095, %v1097
      %v1099 = vrot.slane %v1092, %v1098
      %v1100 = vcombine.low %v1075, %v1083
      %v1101 = vcombine.high %v1075, %v1083
      %v1103 = vunpack.c.l.s4 1934713408
      %v1104 = vunpack.c.0.s8 %v1103
      %v1105 = vlaneseq
      %v1106 = vshrl.u32 %v1105, 7
      %v1107 = vsub.s32 %v1104, %v1106
      %v1108 = vrot.slane %v1100, %v1107
      %v1110 = vunpack.c.l.s4 1934713408
      %v1111 = vunpack.c.0.s8 %v1110
      %v1112 = vlaneseq
      %v1113 = vshrl.u32 %v1112, 7
      %v1114 = vsub.s32 %v1111, %v1113
      %v1115 = vrot.slane %v1101, %v1114
      %v1116 = vcombine.low %v1091, %v1099
      %v1117 = vcombine.high %v1091, %v1099
      %v1119 = vunpack.c.l.s4 1934713408
      %v1120 = vunpack.c.0.s8 %v1119
      %v1121 = vlaneseq
      %v1122 = vshrl.u32 %v1121, 7
      %v1123 = vsub.s32 %v1120, %v1122
      %v1124 = vrot.slane %v1116, %v1123
      %v1126 = vunpack.c.l.s4 1934713408
      %v1127 = vunpack.c.0.s8 %v1126
      %v1128 = vlaneseq
      %v1129 = vshrl.u32 %v1128, 7
      %v1130 = vsub.s32 %v1127, %v1129
      %v1131 = vrot.slane %v1117, %v1130
      %v1132 = vcombine.low %v1108, %v1124
      %v1133 = vcombine.high %v1108, %v1124
      %v1134 = vcombine.low %v1115, %v1131
      %v1135 = vcombine.high %v1115, %v1131
      %v1137 = vsel %vm847, %v1064, 0
      %v1140 = vsel %vm847, %v1132, 0
      %1142 = vmatprep.subr.mxu0 0.0
      %1143 = vmatpush1.xpose.msra.mxu0 %v1137
      %1144 = vmatprep.subr.mxu0 0.0
      %1145 = vmatpush1.xpose.msra.mxu0 %v1140
      %1146 = vmatprep.subr.mxu0 0.0
      %1147 = vmatpush1.xpose.msra.mxu0 0.0
      %1148 = vmatprep.subr.mxu0 0.0
      %1149 = vmatpush1.xpose.msra.mxu0 0.0
      %1150 = vmatprep.subr.mxu0 0.0
      %1151 = vmatpush1.xpose.msra.mxu0 0.0
      %1152 = vmatprep.subr.mxu0 0.0
      %1153 = vmatpush1.xpose.msra.mxu0 0.0
      %1154 = vmatprep.subr.mxu0 0.0
      %1155 = vmatpush1.xpose.msra.mxu0 0.0
      %1156 = vmatprep.subr.mxu0 0.0
      %1157 = vmatpush1.xpose.msra.mxu0 0.0
      %1158 = vmatprep.subr.mxu0 0.0
      %1159 = vmatpush1.xpose.msra.mxu0 0.0
      %1160 = vmatprep.subr.mxu0 0.0
      %1161 = vmatpush1.xpose.msra.mxu0 0.0
      %1162 = vmatprep.subr.mxu0 0.0
      %1163 = vmatpush1.xpose.msra.mxu0 0.0
      %1164 = vmatprep.subr.mxu0 0.0
      %1165 = vmatpush1.xpose.msra.mxu0 0.0
      %1166 = vmatprep.subr.mxu0 0.0
      %1167 = vmatpush1.xpose.msra.mxu0 0.0
      %1168 = vmatprep.subr.mxu0 0.0
      %1169 = vmatpush1.xpose.msra.mxu0 0.0
      %1170 = vmatprep.subr.mxu0 0.0
      %1171 = vmatpush1.xpose.msra.mxu0 0.0
      %1172 = vmatprep.subr.mxu0 0.0
      %1173 = vmatpush1.xpose.msra.mxu0 0.0
      %1174 = vmatprep.subr.mxu0 0.0
      %1175 = vmatpush1.xpose.msra.mxu0 0.0
      %1176 = vmatprep.subr.mxu0 0.0
      %1177 = vmatpush1.xpose.msra.mxu0 0.0
      %1178 = vmatprep.subr.mxu0 0.0
      %1179 = vmatpush1.xpose.msra.mxu0 0.0
      %1180 = vmatprep.subr.mxu0 0.0
      %1181 = vmatpush1.xpose.msra.mxu0 0.0
      %1182 = vmatprep.subr.mxu0 0.0
      %1183 = vmatpush1.xpose.msra.mxu0 0.0
      %1184 = vmatprep.subr.mxu0 0.0
      %1185 = vmatpush1.xpose.msra.mxu0 0.0
      %1186 = vmatprep.subr.mxu0 0.0
      %1187 = vmatpush1.xpose.msra.mxu0 0.0
      %1188 = vmatprep.subr.mxu0 0.0
      %1189 = vmatpush1.xpose.msra.mxu0 0.0
      %1190 = vmatprep.subr.mxu0 0.0
      %1191 = vmatpush1.xpose.msra.mxu0 0.0
      %1192 = vmatprep.subr.mxu0 0.0
      %1193 = vmatpush1.xpose.msra.mxu0 0.0
      %1194 = vmatprep.subr.mxu0 0.0
      %1195 = vmatpush1.xpose.msra.mxu0 0.0
      %1196 = vmatprep.subr.mxu0 0.0
      %1197 = vmatpush1.xpose.msra.mxu0 0.0
      %1198 = vmatprep.subr.mxu0 0.0
      %1199 = vmatpush1.xpose.msra.mxu0 0.0
      %1200 = vmatprep.subr.mxu0 0.0
      %1201 = vmatpush1.xpose.msra.mxu0 0.0
      %1202 = vmatprep.subr.mxu0 0.0
      %1203 = vmatpush1.xpose.msra.mxu0 0.0
      %1204 = vmatprep.subr.mxu0 0.0
      %1205 = vmatpush1.xpose.msra.mxu0 0.0
      %1206 = vmatprep.mubr.f32.mxu0 0.0
      %1207 = vmatmul.mubr.f32.gmra.mrb[0].mxu0 %v1137
      %v1208 = vpop.f32.mrb[0].mxu0
      %v1209 = vadd.f32 0.0, %v1208
      %v1210 = vpop.f32.mrb[0].mxu0
      %1211 = vmatprep.mubr.f32.mxu0 0.0
      %1212 = vmatmul.mubr.f32.gmra.mrb[0].mxu0 %v1140
      %v1213 = vpop.f32.mrb[0].mxu0
      %v1214 = vadd.f32 0.0, %v1213
      %v1215 = vpop.f32.mrb[0].mxu0
      %1216 = vdwg.mxu0
      %v1218 = vsel %vm847, %v1065, 0
      %v1221 = vsel %vm847, %v1133, 0
      %1223 = vmatprep.subr.mxu0 0.0
      %1224 = vmatpush1.xpose.msra.mxu0 %v1218
      %1225 = vmatprep.subr.mxu0 0.0
      %1226 = vmatpush1.xpose.msra.mxu0 %v1221
      %1227 = vmatprep.subr.mxu0 0.0
      %1228 = vmatpush1.xpose.msra.mxu0 0.0
      %1229 = vmatprep.subr.mxu0 0.0
      %1230 = vmatpush1.xpose.msra.mxu0 0.0
      %1231 = vmatprep.subr.mxu0 0.0
      %1232 = vmatpush1.xpose.msra.mxu0 0.0
      %1233 = vmatprep.subr.mxu0 0.0
      %1234 = vmatpush1.xpose.msra.mxu0 0.0
      %1235 = vmatprep.subr.mxu0 0.0
      %1236 = vmatpush1.xpose.msra.mxu0 0.0
      %1237 = vmatprep.subr.mxu0 0.0
      %1238 = vmatpush1.xpose.msra.mxu0 0.0
      %1239 = vmatprep.subr.mxu0 0.0
      %1240 = vmatpush1.xpose.msra.mxu0 0.0
      %1241 = vmatprep.subr.mxu0 0.0
      %1242 = vmatpush1.xpose.msra.mxu0 0.0
      %1243 = vmatprep.subr.mxu0 0.0
      %1244 = vmatpush1.xpose.msra.mxu0 0.0
      %1245 = vmatprep.subr.mxu0 0.0
      %1246 = vmatpush1.xpose.msra.mxu0 0.0
      %1247 = vmatprep.subr.mxu0 0.0
      %1248 = vmatpush1.xpose.msra.mxu0 0.0
      %1249 = vmatprep.subr.mxu0 0.0
      %1250 = vmatpush1.xpose.msra.mxu0 0.0
      %1251 = vmatprep.subr.mxu0 0.0
      %1252 = vmatpush1.xpose.msra.mxu0 0.0
      %1253 = vmatprep.subr.mxu0 0.0
      %1254 = vmatpush1.xpose.msra.mxu0 0.0
      %1255 = vmatprep.subr.mxu0 0.0
      %1256 = vmatpush1.xpose.msra.mxu0 0.0
      %1257 = vmatprep.subr.mxu0 0.0
      %1258 = vmatpush1.xpose.msra.mxu0 0.0
      %1259 = vmatprep.subr.mxu0 0.0
      %1260 = vmatpush1.xpose.msra.mxu0 0.0
      %1261 = vmatprep.subr.mxu0 0.0
      %1262 = vmatpush1.xpose.msra.mxu0 0.0
      %1263 = vmatprep.subr.mxu0 0.0
      %1264 = vmatpush1.xpose.msra.mxu0 0.0
      %1265 = vmatprep.subr.mxu0 0.0
      %1266 = vmatpush1.xpose.msra.mxu0 0.0
      %1267 = vmatprep.subr.mxu0 0.0
      %1268 = vmatpush1.xpose.msra.mxu0 0.0
      %1269 = vmatprep.subr.mxu0 0.0
      %1270 = vmatpush1.xpose.msra.mxu0 0.0
      %1271 = vmatprep.subr.mxu0 0.0
      %1272 = vmatpush1.xpose.msra.mxu0 0.0
      %1273 = vmatprep.subr.mxu0 0.0
      %1274 = vmatpush1.xpose.msra.mxu0 0.0
      %1275 = vmatprep.subr.mxu0 0.0
      %1276 = vmatpush1.xpose.msra.mxu0 0.0
      %1277 = vmatprep.subr.mxu0 0.0
      %1278 = vmatpush1.xpose.msra.mxu0 0.0
      %1279 = vmatprep.subr.mxu0 0.0
      %1280 = vmatpush1.xpose.msra.mxu0 0.0
      %1281 = vmatprep.subr.mxu0 0.0
      %1282 = vmatpush1.xpose.msra.mxu0 0.0
      %1283 = vmatprep.subr.mxu0 0.0
      %1284 = vmatpush1.xpose.msra.mxu0 0.0
      %1285 = vmatprep.subr.mxu0 0.0
      %1286 = vmatpush1.xpose.msra.mxu0 0.0
      %1287 = vmatprep.mubr.f32.mxu0 0.0
      %1288 = vmatmul.mubr.f32.gmra.mrb[0].mxu0 %v1218
      %v1289 = vpop.f32.mrb[0].mxu0
      %v1290 = vadd.f32 0.0, %v1289
      %v1291 = vpop.f32.mrb[0].mxu0
      %1292 = vmatprep.mubr.f32.mxu0 0.0
      %1293 = vmatmul.mubr.f32.gmra.mrb[0].mxu0 %v1221
      %v1294 = vpop.f32.mrb[0].mxu0
      %v1295 = vadd.f32 0.0, %v1294
      %v1296 = vpop.f32.mrb[0].mxu0
      %1297 = vdwg.mxu0
      %v1299 = vsel %vm847, %v1066, 0
      %v1302 = vsel %vm847, %v1134, 0
      %1304 = vmatprep.subr.mxu0 0.0
      %1305 = vmatpush1.xpose.msra.mxu0 %v1299
      %1306 = vmatprep.subr.mxu0 0.0
      %1307 = vmatpush1.xpose.msra.mxu0 %v1302
      %1308 = vmatprep.subr.mxu0 0.0
      %1309 = vmatpush1.xpose.msra.mxu0 0.0
      %1310 = vmatprep.subr.mxu0 0.0
      %1311 = vmatpush1.xpose.msra.mxu0 0.0
      %1312 = vmatprep.subr.mxu0 0.0
      %1313 = vmatpush1.xpose.msra.mxu0 0.0
      %1314 = vmatprep.subr.mxu0 0.0
      %1315 = vmatpush1.xpose.msra.mxu0 0.0
      %1316 = vmatprep.subr.mxu0 0.0
      %1317 = vmatpush1.xpose.msra.mxu0 0.0
      %1318 = vmatprep.subr.mxu0 0.0
      %1319 = vmatpush1.xpose.msra.mxu0 0.0
      %1320 = vmatprep.subr.mxu0 0.0
      %1321 = vmatpush1.xpose.msra.mxu0 0.0
      %1322 = vmatprep.subr.mxu0 0.0
      %1323 = vmatpush1.xpose.msra.mxu0 0.0
      %1324 = vmatprep.subr.mxu0 0.0
      %1325 = vmatpush1.xpose.msra.mxu0 0.0
      %1326 = vmatprep.subr.mxu0 0.0
      %1327 = vmatpush1.xpose.msra.mxu0 0.0
      %1328 = vmatprep.subr.mxu0 0.0
      %1329 = vmatpush1.xpose.msra.mxu0 0.0
      %1330 = vmatprep.subr.mxu0 0.0
      %1331 = vmatpush1.xpose.msra.mxu0 0.0
      %1332 = vmatprep.subr.mxu0 0.0
      %1333 = vmatpush1.xpose.msra.mxu0 0.0
      %1334 = vmatprep.subr.mxu0 0.0
      %1335 = vmatpush1.xpose.msra.mxu0 0.0
      %1336 = vmatprep.subr.mxu0 0.0
      %1337 = vmatpush1.xpose.msra.mxu0 0.0
      %1338 = vmatprep.subr.mxu0 0.0
      %1339 = vmatpush1.xpose.msra.mxu0 0.0
      %1340 = vmatprep.subr.mxu0 0.0
      %1341 = vmatpush1.xpose.msra.mxu0 0.0
      %1342 = vmatprep.subr.mxu0 0.0
      %1343 = vmatpush1.xpose.msra.mxu0 0.0
      %1344 = vmatprep.subr.mxu0 0.0
      %1345 = vmatpush1.xpose.msra.mxu0 0.0
      %1346 = vmatprep.subr.mxu0 0.0
      %1347 = vmatpush1.xpose.msra.mxu0 0.0
      %1348 = vmatprep.subr.mxu0 0.0
      %1349 = vmatpush1.xpose.msra.mxu0 0.0
      %1350 = vmatprep.subr.mxu0 0.0
      %1351 = vmatpush1.xpose.msra.mxu0 0.0
      %1352 = vmatprep.subr.mxu0 0.0
      %1353 = vmatpush1.xpose.msra.mxu0 0.0
      %1354 = vmatprep.subr.mxu0 0.0
      %1355 = vmatpush1.xpose.msra.mxu0 0.0
      %1356 = vmatprep.subr.mxu0 0.0
      %1357 = vmatpush1.xpose.msra.mxu0 0.0
      %1358 = vmatprep.subr.mxu0 0.0
      %1359 = vmatpush1.xpose.msra.mxu0 0.0
      %1360 = vmatprep.subr.mxu0 0.0
      %1361 = vmatpush1.xpose.msra.mxu0 0.0
      %1362 = vmatprep.subr.mxu0 0.0
      %1363 = vmatpush1.xpose.msra.mxu0 0.0
      %1364 = vmatprep.subr.mxu0 0.0
      %1365 = vmatpush1.xpose.msra.mxu0 0.0
      %1366 = vmatprep.subr.mxu0 0.0
      %1367 = vmatpush1.xpose.msra.mxu0 0.0
      %1368 = vmatprep.mubr.f32.mxu0 0.0
      %1369 = vmatmul.mubr.f32.gmra.mrb[0].mxu0 %v1299
      %v1370 = vpop.f32.mrb[0].mxu0
      %v1371 = vadd.f32 0.0, %v1370
      %v1372 = vpop.f32.mrb[0].mxu0
      %1373 = vmatprep.mubr.f32.mxu0 0.0
      %1374 = vmatmul.mubr.f32.gmra.mrb[0].mxu0 %v1302
      %v1375 = vpop.f32.mrb[0].mxu0
      %v1376 = vadd.f32 0.0, %v1375
      %v1377 = vpop.f32.mrb[0].mxu0
      %1378 = vdwg.mxu0
      %v1380 = vsel %vm847, %v1067, 0
      %v1383 = vsel %vm847, %v1135, 0
      %1385 = vmatprep.subr.mxu0 0.0
      %1386 = vmatpush1.xpose.msra.mxu0 %v1380
      %1387 = vmatprep.subr.mxu0 0.0
      %1388 = vmatpush1.xpose.msra.mxu0 %v1383
      %1389 = vmatprep.subr.mxu0 0.0
      %1390 = vmatpush1.xpose.msra.mxu0 0.0
      %1391 = vmatprep.subr.mxu0 0.0
      %1392 = vmatpush1.xpose.msra.mxu0 0.0
      %1393 = vmatprep.subr.mxu0 0.0
      %1394 = vmatpush1.xpose.msra.mxu0 0.0
      %1395 = vmatprep.subr.mxu0 0.0
      %1396 = vmatpush1.xpose.msra.mxu0 0.0
      %1397 = vmatprep.subr.mxu0 0.0
      %1398 = vmatpush1.xpose.msra.mxu0 0.0
      %1399 = vmatprep.subr.mxu0 0.0
      %1400 = vmatpush1.xpose.msra.mxu0 0.0
      %1401 = vmatprep.subr.mxu0 0.0
      %1402 = vmatpush1.xpose.msra.mxu0 0.0
      %1403 = vmatprep.subr.mxu0 0.0
      %1404 = vmatpush1.xpose.msra.mxu0 0.0
      %1405 = vmatprep.subr.mxu0 0.0
      %1406 = vmatpush1.xpose.msra.mxu0 0.0
      %1407 = vmatprep.subr.mxu0 0.0
      %1408 = vmatpush1.xpose.msra.mxu0 0.0
      %1409 = vmatprep.subr.mxu0 0.0
      %1410 = vmatpush1.xpose.msra.mxu0 0.0
      %1411 = vmatprep.subr.mxu0 0.0
      %1412 = vmatpush1.xpose.msra.mxu0 0.0
      %1413 = vmatprep.subr.mxu0 0.0
      %1414 = vmatpush1.xpose.msra.mxu0 0.0
      %1415 = vmatprep.subr.mxu0 0.0
      %1416 = vmatpush1.xpose.msra.mxu0 0.0
      %1417 = vmatprep.subr.mxu0 0.0
      %1418 = vmatpush1.xpose.msra.mxu0 0.0
      %1419 = vmatprep.subr.mxu0 0.0
      %1420 = vmatpush1.xpose.msra.mxu0 0.0
      %1421 = vmatprep.subr.mxu0 0.0
      %1422 = vmatpush1.xpose.msra.mxu0 0.0
      %1423 = vmatprep.subr.mxu0 0.0
      %1424 = vmatpush1.xpose.msra.mxu0 0.0
      %1425 = vmatprep.subr.mxu0 0.0
      %1426 = vmatpush1.xpose.msra.mxu0 0.0
      %1427 = vmatprep.subr.mxu0 0.0
      %1428 = vmatpush1.xpose.msra.mxu0 0.0
      %1429 = vmatprep.subr.mxu0 0.0
      %1430 = vmatpush1.xpose.msra.mxu0 0.0
      %1431 = vmatprep.subr.mxu0 0.0
      %1432 = vmatpush1.xpose.msra.mxu0 0.0
      %1433 = vmatprep.subr.mxu0 0.0
      %1434 = vmatpush1.xpose.msra.mxu0 0.0
      %1435 = vmatprep.subr.mxu0 0.0
      %1436 = vmatpush1.xpose.msra.mxu0 0.0
      %1437 = vmatprep.subr.mxu0 0.0
      %1438 = vmatpush1.xpose.msra.mxu0 0.0
      %1439 = vmatprep.subr.mxu0 0.0
      %1440 = vmatpush1.xpose.msra.mxu0 0.0
      %1441 = vmatprep.subr.mxu0 0.0
      %1442 = vmatpush1.xpose.msra.mxu0 0.0
      %1443 = vmatprep.subr.mxu0 0.0
      %1444 = vmatpush1.xpose.msra.mxu0 0.0
      %1445 = vmatprep.subr.mxu0 0.0
      %1446 = vmatpush1.xpose.msra.mxu0 0.0
      %1447 = vmatprep.subr.mxu0 0.0
      %1448 = vmatpush1.xpose.msra.mxu0 0.0
      %1449 = vmatprep.mubr.f32.mxu0 0.0
      %1450 = vmatmul.mubr.f32.gmra.mrb[0].mxu0 %v1380
      %v1451 = vpop.f32.mrb[0].mxu0
      %v1452 = vadd.f32 0.0, %v1451
      %v1453 = vpop.f32.mrb[0].mxu0
      %1454 = vmatprep.mubr.f32.mxu0 0.0
      %1455 = vmatmul.mubr.f32.gmra.mrb[0].mxu0 %v1383
      %v1456 = vpop.f32.mrb[0].mxu0
      %v1457 = vadd.f32 0.0, %v1456
      %v1458 = vpop.f32.mrb[0].mxu0
      %1459 = vdwg.mxu0
      %v1460 = vcombine.low %v1209, %v1371
      %v1461 = vcombine.high %v1209, %v1371
      %v1463 = vunpack.c.l.s4 1983009808
      %v1464 = vunpack.c.0.s8 %v1463
      %v1465 = vlaneseq
      %v1466 = vshrl.u32 %v1465, 7
      %v1467 = vsub.s32 %v1464, %v1466
      %v1468 = vrot.slane %v1460, %v1467
      %v1470 = vunpack.c.l.s4 1983009808
      %v1471 = vunpack.c.0.s8 %v1470
      %v1472 = vlaneseq
      %v1473 = vshrl.u32 %v1472, 7
      %v1474 = vsub.s32 %v1471, %v1473
      %v1475 = vrot.slane %v1461, %v1474
      %v1476 = vcombine.low %v1290, %v1452
      %v1477 = vcombine.high %v1290, %v1452
      %v1479 = vunpack.c.l.s4 1983009808
      %v1480 = vunpack.c.0.s8 %v1479
      %v1481 = vlaneseq
      %v1482 = vshrl.u32 %v1481, 7
      %v1483 = vsub.s32 %v1480, %v1482
      %v1484 = vrot.slane %v1476, %v1483
      %v1486 = vunpack.c.l.s4 1983009808
      %v1487 = vunpack.c.0.s8 %v1486
      %v1488 = vlaneseq
      %v1489 = vshrl.u32 %v1488, 7
      %v1490 = vsub.s32 %v1487, %v1489
      %v1491 = vrot.slane %v1477, %v1490
      %v1492 = vcombine.low %v1468, %v1484
      %v1493 = vcombine.high %v1468, %v1484
      %v1495 = vunpack.c.l.s4 1934713408
      %v1496 = vunpack.c.0.s8 %v1495
      %v1497 = vlaneseq
      %v1498 = vshrl.u32 %v1497, 7
      %v1499 = vsub.s32 %v1496, %v1498
      %v1500 = vrot.slane %v1492, %v1499
      %v1502 = vunpack.c.l.s4 1934713408
      %v1503 = vunpack.c.0.s8 %v1502
      %v1504 = vlaneseq
      %v1505 = vshrl.u32 %v1504, 7
      %v1506 = vsub.s32 %v1503, %v1505
      %v1507 = vrot.slane %v1493, %v1506
      %v1508 = vcombine.low %v1475, %v1491
      %v1509 = vcombine.high %v1475, %v1491
      %v1511 = vunpack.c.l.s4 1934713408
      %v1512 = vunpack.c.0.s8 %v1511
      %v1513 = vlaneseq
      %v1514 = vshrl.u32 %v1513, 7
      %v1515 = vsub.s32 %v1512, %v1514
      %v1516 = vrot.slane %v1508, %v1515
      %v1518 = vunpack.c.l.s4 1934713408
      %v1519 = vunpack.c.0.s8 %v1518
      %v1520 = vlaneseq
      %v1521 = vshrl.u32 %v1520, 7
      %v1522 = vsub.s32 %v1519, %v1521
      %v1523 = vrot.slane %v1509, %v1522
      %v1524 = vcombine.high %v1500, 0.0
      %v1525 = vcombine.high %v1507, 0.0
      %v1526 = vcombine.high %v1516, 0.0
      %v1527 = vcombine.high %v1523, 0.0
      %v1528 = vcombine.low %v1214, %v1376
      %v1529 = vcombine.high %v1214, %v1376
      %v1531 = vunpack.c.l.s4 1983009808
      %v1532 = vunpack.c.0.s8 %v1531
      %v1533 = vlaneseq
      %v1534 = vshrl.u32 %v1533, 7
      %v1535 = vsub.s32 %v1532, %v1534
      %v1536 = vrot.slane %v1528, %v1535
      %v1538 = vunpack.c.l.s4 1983009808
      %v1539 = vunpack.c.0.s8 %v1538
      %v1540 = vlaneseq
      %v1541 = vshrl.u32 %v1540, 7
      %v1542 = vsub.s32 %v1539, %v1541
      %v1543 = vrot.slane %v1529, %v1542
      %v1544 = vcombine.low %v1295, %v1457
      %v1545 = vcombine.high %v1295, %v1457
      %v1547 = vunpack.c.l.s4 1983009808
      %v1548 = vunpack.c.0.s8 %v1547
      %v1549 = vlaneseq
      %v1550 = vshrl.u32 %v1549, 7
      %v1551 = vsub.s32 %v1548, %v1550
      %v1552 = vrot.slane %v1544, %v1551
      %v1554 = vunpack.c.l.s4 1983009808
      %v1555 = vunpack.c.0.s8 %v1554
      %v1556 = vlaneseq
      %v1557 = vshrl.u32 %v1556, 7
      %v1558 = vsub.s32 %v1555, %v1557
      %v1559 = vrot.slane %v1545, %v1558
      %v1560 = vcombine.low %v1536, %v1552
      %v1561 = vcombine.high %v1536, %v1552
      %v1563 = vunpack.c.l.s4 1934713408
      %v1564 = vunpack.c.0.s8 %v1563
      %v1565 = vlaneseq
      %v1566 = vshrl.u32 %v1565, 7
      %v1567 = vsub.s32 %v1564, %v1566
      %v1568 = vrot.slane %v1560, %v1567
      %v1570 = vunpack.c.l.s4 1934713408
      %v1571 = vunpack.c.0.s8 %v1570
      %v1572 = vlaneseq
      %v1573 = vshrl.u32 %v1572, 7
      %v1574 = vsub.s32 %v1571, %v1573
      %v1575 = vrot.slane %v1561, %v1574
      %v1576 = vcombine.low %v1543, %v1559
      %v1577 = vcombine.high %v1543, %v1559
      %v1579 = vunpack.c.l.s4 1934713408
      %v1580 = vunpack.c.0.s8 %v1579
      %v1581 = vlaneseq
      %v1582 = vshrl.u32 %v1581, 7
      %v1583 = vsub.s32 %v1580, %v1582
      %v1584 = vrot.slane %v1576, %v1583
      %v1586 = vunpack.c.l.s4 1934713408
      %v1587 = vunpack.c.0.s8 %v1586
      %v1588 = vlaneseq
      %v1589 = vshrl.u32 %v1588, 7
      %v1590 = vsub.s32 %v1587, %v1589
      %v1591 = vrot.slane %v1577, %v1590
      %v1592 = vcombine.high %v1568, 0.0
      %v1593 = vcombine.high %v1575, 0.0
      %v1594 = vcombine.high %v1584, 0.0
      %v1595 = vcombine.high %v1591, 0.0
      %1597 = vrot.lane.b32.xlu0 %v1524, 16
      %v1598 = vpop.permute.xlu0 %1597
      %1601 = vrot.lane.b32.xlu0 %v1507, 32
      %v1602 = vpop.permute.xlu0 %1601
      %1605 = vrot.lane.b32.xlu0 %v1525, 48
      %v1606 = vpop.permute.xlu0 %1605
      %1609 = vrot.lane.b32.xlu0 %v1516, 64
      %v1610 = vpop.permute.xlu0 %1609
      %1613 = vrot.lane.b32.xlu0 %v1526, 80
      %v1614 = vpop.permute.xlu0 %1613
      %1617 = vrot.lane.b32.xlu0 %v1523, 96
      %v1618 = vpop.permute.xlu0 %1617
      %1621 = vrot.lane.b32.xlu0 %v1527, 112
      %v1622 = vpop.permute.xlu0 %1621
      %1625 = vrot.lane.b32.xlu0 %v1592, 16
      %v1626 = vpop.permute.xlu0 %1625
      %1629 = vrot.lane.b32.xlu0 %v1575, 32
      %v1630 = vpop.permute.xlu0 %1629
      %1633 = vrot.lane.b32.xlu0 %v1593, 48
      %v1634 = vpop.permute.xlu0 %1633
      %1637 = vrot.lane.b32.xlu0 %v1584, 64
      %v1638 = vpop.permute.xlu0 %1637
      %1641 = vrot.lane.b32.xlu0 %v1594, 80
      %v1642 = vpop.permute.xlu0 %1641
      %1645 = vrot.lane.b32.xlu0 %v1591, 96
      %v1646 = vpop.permute.xlu0 %1645
      %1649 = vrot.lane.b32.xlu0 %v1595, 112
      %v1650 = vpop.permute.xlu0 %1649
      %v1652 = vsel %vm847, %v1500, %v1598
      %v1653 = vsel %vm849, %v1652, %v1602
      %v1654 = vsel %vm851, %v1653, %v1606
      %v1655 = vsel %vm853, %v1654, %v1610
      %v1656 = vsel %vm855, %v1655, %v1614
      %v1657 = vsel %vm857, %v1656, %v1618
      %v1658 = vsel %vm859, %v1657, %v1622
      %v1659 = vsel %vm847, %v1568, %v1626
      %v1660 = vsel %vm849, %v1659, %v1630
      %v1661 = vsel %vm851, %v1660, %v1634
      %v1662 = vsel %vm853, %v1661, %v1638
      %v1663 = vsel %vm855, %v1662, %v1642
      %v1664 = vsel %vm857, %v1663, %v1646
      %v1665 = vsel %vm859, %v1664, %v1650
      %v1666 = vld [vmem:[%s3] sm:$0xff]
      %v1667 = vld [vmem:[%s3 + $0x8] sm:$0xff]
      %v1668 = vld [vmem:[%s3 + $0x10] sm:$0xff]
      %v1669 = vld [vmem:[%s3 + $0x18] sm:$0xff]
      %v1670 = vld [vmem:[%s3 + $0x20] sm:$0xff]
      %v1671 = vld [vmem:[%s3 + $0x28] sm:$0xff]
      %v1672 = vld [vmem:[%s3 + $0x30] sm:$0xff]
      %v1673 = vld [vmem:[%s3 + $0x38] sm:$0xff]
      %v1674 = vld [vmem:[%s3 + $0x40] sm:$0xff]
      %v1675 = vld [vmem:[%s3 + $0x48] sm:$0xff]
      %v1676 = vld [vmem:[%s3 + $0x50] sm:$0xff]
      %v1677 = vld [vmem:[%s3 + $0x58] sm:$0xff]
      %v1678 = vld [vmem:[%s3 + $0x60] sm:$0xff]
      %v1679 = vld [vmem:[%s3 + $0x68] sm:$0xff]
      %v1680 = vld [vmem:[%s3 + $0x70] sm:$0xff]
      %v1681 = vld [vmem:[%s3 + $0x78] sm:$0xff]
      %v1682 = vld [vmem:[%s3 + $0x80] sm:$0xff]
      %v1683 = vld [vmem:[%s3 + $0x88] sm:$0xff]
      %v1684 = vld [vmem:[%s3 + $0x90] sm:$0xff]
      %v1685 = vld [vmem:[%s3 + $0x98] sm:$0xff]
      %v1686 = vld [vmem:[%s3 + $0xa0] sm:$0xff]
      %v1687 = vld [vmem:[%s3 + $0xa8] sm:$0xff]
      %v1688 = vld [vmem:[%s3 + $0xb0] sm:$0xff]
      %v1689 = vld [vmem:[%s3 + $0xb8] sm:$0xff]
      %v1690 = vld [vmem:[%s3 + $0xc0] sm:$0xff]
      %v1691 = vld [vmem:[%s3 + $0xc8] sm:$0xff]
      %v1692 = vld [vmem:[%s3 + $0xd0] sm:$0xff]
      %v1693 = vld [vmem:[%s3 + $0xd8] sm:$0xff]
      %v1694 = vld [vmem:[%s3 + $0xe0] sm:$0xff]
      %v1695 = vld [vmem:[%s3 + $0xe8] sm:$0xff]
      %v1696 = vld [vmem:[%s3 + $0xf0] sm:$0xff]
      %v1697 = vld [vmem:[%s3 + $0xf8] sm:$0xff]
      %v1698 = vld [vmem:[%s3 + $0x100] sm:$0xff]
      %v1699 = vld [vmem:[%s3 + $0x108] sm:$0xff]
      %v1700 = vld [vmem:[%s3 + $0x110] sm:$0xff]
      %v1701 = vld [vmem:[%s3 + $0x118] sm:$0xff]
      %v1702 = vld [vmem:[%s3 + $0x120] sm:$0xff]
      %v1703 = vld [vmem:[%s3 + $0x128] sm:$0xff]
      %v1704 = vld [vmem:[%s3 + $0x130] sm:$0xff]
      %v1705 = vld [vmem:[%s3 + $0x138] sm:$0xff]
      %v1706 = vld [vmem:[%s3 + $0x140] sm:$0xff]
      %v1707 = vld [vmem:[%s3 + $0x148] sm:$0xff]
      %v1708 = vld [vmem:[%s3 + $0x150] sm:$0xff]
      %v1709 = vld [vmem:[%s3 + $0x158] sm:$0xff]
      %v1710 = vld [vmem:[%s3 + $0x160] sm:$0xff]
      %v1711 = vld [vmem:[%s3 + $0x168] sm:$0xff]
      %v1712 = vld [vmem:[%s3 + $0x170] sm:$0xff]
      %v1713 = vld [vmem:[%s3 + $0x178] sm:$0xff]
      %v1714 = vld [vmem:[%s3 + $0x180] sm:$0xff]
      %v1715 = vld [vmem:[%s3 + $0x188] sm:$0xff]
      %v1716 = vld [vmem:[%s3 + $0x190] sm:$0xff]
      %v1717 = vld [vmem:[%s3 + $0x198] sm:$0xff]
      %v1718 = vld [vmem:[%s3 + $0x1a0] sm:$0xff]
      %v1719 = vld [vmem:[%s3 + $0x1a8] sm:$0xff]
      %v1720 = vld [vmem:[%s3 + $0x1b0] sm:$0xff]
      %v1721 = vld [vmem:[%s3 + $0x1b8] sm:$0xff]
      %v1722 = vld [vmem:[%s3 + $0x1c0] sm:$0xff]
      %v1723 = vld [vmem:[%s3 + $0x1c8] sm:$0xff]
      %v1724 = vld [vmem:[%s3 + $0x1d0] sm:$0xff]
      %v1725 = vld [vmem:[%s3 + $0x1d8] sm:$0xff]
      %v1726 = vld [vmem:[%s3 + $0x1e0] sm:$0xff]
      %v1727 = vld [vmem:[%s3 + $0x1e8] sm:$0xff]
      %v1728 = vld [vmem:[%s3 + $0x1f0] sm:$0xff]
      %v1729 = vld [vmem:[%s3 + $0x1f8] sm:$0xff]
      %v1730 = vld [vmem:[%s4] sm:$0x3]
      %v1732 = vlaneseq
      %v1733 = vshrl.u32 %v1732, 7
      %v1734 = vsub.s32 0, %v1733
      %v1735 = vrot.slane %v1730, %v1734
      %v1736 = vlaneseq
      %v1737 = vshrl.u32 %v1736, 7
      %v1738 = vsub.s32 1, %v1737
      %v1739 = vrot.slane %v1730, %v1738
      %1742 = vmatprep.subr.mxu0 %v1667
      %1743 = vmatpush1.xpose.msra.mxu0 %v1666
      %1744 = vmatprep.subr.mxu0 %v1669
      %1745 = vmatpush1.xpose.msra.mxu0 %v1668
      %1746 = vmatprep.subr.mxu0 %v1671
      %1747 = vmatpush1.xpose.msra.mxu0 %v1670
      %1748 = vmatprep.subr.mxu0 %v1673
      %1749 = vmatpush1.xpose.msra.mxu0 %v1672
      %1750 = vmatprep.subr.mxu0 %v1675
      %1751 = vmatpush1.xpose.msra.mxu0 %v1674
      %1752 = vmatprep.subr.mxu0 %v1677
      %1753 = vmatpush1.xpose.msra.mxu0 %v1676
      %1754 = vmatprep.subr.mxu0 %v1679
      %1755 = vmatpush1.xpose.msra.mxu0 %v1678
      %1756 = vmatprep.subr.mxu0 %v1681
      %1757 = vmatpush1.xpose.msra.mxu0 %v1680
      %1758 = vmatprep.subr.mxu0 %v1683
      %1759 = vmatpush1.xpose.msra.mxu0 %v1682
      %1760 = vmatprep.subr.mxu0 %v1685
      %1761 = vmatpush1.xpose.msra.mxu0 %v1684
      %1762 = vmatprep.subr.mxu0 %v1687
      %1763 = vmatpush1.xpose.msra.mxu0 %v1686
      %1764 = vmatprep.subr.mxu0 %v1689
      %1765 = vmatpush1.xpose.msra.mxu0 %v1688
      %1766 = vmatprep.subr.mxu0 %v1691
      %1767 = vmatpush1.xpose.msra.mxu0 %v1690
      %1768 = vmatprep.subr.mxu0 %v1693
      %1769 = vmatpush1.xpose.msra.mxu0 %v1692
      %1770 = vmatprep.subr.mxu0 %v1695
      %1771 = vmatpush1.xpose.msra.mxu0 %v1694
      %1772 = vmatprep.subr.mxu0 %v1697
      %1773 = vmatpush1.xpose.msra.mxu0 %v1696
      %1774 = vmatprep.subr.mxu0 %v1699
      %1775 = vmatpush1.xpose.msra.mxu0 %v1698
      %1776 = vmatprep.subr.mxu0 %v1701
      %1777 = vmatpush1.xpose.msra.mxu0 %v1700
      %1778 = vmatprep.subr.mxu0 %v1703
      %1779 = vmatpush1.xpose.msra.mxu0 %v1702
      %1780 = vmatprep.subr.mxu0 %v1705
      %1781 = vmatpush1.xpose.msra.mxu0 %v1704
      %1782 = vmatprep.subr.mxu0 %v1707
      %1783 = vmatpush1.xpose.msra.mxu0 %v1706
      %1784 = vmatprep.subr.mxu0 %v1709
      %1785 = vmatpush1.xpose.msra.mxu0 %v1708
      %1786 = vmatprep.subr.mxu0 %v1711
      %1787 = vmatpush1.xpose.msra.mxu0 %v1710
      %1788 = vmatprep.subr.mxu0 %v1713
      %1789 = vmatpush1.xpose.msra.mxu0 %v1712
      %1790 = vmatprep.subr.mxu0 %v1715
      %1791 = vmatpush1.xpose.msra.mxu0 %v1714
      %1792 = vmatprep.subr.mxu0 %v1717
      %1793 = vmatpush1.xpose.msra.mxu0 %v1716
      %1794 = vmatprep.subr.mxu0 %v1719
      %1795 = vmatpush1.xpose.msra.mxu0 %v1718
      %1796 = vmatprep.subr.mxu0 %v1721
      %1797 = vmatpush1.xpose.msra.mxu0 %v1720
      %1798 = vmatprep.subr.mxu0 %v1723
      %1799 = vmatpush1.xpose.msra.mxu0 %v1722
      %1800 = vmatprep.subr.mxu0 %v1725
      %1801 = vmatpush1.xpose.msra.mxu0 %v1724
      %1802 = vmatprep.subr.mxu0 %v1727
      %1803 = vmatpush1.xpose.msra.mxu0 %v1726
      %1804 = vmatprep.subr.mxu0 %v1729
      %1805 = vmatpush1.xpose.msra.mxu0 %v1728
      %1806 = vmatprep.mubr.f32.mxu0 %v1665
      %1807 = vmatmul.mubr.f32.gmra.mrb[0].mxu0 %v1658
      %v1808 = vpop.f32.mrb[0].mxu0
      %v1809 = vadd.f32 %v1735, %v1808
      %v1810 = vpop.f32.mrb[0].mxu0
      %v1811 = vadd.f32 %v1739, %v1810
      %1812 = vdwg.mxu0
      %v1813 = vadd.f32 %v1809, %v1658
      %v1814 = vadd.f32 %v1811, %v1665
      %v1815 = vmax.f32 %v1813, 0.0
      %v1816 = vmax.f32 %v1814, 0.0
      %v1817 = vld [vmem:[%s5] sm:$0xf]
      %v1819 = vsel %vm874, %v1817, 0
      %v1822 = vsel %vm878, %v1815, 0
      %v1825 = vsel %vm878, %v1816, 0
      %1827 = vmatprep.subr.mxu0 %v1825
      %1828 = vmatpush1.msra.mxu0 %v1822
      %1829 = vmatprep.subr.mxu0 0.0
      %1830 = vmatpush1.msra.mxu0 0.0
      %1831 = vmatprep.subr.mxu0 0.0
      %1832 = vmatpush1.msra.mxu0 0.0
      %1833 = vmatprep.subr.mxu0 0.0
      %1834 = vmatpush1.msra.mxu0 0.0
      %1835 = vmatprep.subr.mxu0 0.0
      %1836 = vmatpush1.msra.mxu0 0.0
      %1837 = vmatprep.subr.mxu0 0.0
      %1838 = vmatpush1.msra.mxu0 0.0
      %1839 = vmatprep.subr.mxu0 0.0
      %1840 = vmatpush1.msra.mxu0 0.0
      %1841 = vmatprep.subr.mxu0 0.0
      %1842 = vmatpush1.msra.mxu0 0.0
      %1843 = vmatprep.subr.mxu0 0.0
      %1844 = vmatpush1.msra.mxu0 0.0
      %1845 = vmatprep.subr.mxu0 0.0
      %1846 = vmatpush1.msra.mxu0 0.0
      %1847 = vmatprep.subr.mxu0 0.0
      %1848 = vmatpush1.msra.mxu0 0.0
      %1849 = vmatprep.subr.mxu0 0.0
      %1850 = vmatpush1.msra.mxu0 0.0
      %1851 = vmatprep.subr.mxu0 0.0
      %1852 = vmatpush1.msra.mxu0 0.0
      %1853 = vmatprep.subr.mxu0 0.0
      %1854 = vmatpush1.msra.mxu0 0.0
      %1855 = vmatprep.subr.mxu0 0.0
      %1856 = vmatpush1.msra.mxu0 0.0
      %1857 = vmatprep.subr.mxu0 0.0
      %1858 = vmatpush1.msra.mxu0 0.0
      %1859 = vmatprep.subr.mxu0 0.0
      %1860 = vmatpush1.msra.mxu0 0.0
      %1861 = vmatprep.subr.mxu0 0.0
      %1862 = vmatpush1.msra.mxu0 0.0
      %1863 = vmatprep.subr.mxu0 0.0
      %1864 = vmatpush1.msra.mxu0 0.0
      %1865 = vmatprep.subr.mxu0 0.0
      %1866 = vmatpush1.msra.mxu0 0.0
      %1867 = vmatprep.subr.mxu0 0.0
      %1868 = vmatpush1.msra.mxu0 0.0
      %1869 = vmatprep.subr.mxu0 0.0
      %1870 = vmatpush1.msra.mxu0 0.0
      %1871 = vmatprep.subr.mxu0 0.0
      %1872 = vmatpush1.msra.mxu0 0.0
      %1873 = vmatprep.subr.mxu0 0.0
      %1874 = vmatpush1.msra.mxu0 0.0
      %1875 = vmatprep.subr.mxu0 0.0
      %1876 = vmatpush1.msra.mxu0 0.0
      %1877 = vmatprep.subr.mxu0 0.0
      %1878 = vmatpush1.msra.mxu0 0.0
      %1879 = vmatprep.subr.mxu0 0.0
      %1880 = vmatpush1.msra.mxu0 0.0
      %1881 = vmatprep.subr.mxu0 0.0
      %1882 = vmatpush1.msra.mxu0 0.0
      %1883 = vmatprep.subr.mxu0 0.0
      %1884 = vmatpush1.msra.mxu0 0.0
      %1885 = vmatprep.subr.mxu0 0.0
      %1886 = vmatpush1.msra.mxu0 0.0
      %1887 = vmatprep.subr.mxu0 0.0
      %1888 = vmatpush1.msra.mxu0 0.0
      %1889 = vmatprep.subr.mxu0 0.0
      %1890 = vmatpush1.msra.mxu0 0.0
      %1891 = vmatprep.mubr.f32.mxu0 0.0
      %1892 = vmatmul.mubr.f32.gmra.mrb[0].mxu0 %v1819
      %v1893 = vpop.f32.mrb[0].mxu0
      %v1894 = vadd.f32 0.0, %v1893
      %v1895 = vpop.f32.mrb[0].mxu0
      %v1896 = vadd.f32 0.0, %v1895
      %1897 = vdwg.mxu0
      %v1898 = vsel %vm878, %v1894, -inf
      %v1899 = vrot.slane %v1898, 4
      %v1900 = vmax.f32 %v1898, %v1899
      %v1901 = vrot.slane %v1900, 2
      %v1902 = vmax.f32 %v1900, %v1901
      %v1903 = vrot.slane %v1902, 1
      %v1904 = vmax.f32 %v1902, %v1903
      %v1905 = vsel %vm878, %v1896, -inf
      %v1906 = vrot.slane %v1905, 4
      %v1907 = vmax.f32 %v1905, %v1906
      %v1908 = vrot.slane %v1907, 2
      %v1909 = vmax.f32 %v1907, %v1908
      %v1910 = vrot.slane %v1909, 1
      %v1911 = vmax.f32 %v1909, %v1910
      %v1912 = vsub.f32 %v1894, %v1904
      %v1913 = vsub.f32 %v1896, %v1911
      %v1914 = vmul.f32 %v1912, 1.442695
      %v1915 = vpow.pop %v1914
      %v1916 = vmul.f32 %v1913, 1.442695
      %v1917 = vpow.pop %v1916
      %v1918 = vsel %vm878, %v1915, 0.0
      %v1919 = vrot.slane %v1918, 4
      %v1920 = vadd.f32 %v1918, %v1919
      %v1921 = vrot.slane %v1920, 2
      %v1922 = vadd.f32 %v1920, %v1921
      %v1923 = vrot.slane %v1922, 1
      %v1924 = vadd.f32 %v1922, %v1923
      %v1925 = vsel %vm878, %v1917, 0.0
      %v1926 = vrot.slane %v1925, 4
      %v1927 = vadd.f32 %v1925, %v1926
      %v1928 = vrot.slane %v1927, 2
      %v1929 = vadd.f32 %v1927, %v1928
      %v1930 = vrot.slane %v1929, 1
      %v1931 = vadd.f32 %v1929, %v1930
      %v1932 = vrcp.pop %v1924
      %v1933 = vrcp.pop %v1931
      %v1934 = vmul.f32 %v1915, %v1932
      %v1935 = vmul.f32 %v1917, %v1933
      %v1938 = vcombine.low %v1934, %v1935
      %1940 = vst [vmem:[%s636] sm:$0xff] %v1938
      %v1941 = vld [vmem:[%s6] sm:$0xf]
      %v1942 = vld [vmem:[%s6 + $0x4] sm:$0xf]
      %v1943 = vld [vmem:[%s6 + $0x8] sm:$0xf]
      %v1944 = vld [vmem:[%s6 + $0xc] sm:$0xf]
      %1945 = vrot.lane.b32.xlu0 %v719, 15
      %v1946 = vpop.permute.xlu0 %1945
      %1948 = vrot.lane.b32.xlu0 %v702, 30
      %v1949 = vpop.permute.xlu0 %1948
      %1951 = vrot.lane.b32.xlu0 %v720, 45
      %v1952 = vpop.permute.xlu0 %1951
      %1954 = vrot.lane.b32.xlu0 %v711, 60
      %v1955 = vpop.permute.xlu0 %1954
      %1957 = vrot.lane.b32.xlu0 %v721, 75
      %v1958 = vpop.permute.xlu0 %1957
      %1960 = vrot.lane.b32.xlu0 %v718, 90
      %v1961 = vpop.permute.xlu0 %1960
      %1963 = vrot.lane.b32.xlu0 %v722, 105
      %v1964 = vpop.permute.xlu0 %1963
      %1967 = vrot.lane.b32.xlu0 %v763, 120
      %v1968 = vpop.permute.xlu0 %1967
      %1970 = vrot.lane.b32.xlu0 %v787, 7
      %v1971 = vpop.permute.xlu0 %1970
      %1973 = vrot.lane.b32.xlu0 %v770, 22
      %v1974 = vpop.permute.xlu0 %1973
      %1976 = vrot.lane.b32.xlu0 %v788, 37
      %v1977 = vpop.permute.xlu0 %1976
      %1979 = vrot.lane.b32.xlu0 %v779, 52
      %v1980 = vpop.permute.xlu0 %1979
      %1982 = vrot.lane.b32.xlu0 %v789, 67
      %v1983 = vpop.permute.xlu0 %1982
      %1985 = vrot.lane.b32.xlu0 %v786, 82
      %v1986 = vpop.permute.xlu0 %1985
      %vm1988 = vcmask 121856
      %v1989 = vsel %vm1988, %v695, %v1946
      %vm1990 = vcmask 244736
      %v1991 = vsel %vm1990, %v1989, %v1949
      %vm1992 = vcmask 367616
      %v1993 = vsel %vm1992, %v1991, %v1952
      %vm1994 = vcmask 490496
      %v1995 = vsel %vm1994, %v1993, %v1955
      %vm1996 = vcmask 613376
      %v1997 = vsel %vm1996, %v1995, %v1958
      %vm1998 = vcmask 736256
      %v1999 = vsel %vm1998, %v1997, %v1961
      %vm2000 = vcmask 859136
      %v2001 = vsel %vm2000, %v1999, %v1964
      %vm2002 = vcmask 982016
      %v2003 = vsel %vm2002, %v2001, %v1968
      %vm2004 = vcmask 56320
      %v2005 = vsel %vm2004, %v1968, %v1971
      %vm2006 = vcmask 179200
      %v2007 = vsel %vm2006, %v2005, %v1974
      %vm2008 = vcmask 302080
      %v2009 = vsel %vm2008, %v2007, %v1977
      %vm2010 = vcmask 424960
      %v2011 = vsel %vm2010, %v2009, %v1980
      %vm2012 = vcmask 547840
      %v2013 = vsel %vm2012, %v2011, %v1983
      %vm2014 = vcmask 670720
      %v2015 = vsel %vm2014, %v2013, %v1986
      %2024 = vrot.lane.b32.xlu0 %v646, 127
      %v2025 = vpop.permute.xlu0 %2024
      %2026 = vrot.lane.b32.xlu0 %v647, 127
      %v2027 = vpop.permute.xlu0 %2026
      %2028 = vrot.lane.b32.xlu0 %v648, 127
      %v2029 = vpop.permute.xlu0 %2028
      %2030 = vrot.lane.b32.xlu0 %v649, 127
      %v2031 = vpop.permute.xlu0 %2030
      %2032 = vrot.lane.b32.xlu0 %v650, 127
      %v2033 = vpop.permute.xlu0 %2032
      %2034 = vrot.lane.b32.xlu0 %v651, 127
      %v2035 = vpop.permute.xlu0 %2034
      %2036 = vrot.lane.b32.xlu0 %v652, 127
      %v2037 = vpop.permute.xlu0 %2036
      %2038 = vrot.lane.b32.xlu0 %v653, 127
      %v2039 = vpop.permute.xlu0 %2038
      %v2048 = vcombine.low %v2025, %v2033
      %v2049 = vcombine.high %v2025, %v2033
      %v2051 = vunpack.c.l.s4 1983009808
      %v2052 = vunpack.c.0.s8 %v2051
      %v2053 = vlaneseq
      %v2054 = vshrl.u32 %v2053, 7
      %v2055 = vsub.s32 %v2052, %v2054
      %v2056 = vrot.slane %v2048, %v2055
      %v2058 = vunpack.c.l.s4 1983009808
      %v2059 = vunpack.c.0.s8 %v2058
      %v2060 = vlaneseq
      %v2061 = vshrl.u32 %v2060, 7
      %v2062 = vsub.s32 %v2059, %v2061
      %v2063 = vrot.slane %v2049, %v2062
      %v2064 = vcombine.low %v2029, %v2037
      %v2065 = vcombine.high %v2029, %v2037
      %v2067 = vunpack.c.l.s4 1983009808
      %v2068 = vunpack.c.0.s8 %v2067
      %v2069 = vlaneseq
      %v2070 = vshrl.u32 %v2069, 7
      %v2071 = vsub.s32 %v2068, %v2070
      %v2072 = vrot.slane %v2064, %v2071
      %v2074 = vunpack.c.l.s4 1983009808
      %v2075 = vunpack.c.0.s8 %v2074
      %v2076 = vlaneseq
      %v2077 = vshrl.u32 %v2076, 7
      %v2078 = vsub.s32 %v2075, %v2077
      %v2079 = vrot.slane %v2065, %v2078
      %v2080 = vcombine.low %v2056, %v2072
      %v2081 = vcombine.high %v2056, %v2072
      %v2083 = vunpack.c.l.s4 1934713408
      %v2084 = vunpack.c.0.s8 %v2083
      %v2085 = vlaneseq
      %v2086 = vshrl.u32 %v2085, 7
      %v2087 = vsub.s32 %v2084, %v2086
      %v2088 = vrot.slane %v2080, %v2087
      %v2090 = vunpack.c.l.s4 1934713408
      %v2091 = vunpack.c.0.s8 %v2090
      %v2092 = vlaneseq
      %v2093 = vshrl.u32 %v2092, 7
      %v2094 = vsub.s32 %v2091, %v2093
      %v2095 = vrot.slane %v2081, %v2094
      %v2096 = vcombine.low %v2063, %v2079
      %v2097 = vcombine.high %v2063, %v2079
      %v2099 = vunpack.c.l.s4 1934713408
      %v2100 = vunpack.c.0.s8 %v2099
      %v2101 = vlaneseq
      %v2102 = vshrl.u32 %v2101, 7
      %v2103 = vsub.s32 %v2100, %v2102
      %v2104 = vrot.slane %v2096, %v2103
      %v2106 = vunpack.c.l.s4 1934713408
      %v2107 = vunpack.c.0.s8 %v2106
      %v2108 = vlaneseq
      %v2109 = vshrl.u32 %v2108, 7
      %v2110 = vsub.s32 %v2107, %v2109
      %v2111 = vrot.slane %v2097, %v2110
      %v2112 = vcombine.high %v2088, 0.0
      %v2113 = vcombine.high %v2095, 0.0
      %v2114 = vcombine.high %v2104, 0.0
      %v2115 = vcombine.high %v2111, 0.0
      %v2116 = vcombine.low %v2027, %v2035
      %v2117 = vcombine.high %v2027, %v2035
      %v2119 = vunpack.c.l.s4 1983009808
      %v2120 = vunpack.c.0.s8 %v2119
      %v2121 = vlaneseq
      %v2122 = vshrl.u32 %v2121, 7
      %v2123 = vsub.s32 %v2120, %v2122
      %v2124 = vrot.slane %v2116, %v2123
      %v2126 = vunpack.c.l.s4 1983009808
      %v2127 = vunpack.c.0.s8 %v2126
      %v2128 = vlaneseq
      %v2129 = vshrl.u32 %v2128, 7
      %v2130 = vsub.s32 %v2127, %v2129
      %v2131 = vrot.slane %v2117, %v2130
      %v2132 = vcombine.low %v2031, %v2039
      %v2133 = vcombine.high %v2031, %v2039
      %v2135 = vunpack.c.l.s4 1983009808
      %v2136 = vunpack.c.0.s8 %v2135
      %v2137 = vlaneseq
      %v2138 = vshrl.u32 %v2137, 7
      %v2139 = vsub.s32 %v2136, %v2138
      %v2140 = vrot.slane %v2132, %v2139
      %v2142 = vunpack.c.l.s4 1983009808
      %v2143 = vunpack.c.0.s8 %v2142
      %v2144 = vlaneseq
      %v2145 = vshrl.u32 %v2144, 7
      %v2146 = vsub.s32 %v2143, %v2145
      %v2147 = vrot.slane %v2133, %v2146
      %v2148 = vcombine.low %v2124, %v2140
      %v2149 = vcombine.high %v2124, %v2140
      %v2151 = vunpack.c.l.s4 1934713408
      %v2152 = vunpack.c.0.s8 %v2151
      %v2153 = vlaneseq
      %v2154 = vshrl.u32 %v2153, 7
      %v2155 = vsub.s32 %v2152, %v2154
      %v2156 = vrot.slane %v2148, %v2155
      %v2158 = vunpack.c.l.s4 1934713408
      %v2159 = vunpack.c.0.s8 %v2158
      %v2160 = vlaneseq
      %v2161 = vshrl.u32 %v2160, 7
      %v2162 = vsub.s32 %v2159, %v2161
      %v2163 = vrot.slane %v2149, %v2162
      %v2164 = vcombine.low %v2131, %v2147
      %v2165 = vcombine.high %v2131, %v2147
      %v2167 = vunpack.c.l.s4 1934713408
      %v2168 = vunpack.c.0.s8 %v2167
      %v2169 = vlaneseq
      %v2170 = vshrl.u32 %v2169, 7
      %v2171 = vsub.s32 %v2168, %v2170
      %v2172 = vrot.slane %v2164, %v2171
      %v2173 = vcombine.high %v2156, 0.0
      %v2174 = vcombine.high %v2163, 0.0
      %v2175 = vcombine.high %v2172, 0.0
      %v2177 = vunpack.c.l.s4 1934713408
      %v2178 = vunpack.c.0.s8 %v2177
      %v2179 = vlaneseq
      %v2180 = vshrl.u32 %v2179, 7
      %v2181 = vsub.s32 %v2178, %v2180
      %v2182 = vrot.slane %v2165, %v2181
      %2184 = vrot.lane.b32.xlu0 %v2112, 15
      %v2185 = vpop.permute.xlu0 %2184
      %2188 = vrot.lane.b32.xlu0 %v2095, 30
      %v2189 = vpop.permute.xlu0 %2188
      %2192 = vrot.lane.b32.xlu0 %v2113, 45
      %v2193 = vpop.permute.xlu0 %2192
      %2196 = vrot.lane.b32.xlu0 %v2104, 60
      %v2197 = vpop.permute.xlu0 %2196
      %2200 = vrot.lane.b32.xlu0 %v2114, 75
      %v2201 = vpop.permute.xlu0 %2200
      %2204 = vrot.lane.b32.xlu0 %v2111, 90
      %v2205 = vpop.permute.xlu0 %2204
      %2208 = vrot.lane.b32.xlu0 %v2115, 105
      %v2209 = vpop.permute.xlu0 %2208
      %2212 = vrot.lane.b32.xlu0 %v2156, 120
      %v2213 = vpop.permute.xlu0 %2212
      %2216 = vrot.lane.b32.xlu0 %v2173, 7
      %v2217 = vpop.permute.xlu0 %2216
      %2220 = vrot.lane.b32.xlu0 %v2163, 22
      %v2221 = vpop.permute.xlu0 %2220
      %2224 = vrot.lane.b32.xlu0 %v2174, 37
      %v2225 = vpop.permute.xlu0 %2224
      %2228 = vrot.lane.b32.xlu0 %v2172, 52
      %v2229 = vpop.permute.xlu0 %2228
      %2232 = vrot.lane.b32.xlu0 %v2175, 67
      %v2233 = vpop.permute.xlu0 %2232
      %2236 = vrot.lane.b32.xlu0 %v2182, 82
      %v2237 = vpop.permute.xlu0 %2236
      %v2239 = vsel %vm1988, %v2088, %v2185
      %v2240 = vsel %vm1990, %v2239, %v2189
      %v2241 = vsel %vm1992, %v2240, %v2193
      %v2242 = vsel %vm1994, %v2241, %v2197
      %v2243 = vsel %vm1996, %v2242, %v2201
      %v2244 = vsel %vm1998, %v2243, %v2205
      %v2245 = vsel %vm2000, %v2244, %v2209
      %v2246 = vsel %vm2002, %v2245, %v2213
      %v2247 = vsel %vm2004, %v2213, %v2217
      %v2248 = vsel %vm2006, %v2247, %v2221
      %v2249 = vsel %vm2008, %v2248, %v2225
      %v2250 = vsel %vm2010, %v2249, %v2229
      %v2251 = vsel %vm2012, %v2250, %v2233
      %v2252 = vsel %vm2014, %v2251, %v2237
      %v2254 = vsel %vm874, %v1942, 0
      %v2257 = vsel %vm878, %v2246, 0
      %v2260 = vsel %vm878, %v2252, 0
      %2262 = vmatprep.subr.mxu0 %v2260
      %2263 = vmatpush1.msra.mxu0 %v2257
      %2264 = vmatprep.subr.mxu0 0.0
      %2265 = vmatpush1.msra.mxu0 0.0
      %2266 = vmatprep.subr.mxu0 0.0
      %2267 = vmatpush1.msra.mxu0 0.0
      %2268 = vmatprep.subr.mxu0 0.0
      %2269 = vmatpush1.msra.mxu0 0.0
      %2270 = vmatprep.subr.mxu0 0.0
      %2271 = vmatpush1.msra.mxu0 0.0
      %2272 = vmatprep.subr.mxu0 0.0
      %2273 = vmatpush1.msra.mxu0 0.0
      %2274 = vmatprep.subr.mxu0 0.0
      %2275 = vmatpush1.msra.mxu0 0.0
      %2276 = vmatprep.subr.mxu0 0.0
      %2277 = vmatpush1.msra.mxu0 0.0
      %2278 = vmatprep.subr.mxu0 0.0
      %2279 = vmatpush1.msra.mxu0 0.0
      %2280 = vmatprep.subr.mxu0 0.0
      %2281 = vmatpush1.msra.mxu0 0.0
      %2282 = vmatprep.subr.mxu0 0.0
      %2283 = vmatpush1.msra.mxu0 0.0
      %2284 = vmatprep.subr.mxu0 0.0
      %2285 = vmatpush1.msra.mxu0 0.0
      %2286 = vmatprep.subr.mxu0 0.0
      %2287 = vmatpush1.msra.mxu0 0.0
      %2288 = vmatprep.subr.mxu0 0.0
      %2289 = vmatpush1.msra.mxu0 0.0
      %2290 = vmatprep.subr.mxu0 0.0
      %2291 = vmatpush1.msra.mxu0 0.0
      %2292 = vmatprep.subr.mxu0 0.0
      %2293 = vmatpush1.msra.mxu0 0.0
      %2294 = vmatprep.subr.mxu0 0.0
      %2295 = vmatpush1.msra.mxu0 0.0
      %2296 = vmatprep.subr.mxu0 0.0
      %2297 = vmatpush1.msra.mxu0 0.0
      %2298 = vmatprep.subr.mxu0 0.0
      %2299 = vmatpush1.msra.mxu0 0.0
      %2300 = vmatprep.subr.mxu0 0.0
      %2301 = vmatpush1.msra.mxu0 0.0
      %2302 = vmatprep.subr.mxu0 0.0
      %2303 = vmatpush1.msra.mxu0 0.0
      %2304 = vmatprep.subr.mxu0 0.0
      %2305 = vmatpush1.msra.mxu0 0.0
      %2306 = vmatprep.subr.mxu0 0.0
      %2307 = vmatpush1.msra.mxu0 0.0
      %2308 = vmatprep.subr.mxu0 0.0
      %2309 = vmatpush1.msra.mxu0 0.0
      %2310 = vmatprep.subr.mxu0 0.0
      %2311 = vmatpush1.msra.mxu0 0.0
      %2312 = vmatprep.subr.mxu0 0.0
      %2313 = vmatpush1.msra.mxu0 0.0
      %2314 = vmatprep.subr.mxu0 0.0
      %2315 = vmatpush1.msra.mxu0 0.0
      %2316 = vmatprep.subr.mxu0 0.0
      %2317 = vmatpush1.msra.mxu0 0.0
      %2318 = vmatprep.subr.mxu0 0.0
      %2319 = vmatpush1.msra.mxu0 0.0
      %2320 = vmatprep.subr.mxu0 0.0
      %2321 = vmatpush1.msra.mxu0 0.0
      %2322 = vmatprep.subr.mxu0 0.0
      %2323 = vmatpush1.msra.mxu0 0.0
      %2324 = vmatprep.subr.mxu0 0.0
      %2325 = vmatpush1.msra.mxu0 0.0
      %2326 = vmatprep.mubr.f32.mxu0 0.0
      %2327 = vmatmul.mubr.f32.gmra.mrb[0].mxu0 %v2254
      %v2328 = vpop.f32.mrb[0].mxu0
      %v2329 = vadd.f32 0.0, %v2328
      %v2330 = vpop.f32.mrb[0].mxu0
      %v2331 = vadd.f32 0.0, %v2330
      %2332 = vdwg.mxu0
      %v2334 = vsel %vm874, %v1941, 0
      %v2337 = vsel %vm878, %v2003, 0
      %v2340 = vsel %vm878, %v2015, 0
      %2342 = vmatprep.subr.mxu0 %v2340
      %2343 = vmatpush1.msra.mxu0 %v2337
      %2344 = vmatprep.subr.mxu0 0.0
      %2345 = vmatpush1.msra.mxu0 0.0
      %2346 = vmatprep.subr.mxu0 0.0
      %2347 = vmatpush1.msra.mxu0 0.0
      %2348 = vmatprep.subr.mxu0 0.0
      %2349 = vmatpush1.msra.mxu0 0.0
      %2350 = vmatprep.subr.mxu0 0.0
      %2351 = vmatpush1.msra.mxu0 0.0
      %2352 = vmatprep.subr.mxu0 0.0
      %2353 = vmatpush1.msra.mxu0 0.0
      %2354 = vmatprep.subr.mxu0 0.0
      %2355 = vmatpush1.msra.mxu0 0.0
      %2356 = vmatprep.subr.mxu0 0.0
      %2357 = vmatpush1.msra.mxu0 0.0
      %2358 = vmatprep.subr.mxu0 0.0
      %2359 = vmatpush1.msra.mxu0 0.0
      %2360 = vmatprep.subr.mxu0 0.0
      %2361 = vmatpush1.msra.mxu0 0.0
      %2362 = vmatprep.subr.mxu0 0.0
      %2363 = vmatpush1.msra.mxu0 0.0
      %2364 = vmatprep.subr.mxu0 0.0
      %2365 = vmatpush1.msra.mxu0 0.0
      %2366 = vmatprep.subr.mxu0 0.0
      %2367 = vmatpush1.msra.mxu0 0.0
      %2368 = vmatprep.subr.mxu0 0.0
      %2369 = vmatpush1.msra.mxu0 0.0
      %2370 = vmatprep.subr.mxu0 0.0
      %2371 = vmatpush1.msra.mxu0 0.0
      %2372 = vmatprep.subr.mxu0 0.0
      %2373 = vmatpush1.msra.mxu0 0.0
      %2374 = vmatprep.subr.mxu0 0.0
      %2375 = vmatpush1.msra.mxu0 0.0
      %2376 = vmatprep.subr.mxu0 0.0
      %2377 = vmatpush1.msra.mxu0 0.0
      %2378 = vmatprep.subr.mxu0 0.0
      %2379 = vmatpush1.msra.mxu0 0.0
      %2380 = vmatprep.subr.mxu0 0.0
      %2381 = vmatpush1.msra.mxu0 0.0
      %2382 = vmatprep.subr.mxu0 0.0
      %2383 = vmatpush1.msra.mxu0 0.0
      %2384 = vmatprep.subr.mxu0 0.0
      %2385 = vmatpush1.msra.mxu0 0.0
      %2386 = vmatprep.subr.mxu0 0.0
      %2387 = vmatpush1.msra.mxu0 0.0
      %2388 = vmatprep.subr.mxu0 0.0
      %2389 = vmatpush1.msra.mxu0 0.0
      %2390 = vmatprep.subr.mxu0 0.0
      %2391 = vmatpush1.msra.mxu0 0.0
      %2392 = vmatprep.subr.mxu0 0.0
      %2393 = vmatpush1.msra.mxu0 0.0
      %2394 = vmatprep.subr.mxu0 0.0
      %2395 = vmatpush1.msra.mxu0 0.0
      %2396 = vmatprep.subr.mxu0 0.0
      %2397 = vmatpush1.msra.mxu0 0.0
      %2398 = vmatprep.subr.mxu0 0.0
      %2399 = vmatpush1.msra.mxu0 0.0
      %2400 = vmatprep.subr.mxu0 0.0
      %2401 = vmatpush1.msra.mxu0 0.0
      %2402 = vmatprep.subr.mxu0 0.0
      %2403 = vmatpush1.msra.mxu0 0.0
      %2404 = vmatprep.subr.mxu0 0.0
      %2405 = vmatpush1.msra.mxu0 0.0
      %2406 = vmatprep.mubr.f32.mxu0 0.0
      %2407 = vmatmul.mubr.f32.gmra.mrb[0].mxu0 %v2334
      %v2408 = vpop.f32.mrb[0].mxu0
      %v2409 = vadd.f32 %v2329, %v2408
      %v2410 = vpop.f32.mrb[0].mxu0
      %v2411 = vadd.f32 %v2331, %v2410
      %2412 = vdwg.mxu0
      %vm2413 = vcmask 1046528
      %v2414 = vrot.slane %v646, 1
      %v2415 = vrot.slane %v647, 1
      %v2416 = vsel %vm2413, %v2414, %v2415
      %v2417 = vrot.slane %v648, 1
      %v2418 = vrot.slane %v649, 1
      %v2419 = vsel %vm2413, %v2417, %v2418
      %v2420 = vrot.slane %v650, 1
      %v2421 = vrot.slane %v651, 1
      %v2422 = vsel %vm2413, %v2420, %v2421
      %v2423 = vrot.slane %v652, 1
      %v2424 = vrot.slane %v653, 1
      %v2425 = vsel %vm2413, %v2423, %v2424
      %v2434 = vcombine.low %v2416, %v2422
      %v2435 = vcombine.high %v2416, %v2422
      %v2437 = vunpack.c.l.s4 1983009808
      %v2438 = vunpack.c.0.s8 %v2437
      %v2439 = vlaneseq
      %v2440 = vshrl.u32 %v2439, 7
      %v2441 = vsub.s32 %v2438, %v2440
      %v2442 = vrot.slane %v2434, %v2441
      %v2444 = vunpack.c.l.s4 1983009808
      %v2445 = vunpack.c.0.s8 %v2444
      %v2446 = vlaneseq
      %v2447 = vshrl.u32 %v2446, 7
      %v2448 = vsub.s32 %v2445, %v2447
      %v2449 = vrot.slane %v2435, %v2448
      %v2450 = vcombine.low %v2419, %v2425
      %v2451 = vcombine.high %v2419, %v2425
      %v2453 = vunpack.c.l.s4 1983009808
      %v2454 = vunpack.c.0.s8 %v2453
      %v2455 = vlaneseq
      %v2456 = vshrl.u32 %v2455, 7
      %v2457 = vsub.s32 %v2454, %v2456
      %v2458 = vrot.slane %v2450, %v2457
      %v2460 = vunpack.c.l.s4 1983009808
      %v2461 = vunpack.c.0.s8 %v2460
      %v2462 = vlaneseq
      %v2463 = vshrl.u32 %v2462, 7
      %v2464 = vsub.s32 %v2461, %v2463
      %v2465 = vrot.slane %v2451, %v2464
      %v2466 = vcombine.low %v2442, %v2458
      %v2467 = vcombine.high %v2442, %v2458
      %v2469 = vunpack.c.l.s4 1934713408
      %v2470 = vunpack.c.0.s8 %v2469
      %v2471 = vlaneseq
      %v2472 = vshrl.u32 %v2471, 7
      %v2473 = vsub.s32 %v2470, %v2472
      %v2474 = vrot.slane %v2466, %v2473
      %v2476 = vunpack.c.l.s4 1934713408
      %v2477 = vunpack.c.0.s8 %v2476
      %v2478 = vlaneseq
      %v2479 = vshrl.u32 %v2478, 7
      %v2480 = vsub.s32 %v2477, %v2479
      %v2481 = vrot.slane %v2467, %v2480
      %v2482 = vcombine.low %v2449, %v2465
      %v2483 = vcombine.high %v2449, %v2465
      %v2485 = vunpack.c.l.s4 1934713408
      %v2486 = vunpack.c.0.s8 %v2485
      %v2487 = vlaneseq
      %v2488 = vshrl.u32 %v2487, 7
      %v2489 = vsub.s32 %v2486, %v2488
      %v2490 = vrot.slane %v2482, %v2489
      %v2492 = vunpack.c.l.s4 1934713408
      %v2493 = vunpack.c.0.s8 %v2492
      %v2494 = vlaneseq
      %v2495 = vshrl.u32 %v2494, 7
      %v2496 = vsub.s32 %v2493, %v2495
      %v2497 = vrot.slane %v2483, %v2496
      %v2498 = vcombine.high %v2474, 0.0
      %v2499 = vcombine.high %v2481, 0.0
      %v2500 = vcombine.high %v2490, 0.0
      %v2501 = vcombine.high %v2497, 0.0
      %v2502 = vcombine.low %v2415, %v2421
      %v2503 = vcombine.high %v2415, %v2421
      %v2505 = vunpack.c.l.s4 1983009808
      %v2506 = vunpack.c.0.s8 %v2505
      %v2507 = vlaneseq
      %v2508 = vshrl.u32 %v2507, 7
      %v2509 = vsub.s32 %v2506, %v2508
      %v2510 = vrot.slane %v2502, %v2509
      %v2512 = vunpack.c.l.s4 1983009808
      %v2513 = vunpack.c.0.s8 %v2512
      %v2514 = vlaneseq
      %v2515 = vshrl.u32 %v2514, 7
      %v2516 = vsub.s32 %v2513, %v2515
      %v2517 = vrot.slane %v2503, %v2516
      %v2518 = vcombine.low %v2418, %v2424
      %v2519 = vcombine.high %v2418, %v2424
      %v2521 = vunpack.c.l.s4 1983009808
      %v2522 = vunpack.c.0.s8 %v2521
      %v2523 = vlaneseq
      %v2524 = vshrl.u32 %v2523, 7
      %v2525 = vsub.s32 %v2522, %v2524
      %v2526 = vrot.slane %v2518, %v2525
      %v2528 = vunpack.c.l.s4 1983009808
      %v2529 = vunpack.c.0.s8 %v2528
      %v2530 = vlaneseq
      %v2531 = vshrl.u32 %v2530, 7
      %v2532 = vsub.s32 %v2529, %v2531
      %v2533 = vrot.slane %v2519, %v2532
      %v2534 = vcombine.low %v2510, %v2526
      %v2535 = vcombine.high %v2510, %v2526
      %v2537 = vunpack.c.l.s4 1934713408
      %v2538 = vunpack.c.0.s8 %v2537
      %v2539 = vlaneseq
      %v2540 = vshrl.u32 %v2539, 7
      %v2541 = vsub.s32 %v2538, %v2540
      %v2542 = vrot.slane %v2534, %v2541
      %v2544 = vunpack.c.l.s4 1934713408
      %v2545 = vunpack.c.0.s8 %v2544
      %v2546 = vlaneseq
      %v2547 = vshrl.u32 %v2546, 7
      %v2548 = vsub.s32 %v2545, %v2547
      %v2549 = vrot.slane %v2535, %v2548
      %v2550 = vcombine.low %v2517, %v2533
      %v2551 = vcombine.high %v2517, %v2533
      %v2553 = vunpack.c.l.s4 1934713408
      %v2554 = vunpack.c.0.s8 %v2553
      %v2555 = vlaneseq
      %v2556 = vshrl.u32 %v2555, 7
      %v2557 = vsub.s32 %v2554, %v2556
      %v2558 = vrot.slane %v2550, %v2557
      %v2559 = vcombine.high %v2542, 0.0
      %v2560 = vcombine.high %v2549, 0.0
      %v2561 = vcombine.high %v2558, 0.0
      %v2563 = vunpack.c.l.s4 1934713408
      %v2564 = vunpack.c.0.s8 %v2563
      %v2565 = vlaneseq
      %v2566 = vshrl.u32 %v2565, 7
      %v2567 = vsub.s32 %v2564, %v2566
      %v2568 = vrot.slane %v2551, %v2567
      %2570 = vrot.lane.b32.xlu0 %v2498, 15
      %v2571 = vpop.permute.xlu0 %2570
      %2574 = vrot.lane.b32.xlu0 %v2481, 30
      %v2575 = vpop.permute.xlu0 %2574
      %2578 = vrot.lane.b32.xlu0 %v2499, 45
      %v2579 = vpop.permute.xlu0 %2578
      %2582 = vrot.lane.b32.xlu0 %v2490, 60
      %v2583 = vpop.permute.xlu0 %2582
      %2586 = vrot.lane.b32.xlu0 %v2500, 75
      %v2587 = vpop.permute.xlu0 %2586
      %2590 = vrot.lane.b32.xlu0 %v2497, 90
      %v2591 = vpop.permute.xlu0 %2590
      %2594 = vrot.lane.b32.xlu0 %v2501, 105
      %v2595 = vpop.permute.xlu0 %2594
      %2598 = vrot.lane.b32.xlu0 %v2542, 120
      %v2599 = vpop.permute.xlu0 %2598
      %2602 = vrot.lane.b32.xlu0 %v2559, 7
      %v2603 = vpop.permute.xlu0 %2602
      %2606 = vrot.lane.b32.xlu0 %v2549, 22
      %v2607 = vpop.permute.xlu0 %2606
      %2610 = vrot.lane.b32.xlu0 %v2560, 37
      %v2611 = vpop.permute.xlu0 %2610
      %2614 = vrot.lane.b32.xlu0 %v2558, 52
      %v2615 = vpop.permute.xlu0 %2614
      %2618 = vrot.lane.b32.xlu0 %v2561, 67
      %v2619 = vpop.permute.xlu0 %2618
      %2622 = vrot.lane.b32.xlu0 %v2568, 82
      %v2623 = vpop.permute.xlu0 %2622
      %v2625 = vsel %vm1988, %v2474, %v2571
      %v2626 = vsel %vm1990, %v2625, %v2575
      %v2627 = vsel %vm1992, %v2626, %v2579
      %v2628 = vsel %vm1994, %v2627, %v2583
      %v2629 = vsel %vm1996, %v2628, %v2587
      %v2630 = vsel %vm1998, %v2629, %v2591
      %v2631 = vsel %vm2000, %v2630, %v2595
      %v2632 = vsel %vm2002, %v2631, %v2599
      %v2633 = vsel %vm2004, %v2599, %v2603
      %v2634 = vsel %vm2006, %v2633, %v2607
      %v2635 = vsel %vm2008, %v2634, %v2611
      %v2636 = vsel %vm2010, %v2635, %v2615
      %v2637 = vsel %vm2012, %v2636, %v2619
      %v2638 = vsel %vm2014, %v2637, %v2623
      %v2640 = vsel %vm874, %v1943, 0
      %v2643 = vsel %vm878, %v2632, 0
      %v2646 = vsel %vm878, %v2638, 0
      %2648 = vmatprep.subr.mxu0 %v2646
      %2649 = vmatpush1.msra.mxu0 %v2643
      %2650 = vmatprep.subr.mxu0 0.0
      %2651 = vmatpush1.msra.mxu0 0.0
      %2652 = vmatprep.subr.mxu0 0.0
      %2653 = vmatpush1.msra.mxu0 0.0
      %2654 = vmatprep.subr.mxu0 0.0
      %2655 = vmatpush1.msra.mxu0 0.0
      %2656 = vmatprep.subr.mxu0 0.0
      %2657 = vmatpush1.msra.mxu0 0.0
      %2658 = vmatprep.subr.mxu0 0.0
      %2659 = vmatpush1.msra.mxu0 0.0
      %2660 = vmatprep.subr.mxu0 0.0
      %2661 = vmatpush1.msra.mxu0 0.0
      %2662 = vmatprep.subr.mxu0 0.0
      %2663 = vmatpush1.msra.mxu0 0.0
      %2664 = vmatprep.subr.mxu0 0.0
      %2665 = vmatpush1.msra.mxu0 0.0
      %2666 = vmatprep.subr.mxu0 0.0
      %2667 = vmatpush1.msra.mxu0 0.0
      %2668 = vmatprep.subr.mxu0 0.0
      %2669 = vmatpush1.msra.mxu0 0.0
      %2670 = vmatprep.subr.mxu0 0.0
      %2671 = vmatpush1.msra.mxu0 0.0
      %2672 = vmatprep.subr.mxu0 0.0
      %2673 = vmatpush1.msra.mxu0 0.0
      %2674 = vmatprep.subr.mxu0 0.0
      %2675 = vmatpush1.msra.mxu0 0.0
      %2676 = vmatprep.subr.mxu0 0.0
      %2677 = vmatpush1.msra.mxu0 0.0
      %2678 = vmatprep.subr.mxu0 0.0
      %2679 = vmatpush1.msra.mxu0 0.0
      %2680 = vmatprep.subr.mxu0 0.0
      %2681 = vmatpush1.msra.mxu0 0.0
      %2682 = vmatprep.subr.mxu0 0.0
      %2683 = vmatpush1.msra.mxu0 0.0
      %2684 = vmatprep.subr.mxu0 0.0
      %2685 = vmatpush1.msra.mxu0 0.0
      %2686 = vmatprep.subr.mxu0 0.0
      %2687 = vmatpush1.msra.mxu0 0.0
      %2688 = vmatprep.subr.mxu0 0.0
      %2689 = vmatpush1.msra.mxu0 0.0
      %2690 = vmatprep.subr.mxu0 0.0
      %2691 = vmatpush1.msra.mxu0 0.0
      %2692 = vmatprep.subr.mxu0 0.0
      %2693 = vmatpush1.msra.mxu0 0.0
      %2694 = vmatprep.subr.mxu0 0.0
      %2695 = vmatpush1.msra.mxu0 0.0
      %2696 = vmatprep.subr.mxu0 0.0
      %2697 = vmatpush1.msra.mxu0 0.0
      %2698 = vmatprep.subr.mxu0 0.0
      %2699 = vmatpush1.msra.mxu0 0.0
      %2700 = vmatprep.subr.mxu0 0.0
      %2701 = vmatpush1.msra.mxu0 0.0
      %2702 = vmatprep.subr.mxu0 0.0
      %2703 = vmatpush1.msra.mxu0 0.0
      %2704 = vmatprep.subr.mxu0 0.0
      %2705 = vmatpush1.msra.mxu0 0.0
      %2706 = vmatprep.subr.mxu0 0.0
      %2707 = vmatpush1.msra.mxu0 0.0
      %2708 = vmatprep.subr.mxu0 0.0
      %2709 = vmatpush1.msra.mxu0 0.0
      %2710 = vmatprep.subr.mxu0 0.0
      %2711 = vmatpush1.msra.mxu0 0.0
      %2712 = vmatprep.mubr.f32.mxu0 0.0
      %2713 = vmatmul.mubr.f32.gmra.mrb[0].mxu0 %v2640
      %v2714 = vpop.f32.mrb[0].mxu0
      %v2715 = vadd.f32 0.0, %v2714
      %v2716 = vpop.f32.mrb[0].mxu0
      %v2717 = vadd.f32 0.0, %v2716
      %2718 = vdwg.mxu0
      %v2719 = vadd.f32 %v2409, %v2715
      %v2720 = vadd.f32 %v2411, %v2717
      %2721 = vrot.lane.b32.xlu0 %v2416, 127
      %v2722 = vpop.permute.xlu0 %2721
      %2723 = vrot.lane.b32.xlu0 %v2415, 127
      %v2724 = vpop.permute.xlu0 %2723
      %2725 = vrot.lane.b32.xlu0 %v2419, 127
      %v2726 = vpop.permute.xlu0 %2725
      %2727 = vrot.lane.b32.xlu0 %v2418, 127
      %v2728 = vpop.permute.xlu0 %2727
      %2729 = vrot.lane.b32.xlu0 %v2422, 127
      %v2730 = vpop.permute.xlu0 %2729
      %2731 = vrot.lane.b32.xlu0 %v2421, 127
      %v2732 = vpop.permute.xlu0 %2731
      %2733 = vrot.lane.b32.xlu0 %v2425, 127
      %v2734 = vpop.permute.xlu0 %2733
      %2735 = vrot.lane.b32.xlu0 %v2424, 127
      %v2736 = vpop.permute.xlu0 %2735
      %v2745 = vcombine.low %v2722, %v2730
      %v2746 = vcombine.high %v2722, %v2730
      %v2748 = vunpack.c.l.s4 1983009808
      %v2749 = vunpack.c.0.s8 %v2748
      %v2750 = vlaneseq
      %v2751 = vshrl.u32 %v2750, 7
      %v2752 = vsub.s32 %v2749, %v2751
      %v2753 = vrot.slane %v2745, %v2752
      %v2755 = vunpack.c.l.s4 1983009808
      %v2756 = vunpack.c.0.s8 %v2755
      %v2757 = vlaneseq
      %v2758 = vshrl.u32 %v2757, 7
      %v2759 = vsub.s32 %v2756, %v2758
      %v2760 = vrot.slane %v2746, %v2759
      %v2761 = vcombine.low %v2726, %v2734
      %v2762 = vcombine.high %v2726, %v2734
      %v2764 = vunpack.c.l.s4 1983009808
      %v2765 = vunpack.c.0.s8 %v2764
      %v2766 = vlaneseq
      %v2767 = vshrl.u32 %v2766, 7
      %v2768 = vsub.s32 %v2765, %v2767
      %v2769 = vrot.slane %v2761, %v2768
      %v2771 = vunpack.c.l.s4 1983009808
      %v2772 = vunpack.c.0.s8 %v2771
      %v2773 = vlaneseq
      %v2774 = vshrl.u32 %v2773, 7
      %v2775 = vsub.s32 %v2772, %v2774
      %v2776 = vrot.slane %v2762, %v2775
      %v2777 = vcombine.low %v2753, %v2769
      %v2778 = vcombine.high %v2753, %v2769
      %v2780 = vunpack.c.l.s4 1934713408
      %v2781 = vunpack.c.0.s8 %v2780
      %v2782 = vlaneseq
      %v2783 = vshrl.u32 %v2782, 7
      %v2784 = vsub.s32 %v2781, %v2783
      %v2785 = vrot.slane %v2777, %v2784
      %v2787 = vunpack.c.l.s4 1934713408
      %v2788 = vunpack.c.0.s8 %v2787
      %v2789 = vlaneseq
      %v2790 = vshrl.u32 %v2789, 7
      %v2791 = vsub.s32 %v2788, %v2790
      %v2792 = vrot.slane %v2778, %v2791
      %v2793 = vcombine.low %v2760, %v2776
      %v2794 = vcombine.high %v2760, %v2776
      %v2796 = vunpack.c.l.s4 1934713408
      %v2797 = vunpack.c.0.s8 %v2796
      %v2798 = vlaneseq
      %v2799 = vshrl.u32 %v2798, 7
      %v2800 = vsub.s32 %v2797, %v2799
      %v2801 = vrot.slane %v2793, %v2800
      %v2803 = vunpack.c.l.s4 1934713408
      %v2804 = vunpack.c.0.s8 %v2803
      %v2805 = vlaneseq
      %v2806 = vshrl.u32 %v2805, 7
      %v2807 = vsub.s32 %v2804, %v2806
      %v2808 = vrot.slane %v2794, %v2807
      %v2809 = vcombine.high %v2785, 0.0
      %v2810 = vcombine.high %v2792, 0.0
      %v2811 = vcombine.high %v2801, 0.0
      %v2812 = vcombine.high %v2808, 0.0
      %v2813 = vcombine.low %v2724, %v2732
      %v2814 = vcombine.high %v2724, %v2732
      %v2816 = vunpack.c.l.s4 1983009808
      %v2817 = vunpack.c.0.s8 %v2816
      %v2818 = vlaneseq
      %v2819 = vshrl.u32 %v2818, 7
      %v2820 = vsub.s32 %v2817, %v2819
      %v2821 = vrot.slane %v2813, %v2820
      %v2823 = vunpack.c.l.s4 1983009808
      %v2824 = vunpack.c.0.s8 %v2823
      %v2825 = vlaneseq
      %v2826 = vshrl.u32 %v2825, 7
      %v2827 = vsub.s32 %v2824, %v2826
      %v2828 = vrot.slane %v2814, %v2827
      %v2829 = vcombine.low %v2728, %v2736
      %v2830 = vcombine.high %v2728, %v2736
      %v2832 = vunpack.c.l.s4 1983009808
      %v2833 = vunpack.c.0.s8 %v2832
      %v2834 = vlaneseq
      %v2835 = vshrl.u32 %v2834, 7
      %v2836 = vsub.s32 %v2833, %v2835
      %v2837 = vrot.slane %v2829, %v2836
      %v2839 = vunpack.c.l.s4 1983009808
      %v2840 = vunpack.c.0.s8 %v2839
      %v2841 = vlaneseq
      %v2842 = vshrl.u32 %v2841, 7
      %v2843 = vsub.s32 %v2840, %v2842
      %v2844 = vrot.slane %v2830, %v2843
      %v2845 = vcombine.low %v2821, %v2837
      %v2846 = vcombine.high %v2821, %v2837
      %v2848 = vunpack.c.l.s4 1934713408
      %v2849 = vunpack.c.0.s8 %v2848
      %v2850 = vlaneseq
      %v2851 = vshrl.u32 %v2850, 7
      %v2852 = vsub.s32 %v2849, %v2851
      %v2853 = vrot.slane %v2845, %v2852
      %v2855 = vunpack.c.l.s4 1934713408
      %v2856 = vunpack.c.0.s8 %v2855
      %v2857 = vlaneseq
      %v2858 = vshrl.u32 %v2857, 7
      %v2859 = vsub.s32 %v2856, %v2858
      %v2860 = vrot.slane %v2846, %v2859
      %v2861 = vcombine.low %v2828, %v2844
      %v2862 = vcombine.high %v2828, %v2844
      %v2864 = vunpack.c.l.s4 1934713408
      %v2865 = vunpack.c.0.s8 %v2864
      %v2866 = vlaneseq
      %v2867 = vshrl.u32 %v2866, 7
      %v2868 = vsub.s32 %v2865, %v2867
      %v2869 = vrot.slane %v2861, %v2868
      %v2870 = vcombine.high %v2853, 0.0
      %v2871 = vcombine.high %v2860, 0.0
      %v2872 = vcombine.high %v2869, 0.0
      %v2874 = vunpack.c.l.s4 1934713408
      %v2875 = vunpack.c.0.s8 %v2874
      %v2876 = vlaneseq
      %v2877 = vshrl.u32 %v2876, 7
      %v2878 = vsub.s32 %v2875, %v2877
      %v2879 = vrot.slane %v2862, %v2878
      %2881 = vrot.lane.b32.xlu0 %v2809, 15
      %v2882 = vpop.permute.xlu0 %2881
      %2885 = vrot.lane.b32.xlu0 %v2792, 30
      %v2886 = vpop.permute.xlu0 %2885
      %2889 = vrot.lane.b32.xlu0 %v2810, 45
      %v2890 = vpop.permute.xlu0 %2889
      %2893 = vrot.lane.b32.xlu0 %v2801, 60
      %v2894 = vpop.permute.xlu0 %2893
      %2897 = vrot.lane.b32.xlu0 %v2811, 75
      %v2898 = vpop.permute.xlu0 %2897
      %2901 = vrot.lane.b32.xlu0 %v2808, 90
      %v2902 = vpop.permute.xlu0 %2901
      %2905 = vrot.lane.b32.xlu0 %v2812, 105
      %v2906 = vpop.permute.xlu0 %2905
      %2909 = vrot.lane.b32.xlu0 %v2853, 120
      %v2910 = vpop.permute.xlu0 %2909
      %2913 = vrot.lane.b32.xlu0 %v2870, 7
      %v2914 = vpop.permute.xlu0 %2913
      %2917 = vrot.lane.b32.xlu0 %v2860, 22
      %v2918 = vpop.permute.xlu0 %2917
      %2921 = vrot.lane.b32.xlu0 %v2871, 37
      %v2922 = vpop.permute.xlu0 %2921
      %2925 = vrot.lane.b32.xlu0 %v2869, 52
      %v2926 = vpop.permute.xlu0 %2925
      %2929 = vrot.lane.b32.xlu0 %v2872, 67
      %v2930 = vpop.permute.xlu0 %2929
      %2933 = vrot.lane.b32.xlu0 %v2879, 82
      %v2934 = vpop.permute.xlu0 %2933
      %v2936 = vsel %vm1988, %v2785, %v2882
      %v2937 = vsel %vm1990, %v2936, %v2886
      %v2938 = vsel %vm1992, %v2937, %v2890
      %v2939 = vsel %vm1994, %v2938, %v2894
      %v2940 = vsel %vm1996, %v2939, %v2898
      %v2941 = vsel %vm1998, %v2940, %v2902
      %v2942 = vsel %vm2000, %v2941, %v2906
      %v2943 = vsel %vm2002, %v2942, %v2910
      %v2944 = vsel %vm2004, %v2910, %v2914
      %v2945 = vsel %vm2006, %v2944, %v2918
      %v2946 = vsel %vm2008, %v2945, %v2922
      %v2947 = vsel %vm2010, %v2946, %v2926
      %v2948 = vsel %vm2012, %v2947, %v2930
      %v2949 = vsel %vm2014, %v2948, %v2934
      %v2951 = vsel %vm874, %v1944, 0
      %v2954 = vsel %vm878, %v2943, 0
      %v2957 = vsel %vm878, %v2949, 0
      %2959 = vmatprep.subr.mxu0 %v2957
      %2960 = vmatpush1.msra.mxu0 %v2954
      %2961 = vmatprep.subr.mxu0 0.0
      %2962 = vmatpush1.msra.mxu0 0.0
      %2963 = vmatprep.subr.mxu0 0.0
      %2964 = vmatpush1.msra.mxu0 0.0
      %2965 = vmatprep.subr.mxu0 0.0
      %2966 = vmatpush1.msra.mxu0 0.0
      %2967 = vmatprep.subr.mxu0 0.0
      %2968 = vmatpush1.msra.mxu0 0.0
      %2969 = vmatprep.subr.mxu0 0.0
      %2970 = vmatpush1.msra.mxu0 0.0
      %2971 = vmatprep.subr.mxu0 0.0
      %2972 = vmatpush1.msra.mxu0 0.0
      %2973 = vmatprep.subr.mxu0 0.0
      %2974 = vmatpush1.msra.mxu0 0.0
      %2975 = vmatprep.subr.mxu0 0.0
      %2976 = vmatpush1.msra.mxu0 0.0
      %2977 = vmatprep.subr.mxu0 0.0
      %2978 = vmatpush1.msra.mxu0 0.0
      %2979 = vmatprep.subr.mxu0 0.0
      %2980 = vmatpush1.msra.mxu0 0.0
      %2981 = vmatprep.subr.mxu0 0.0
      %2982 = vmatpush1.msra.mxu0 0.0
      %2983 = vmatprep.subr.mxu0 0.0
      %2984 = vmatpush1.msra.mxu0 0.0
      %2985 = vmatprep.subr.mxu0 0.0
      %2986 = vmatpush1.msra.mxu0 0.0
      %2987 = vmatprep.subr.mxu0 0.0
      %2988 = vmatpush1.msra.mxu0 0.0
      %2989 = vmatprep.subr.mxu0 0.0
      %2990 = vmatpush1.msra.mxu0 0.0
      %2991 = vmatprep.subr.mxu0 0.0
      %2992 = vmatpush1.msra.mxu0 0.0
      %2993 = vmatprep.subr.mxu0 0.0
      %2994 = vmatpush1.msra.mxu0 0.0
      %2995 = vmatprep.subr.mxu0 0.0
      %2996 = vmatpush1.msra.mxu0 0.0
      %2997 = vmatprep.subr.mxu0 0.0
      %2998 = vmatpush1.msra.mxu0 0.0
      %2999 = vmatprep.subr.mxu0 0.0
      %3000 = vmatpush1.msra.mxu0 0.0
      %3001 = vmatprep.subr.mxu0 0.0
      %3002 = vmatpush1.msra.mxu0 0.0
      %3003 = vmatprep.subr.mxu0 0.0
      %3004 = vmatpush1.msra.mxu0 0.0
      %3005 = vmatprep.subr.mxu0 0.0
      %3006 = vmatpush1.msra.mxu0 0.0
      %3007 = vmatprep.subr.mxu0 0.0
      %3008 = vmatpush1.msra.mxu0 0.0
      %3009 = vmatprep.subr.mxu0 0.0
      %3010 = vmatpush1.msra.mxu0 0.0
      %3011 = vmatprep.subr.mxu0 0.0
      %3012 = vmatpush1.msra.mxu0 0.0
      %3013 = vmatprep.subr.mxu0 0.0
      %3014 = vmatpush1.msra.mxu0 0.0
      %3015 = vmatprep.subr.mxu0 0.0
      %3016 = vmatpush1.msra.mxu0 0.0
      %3017 = vmatprep.subr.mxu0 0.0
      %3018 = vmatpush1.msra.mxu0 0.0
      %3019 = vmatprep.subr.mxu0 0.0
      %3020 = vmatpush1.msra.mxu0 0.0
      %3021 = vmatprep.subr.mxu0 0.0
      %3022 = vmatpush1.msra.mxu0 0.0
      %3023 = vmatprep.mubr.f32.mxu0 0.0
      %3024 = vmatmul.mubr.f32.gmra.mrb[0].mxu0 %v2951
      %v3025 = vpop.f32.mrb[0].mxu0
      %v3026 = vadd.f32 0.0, %v3025
      %v3027 = vpop.f32.mrb[0].mxu0
      %v3028 = vadd.f32 0.0, %v3027
      %3029 = vdwg.mxu0
      %v3030 = vadd.f32 %v2719, %v3026
      %v3031 = vadd.f32 %v2720, %v3028
      %v3032 = vld [vmem:[%s7] sm:$0xf]
      %3034 = vset.pattern.permute.xlu0 0
      %3035 = vperm.xlu0 %3034, %v3032
      %v3036 = vpop.permute.xlu0 %3035
      %v3038 = vadd.f32 %v3030, %v3036
      %v3039 = vadd.f32 %v3031, %v3036
      %3041 = vrot.lane.b32.xlu0 %v3038, 113
      %v3042 = vpop.permute.xlu0 %3041
      %3044 = vrot.lane.b32.xlu0 %v3038, 98
      %v3045 = vpop.permute.xlu0 %3044
      %3047 = vrot.lane.b32.xlu0 %v3038, 83
      %v3048 = vpop.permute.xlu0 %3047
      %3050 = vrot.lane.b32.xlu0 %v3038, 68
      %v3051 = vpop.permute.xlu0 %3050
      %3053 = vrot.lane.b32.xlu0 %v3038, 53
      %v3054 = vpop.permute.xlu0 %3053
      %3056 = vrot.lane.b32.xlu0 %v3038, 38
      %v3057 = vpop.permute.xlu0 %3056
      %3059 = vrot.lane.b32.xlu0 %v3038, 23
      %v3060 = vpop.permute.xlu0 %3059
      %3063 = vrot.lane.b32.xlu0 %v3038, 8
      %v3064 = vpop.permute.xlu0 %3063
      %3065 = vrot.lane.b32.xlu0 %v3039, 8
      %v3066 = vpop.permute.xlu0 %3065
      %vm3067 = vcmask 64512
      %v3068 = vsel %vm3067, %v3064, %v3066
      %3070 = vrot.lane.b32.xlu0 %v3039, 121
      %v3071 = vpop.permute.xlu0 %3070
      %3073 = vrot.lane.b32.xlu0 %v3039, 106
      %v3074 = vpop.permute.xlu0 %3073
      %3076 = vrot.lane.b32.xlu0 %v3039, 91
      %v3077 = vpop.permute.xlu0 %3076
      %3079 = vrot.lane.b32.xlu0 %v3039, 76
      %v3080 = vpop.permute.xlu0 %3079
      %3082 = vrot.lane.b32.xlu0 %v3039, 61
      %v3083 = vpop.permute.xlu0 %3082
      %3084 = vrot.lane.b32.xlu0 %v3039, 46
      %v3085 = vpop.permute.xlu0 %3084
      %v3087 = vcombine.low %v3038, %v3045
      %v3089 = vunpack.c.l.s4 1983009808
      %v3090 = vunpack.c.0.s8 %v3089
      %v3091 = vlaneseq
      %v3092 = vshrl.u32 %v3091, 7
      %v3093 = vsub.s32 %v3090, %v3092
      %v3094 = vrot.slane %v3087, %v3093
      %v3095 = vcombine.low %v3042, %v3048
      %v3097 = vunpack.c.l.s4 1983009808
      %v3098 = vunpack.c.0.s8 %v3097
      %v3099 = vlaneseq
      %v3100 = vshrl.u32 %v3099, 7
      %v3101 = vsub.s32 %v3098, %v3100
      %v3102 = vrot.slane %v3095, %v3101
      %v3103 = vcombine.low %v3051, %v3057
      %v3105 = vunpack.c.l.s4 1983009808
      %v3106 = vunpack.c.0.s8 %v3105
      %v3107 = vlaneseq
      %v3108 = vshrl.u32 %v3107, 7
      %v3109 = vsub.s32 %v3106, %v3108
      %v3110 = vrot.slane %v3103, %v3109
      %v3111 = vcombine.low %v3054, %v3060
      %v3113 = vunpack.c.l.s4 1983009808
      %v3114 = vunpack.c.0.s8 %v3113
      %v3115 = vlaneseq
      %v3116 = vshrl.u32 %v3115, 7
      %v3117 = vsub.s32 %v3114, %v3116
      %v3118 = vrot.slane %v3111, %v3117
      %v3119 = vcombine.low %v3094, %v3102
      %v3120 = vcombine.high %v3094, %v3102
      %v3122 = vunpack.c.l.s4 1934713408
      %v3123 = vunpack.c.0.s8 %v3122
      %v3124 = vlaneseq
      %v3125 = vshrl.u32 %v3124, 7
      %v3126 = vsub.s32 %v3123, %v3125
      %v3127 = vrot.slane %v3119, %v3126
      %v3129 = vunpack.c.l.s4 1934713408
      %v3130 = vunpack.c.0.s8 %v3129
      %v3131 = vlaneseq
      %v3132 = vshrl.u32 %v3131, 7
      %v3133 = vsub.s32 %v3130, %v3132
      %v3134 = vrot.slane %v3120, %v3133
      %v3135 = vcombine.low %v3110, %v3118
      %v3136 = vcombine.high %v3110, %v3118
      %v3138 = vunpack.c.l.s4 1934713408
      %v3139 = vunpack.c.0.s8 %v3138
      %v3140 = vlaneseq
      %v3141 = vshrl.u32 %v3140, 7
      %v3142 = vsub.s32 %v3139, %v3141
      %v3143 = vrot.slane %v3135, %v3142
      %v3145 = vunpack.c.l.s4 1934713408
      %v3146 = vunpack.c.0.s8 %v3145
      %v3147 = vlaneseq
      %v3148 = vshrl.u32 %v3147, 7
      %v3149 = vsub.s32 %v3146, %v3148
      %v3150 = vrot.slane %v3136, %v3149
      %v3151 = vcombine.low %v3127, %v3143
      %v3152 = vcombine.high %v3127, %v3143
      %v3153 = vcombine.low %v3134, %v3150
      %v3154 = vcombine.high %v3134, %v3150
      %v3155 = vcombine.low %v3068, %v3074
      %v3157 = vunpack.c.l.s4 1983009808
      %v3158 = vunpack.c.0.s8 %v3157
      %v3159 = vlaneseq
      %v3160 = vshrl.u32 %v3159, 7
      %v3161 = vsub.s32 %v3158, %v3160
      %v3162 = vrot.slane %v3155, %v3161
      %v3163 = vcombine.low %v3071, %v3077
      %v3165 = vunpack.c.l.s4 1983009808
      %v3166 = vunpack.c.0.s8 %v3165
      %v3167 = vlaneseq
      %v3168 = vshrl.u32 %v3167, 7
      %v3169 = vsub.s32 %v3166, %v3168
      %v3170 = vrot.slane %v3163, %v3169
      %v3171 = vcombine.low %v3080, %v3085
      %v3173 = vunpack.c.l.s4 1983009808
      %v3174 = vunpack.c.0.s8 %v3173
      %v3175 = vlaneseq
      %v3176 = vshrl.u32 %v3175, 7
      %v3177 = vsub.s32 %v3174, %v3176
      %v3178 = vrot.slane %v3171, %v3177
      %v3181 = vunpack.c.l.s4 1983009808
      %v3182 = vunpack.c.0.s8 %v3181
      %v3183 = vlaneseq
      %v3184 = vshrl.u32 %v3183, 7
      %v3185 = vsub.s32 %v3182, %v3184
      %v3186 = vrot.slane %v3083, %v3185
      %v3187 = vcombine.low %v3162, %v3170
      %v3188 = vcombine.high %v3162, %v3170
      %v3190 = vunpack.c.l.s4 1934713408
      %v3191 = vunpack.c.0.s8 %v3190
      %v3192 = vlaneseq
      %v3193 = vshrl.u32 %v3192, 7
      %v3194 = vsub.s32 %v3191, %v3193
      %v3195 = vrot.slane %v3187, %v3194
      %v3197 = vunpack.c.l.s4 1934713408
      %v3198 = vunpack.c.0.s8 %v3197
      %v3199 = vlaneseq
      %v3200 = vshrl.u32 %v3199, 7
      %v3201 = vsub.s32 %v3198, %v3200
      %v3202 = vrot.slane %v3188, %v3201
      %v3203 = vcombine.low %v3178, %v3186
      %v3204 = vcombine.high %v3178, %v3186
      %v3206 = vunpack.c.l.s4 1934713408
      %v3207 = vunpack.c.0.s8 %v3206
      %v3208 = vlaneseq
      %v3209 = vshrl.u32 %v3208, 7
      %v3210 = vsub.s32 %v3207, %v3209
      %v3211 = vrot.slane %v3203, %v3210
      %v3213 = vunpack.c.l.s4 1934713408
      %v3214 = vunpack.c.0.s8 %v3213
      %v3215 = vlaneseq
      %v3216 = vshrl.u32 %v3215, 7
      %v3217 = vsub.s32 %v3214, %v3216
      %v3218 = vrot.slane %v3204, %v3217
      %v3219 = vcombine.low %v3195, %v3211
      %v3220 = vcombine.high %v3195, %v3211
      %v3221 = vcombine.low %v3202, %v3218
      %v3222 = vcombine.high %v3202, %v3218
      %v3224 = vsel %vm1988, %v3151, 0
      %v3227 = vsel %vm1988, %v3219, 0
      %3229 = vmatprep.subr.mxu0 0.0
      %3230 = vmatpush1.xpose.msra.mxu0 %v3224
      %3231 = vmatprep.subr.mxu0 0.0
      %3232 = vmatpush1.xpose.msra.mxu0 %v3227
      %3233 = vmatprep.subr.mxu0 0.0
      %3234 = vmatpush1.xpose.msra.mxu0 0.0
      %3235 = vmatprep.subr.mxu0 0.0
      %3236 = vmatpush1.xpose.msra.mxu0 0.0
      %3237 = vmatprep.subr.mxu0 0.0
      %3238 = vmatpush1.xpose.msra.mxu0 0.0
      %3239 = vmatprep.subr.mxu0 0.0
      %3240 = vmatpush1.xpose.msra.mxu0 0.0
      %3241 = vmatprep.subr.mxu0 0.0
      %3242 = vmatpush1.xpose.msra.mxu0 0.0
      %3243 = vmatprep.subr.mxu0 0.0
      %3244 = vmatpush1.xpose.msra.mxu0 0.0
      %3245 = vmatprep.subr.mxu0 0.0
      %3246 = vmatpush1.xpose.msra.mxu0 0.0
      %3247 = vmatprep.subr.mxu0 0.0
      %3248 = vmatpush1.xpose.msra.mxu0 0.0
      %3249 = vmatprep.subr.mxu0 0.0
      %3250 = vmatpush1.xpose.msra.mxu0 0.0
      %3251 = vmatprep.subr.mxu0 0.0
      %3252 = vmatpush1.xpose.msra.mxu0 0.0
      %3253 = vmatprep.subr.mxu0 0.0
      %3254 = vmatpush1.xpose.msra.mxu0 0.0
      %3255 = vmatprep.subr.mxu0 0.0
      %3256 = vmatpush1.xpose.msra.mxu0 0.0
      %3257 = vmatprep.subr.mxu0 0.0
      %3258 = vmatpush1.xpose.msra.mxu0 0.0
      %3259 = vmatprep.subr.mxu0 0.0
      %3260 = vmatpush1.xpose.msra.mxu0 0.0
      %3261 = vmatprep.subr.mxu0 0.0
      %3262 = vmatpush1.xpose.msra.mxu0 0.0
      %3263 = vmatprep.subr.mxu0 0.0
      %3264 = vmatpush1.xpose.msra.mxu0 0.0
      %3265 = vmatprep.subr.mxu0 0.0
      %3266 = vmatpush1.xpose.msra.mxu0 0.0
      %3267 = vmatprep.subr.mxu0 0.0
      %3268 = vmatpush1.xpose.msra.mxu0 0.0
      %3269 = vmatprep.subr.mxu0 0.0
      %3270 = vmatpush1.xpose.msra.mxu0 0.0
      %3271 = vmatprep.subr.mxu0 0.0
      %3272 = vmatpush1.xpose.msra.mxu0 0.0
      %3273 = vmatprep.subr.mxu0 0.0
      %3274 = vmatpush1.xpose.msra.mxu0 0.0
      %3275 = vmatprep.subr.mxu0 0.0
      %3276 = vmatpush1.xpose.msra.mxu0 0.0
      %3277 = vmatprep.subr.mxu0 0.0
      %3278 = vmatpush1.xpose.msra.mxu0 0.0
      %3279 = vmatprep.subr.mxu0 0.0
      %3280 = vmatpush1.xpose.msra.mxu0 0.0
      %3281 = vmatprep.subr.mxu0 0.0
      %3282 = vmatpush1.xpose.msra.mxu0 0.0
      %3283 = vmatprep.subr.mxu0 0.0
      %3284 = vmatpush1.xpose.msra.mxu0 0.0
      %3285 = vmatprep.subr.mxu0 0.0
      %3286 = vmatpush1.xpose.msra.mxu0 0.0
      %3287 = vmatprep.subr.mxu0 0.0
      %3288 = vmatpush1.xpose.msra.mxu0 0.0
      %3289 = vmatprep.subr.mxu0 0.0
      %3290 = vmatpush1.xpose.msra.mxu0 0.0
      %3291 = vmatprep.subr.mxu0 0.0
      %3292 = vmatpush1.xpose.msra.mxu0 0.0
      %3293 = vmatprep.mubr.f32.mxu0 0.0
      %3294 = vmatmul.mubr.f32.gmra.mrb[0].mxu0 %v3224
      %v3295 = vpop.f32.mrb[0].mxu0
      %v3296 = vadd.f32 0.0, %v3295
      %v3297 = vpop.f32.mrb[0].mxu0
      %3298 = vmatprep.mubr.f32.mxu0 0.0
      %3299 = vmatmul.mubr.f32.gmra.mrb[0].mxu0 %v3227
      %v3300 = vpop.f32.mrb[0].mxu0
      %v3301 = vadd.f32 0.0, %v3300
      %v3302 = vpop.f32.mrb[0].mxu0
      %3303 = vdwg.mxu0
      %v3305 = vsel %vm1988, %v3152, 0
      %v3308 = vsel %vm1988, %v3220, 0
      %3310 = vmatprep.subr.mxu0 0.0
      %3311 = vmatpush1.xpose.msra.mxu0 %v3305
      %3312 = vmatprep.subr.mxu0 0.0
      %3313 = vmatpush1.xpose.msra.mxu0 %v3308
      %3314 = vmatprep.subr.mxu0 0.0
      %3315 = vmatpush1.xpose.msra.mxu0 0.0
      %3316 = vmatprep.subr.mxu0 0.0
      %3317 = vmatpush1.xpose.msra.mxu0 0.0
      %3318 = vmatprep.subr.mxu0 0.0
      %3319 = vmatpush1.xpose.msra.mxu0 0.0
      %3320 = vmatprep.subr.mxu0 0.0
      %3321 = vmatpush1.xpose.msra.mxu0 0.0
      %3322 = vmatprep.subr.mxu0 0.0
      %3323 = vmatpush1.xpose.msra.mxu0 0.0
      %3324 = vmatprep.subr.mxu0 0.0
      %3325 = vmatpush1.xpose.msra.mxu0 0.0
      %3326 = vmatprep.subr.mxu0 0.0
      %3327 = vmatpush1.xpose.msra.mxu0 0.0
      %3328 = vmatprep.subr.mxu0 0.0
      %3329 = vmatpush1.xpose.msra.mxu0 0.0
      %3330 = vmatprep.subr.mxu0 0.0
      %3331 = vmatpush1.xpose.msra.mxu0 0.0
      %3332 = vmatprep.subr.mxu0 0.0
      %3333 = vmatpush1.xpose.msra.mxu0 0.0
      %3334 = vmatprep.subr.mxu0 0.0
      %3335 = vmatpush1.xpose.msra.mxu0 0.0
      %3336 = vmatprep.subr.mxu0 0.0
      %3337 = vmatpush1.xpose.msra.mxu0 0.0
      %3338 = vmatprep.subr.mxu0 0.0
      %3339 = vmatpush1.xpose.msra.mxu0 0.0
      %3340 = vmatprep.subr.mxu0 0.0
      %3341 = vmatpush1.xpose.msra.mxu0 0.0
      %3342 = vmatprep.subr.mxu0 0.0
      %3343 = vmatpush1.xpose.msra.mxu0 0.0
      %3344 = vmatprep.subr.mxu0 0.0
      %3345 = vmatpush1.xpose.msra.mxu0 0.0
      %3346 = vmatprep.subr.mxu0 0.0
      %3347 = vmatpush1.xpose.msra.mxu0 0.0
      %3348 = vmatprep.subr.mxu0 0.0
      %3349 = vmatpush1.xpose.msra.mxu0 0.0
      %3350 = vmatprep.subr.mxu0 0.0
      %3351 = vmatpush1.xpose.msra.mxu0 0.0
      %3352 = vmatprep.subr.mxu0 0.0
      %3353 = vmatpush1.xpose.msra.mxu0 0.0
      %3354 = vmatprep.subr.mxu0 0.0
      %3355 = vmatpush1.xpose.msra.mxu0 0.0
      %3356 = vmatprep.subr.mxu0 0.0
      %3357 = vmatpush1.xpose.msra.mxu0 0.0
      %3358 = vmatprep.subr.mxu0 0.0
      %3359 = vmatpush1.xpose.msra.mxu0 0.0
      %3360 = vmatprep.subr.mxu0 0.0
      %3361 = vmatpush1.xpose.msra.mxu0 0.0
      %3362 = vmatprep.subr.mxu0 0.0
      %3363 = vmatpush1.xpose.msra.mxu0 0.0
      %3364 = vmatprep.subr.mxu0 0.0
      %3365 = vmatpush1.xpose.msra.mxu0 0.0
      %3366 = vmatprep.subr.mxu0 0.0
      %3367 = vmatpush1.xpose.msra.mxu0 0.0
      %3368 = vmatprep.subr.mxu0 0.0
      %3369 = vmatpush1.xpose.msra.mxu0 0.0
      %3370 = vmatprep.subr.mxu0 0.0
      %3371 = vmatpush1.xpose.msra.mxu0 0.0
      %3372 = vmatprep.subr.mxu0 0.0
      %3373 = vmatpush1.xpose.msra.mxu0 0.0
      %3374 = vmatprep.mubr.f32.mxu0 0.0
      %3375 = vmatmul.mubr.f32.gmra.mrb[0].mxu0 %v3305
      %v3376 = vpop.f32.mrb[0].mxu0
      %v3377 = vadd.f32 0.0, %v3376
      %v3378 = vpop.f32.mrb[0].mxu0
      %3379 = vmatprep.mubr.f32.mxu0 0.0
      %3380 = vmatmul.mubr.f32.gmra.mrb[0].mxu0 %v3308
      %v3381 = vpop.f32.mrb[0].mxu0
      %v3382 = vadd.f32 0.0, %v3381
      %v3383 = vpop.f32.mrb[0].mxu0
      %3384 = vdwg.mxu0
      %v3386 = vsel %vm1988, %v3153, 0
      %v3389 = vsel %vm1988, %v3221, 0
      %3391 = vmatprep.subr.mxu0 0.0
      %3392 = vmatpush1.xpose.msra.mxu0 %v3386
      %3393 = vmatprep.subr.mxu0 0.0
      %3394 = vmatpush1.xpose.msra.mxu0 %v3389
      %3395 = vmatprep.subr.mxu0 0.0
      %3396 = vmatpush1.xpose.msra.mxu0 0.0
      %3397 = vmatprep.subr.mxu0 0.0
      %3398 = vmatpush1.xpose.msra.mxu0 0.0
      %3399 = vmatprep.subr.mxu0 0.0
      %3400 = vmatpush1.xpose.msra.mxu0 0.0
      %3401 = vmatprep.subr.mxu0 0.0
      %3402 = vmatpush1.xpose.msra.mxu0 0.0
      %3403 = vmatprep.subr.mxu0 0.0
      %3404 = vmatpush1.xpose.msra.mxu0 0.0
      %3405 = vmatprep.subr.mxu0 0.0
      %3406 = vmatpush1.xpose.msra.mxu0 0.0
      %3407 = vmatprep.subr.mxu0 0.0
      %3408 = vmatpush1.xpose.msra.mxu0 0.0
      %3409 = vmatprep.subr.mxu0 0.0
      %3410 = vmatpush1.xpose.msra.mxu0 0.0
      %3411 = vmatprep.subr.mxu0 0.0
      %3412 = vmatpush1.xpose.msra.mxu0 0.0
      %3413 = vmatprep.subr.mxu0 0.0
      %3414 = vmatpush1.xpose.msra.mxu0 0.0
      %3415 = vmatprep.subr.mxu0 0.0
      %3416 = vmatpush1.xpose.msra.mxu0 0.0
      %3417 = vmatprep.subr.mxu0 0.0
      %3418 = vmatpush1.xpose.msra.mxu0 0.0
      %3419 = vmatprep.subr.mxu0 0.0
      %3420 = vmatpush1.xpose.msra.mxu0 0.0
      %3421 = vmatprep.subr.mxu0 0.0
      %3422 = vmatpush1.xpose.msra.mxu0 0.0
      %3423 = vmatprep.subr.mxu0 0.0
      %3424 = vmatpush1.xpose.msra.mxu0 0.0
      %3425 = vmatprep.subr.mxu0 0.0
      %3426 = vmatpush1.xpose.msra.mxu0 0.0
      %3427 = vmatprep.subr.mxu0 0.0
      %3428 = vmatpush1.xpose.msra.mxu0 0.0
      %3429 = vmatprep.subr.mxu0 0.0
      %3430 = vmatpush1.xpose.msra.mxu0 0.0
      %3431 = vmatprep.subr.mxu0 0.0
      %3432 = vmatpush1.xpose.msra.mxu0 0.0
      %3433 = vmatprep.subr.mxu0 0.0
      %3434 = vmatpush1.xpose.msra.mxu0 0.0
      %3435 = vmatprep.subr.mxu0 0.0
      %3436 = vmatpush1.xpose.msra.mxu0 0.0
      %3437 = vmatprep.subr.mxu0 0.0
      %3438 = vmatpush1.xpose.msra.mxu0 0.0
      %3439 = vmatprep.subr.mxu0 0.0
      %3440 = vmatpush1.xpose.msra.mxu0 0.0
      %3441 = vmatprep.subr.mxu0 0.0
      %3442 = vmatpush1.xpose.msra.mxu0 0.0
      %3443 = vmatprep.subr.mxu0 0.0
      %3444 = vmatpush1.xpose.msra.mxu0 0.0
      %3445 = vmatprep.subr.mxu0 0.0
      %3446 = vmatpush1.xpose.msra.mxu0 0.0
      %3447 = vmatprep.subr.mxu0 0.0
      %3448 = vmatpush1.xpose.msra.mxu0 0.0
      %3449 = vmatprep.subr.mxu0 0.0
      %3450 = vmatpush1.xpose.msra.mxu0 0.0
      %3451 = vmatprep.subr.mxu0 0.0
      %3452 = vmatpush1.xpose.msra.mxu0 0.0
      %3453 = vmatprep.subr.mxu0 0.0
      %3454 = vmatpush1.xpose.msra.mxu0 0.0
      %3455 = vmatprep.mubr.f32.mxu0 0.0
      %3456 = vmatmul.mubr.f32.gmra.mrb[0].mxu0 %v3386
      %v3457 = vpop.f32.mrb[0].mxu0
      %v3458 = vadd.f32 0.0, %v3457
      %v3459 = vpop.f32.mrb[0].mxu0
      %3460 = vmatprep.mubr.f32.mxu0 0.0
      %3461 = vmatmul.mubr.f32.gmra.mrb[0].mxu0 %v3389
      %v3462 = vpop.f32.mrb[0].mxu0
      %v3463 = vadd.f32 0.0, %v3462
      %v3464 = vpop.f32.mrb[0].mxu0
      %3465 = vdwg.mxu0
      %v3467 = vsel %vm1988, %v3154, 0
      %v3470 = vsel %vm1988, %v3222, 0
      %3472 = vmatprep.subr.mxu0 0.0
      %3473 = vmatpush1.xpose.msra.mxu0 %v3467
      %3474 = vmatprep.subr.mxu0 0.0
      %3475 = vmatpush1.xpose.msra.mxu0 %v3470
      %3476 = vmatprep.subr.mxu0 0.0
      %3477 = vmatpush1.xpose.msra.mxu0 0.0
      %3478 = vmatprep.subr.mxu0 0.0
      %3479 = vmatpush1.xpose.msra.mxu0 0.0
      %3480 = vmatprep.subr.mxu0 0.0
      %3481 = vmatpush1.xpose.msra.mxu0 0.0
      %3482 = vmatprep.subr.mxu0 0.0
      %3483 = vmatpush1.xpose.msra.mxu0 0.0
      %3484 = vmatprep.subr.mxu0 0.0
      %3485 = vmatpush1.xpose.msra.mxu0 0.0
      %3486 = vmatprep.subr.mxu0 0.0
      %3487 = vmatpush1.xpose.msra.mxu0 0.0
      %3488 = vmatprep.subr.mxu0 0.0
      %3489 = vmatpush1.xpose.msra.mxu0 0.0
      %3490 = vmatprep.subr.mxu0 0.0
      %3491 = vmatpush1.xpose.msra.mxu0 0.0
      %3492 = vmatprep.subr.mxu0 0.0
      %3493 = vmatpush1.xpose.msra.mxu0 0.0
      %3494 = vmatprep.subr.mxu0 0.0
      %3495 = vmatpush1.xpose.msra.mxu0 0.0
      %3496 = vmatprep.subr.mxu0 0.0
      %3497 = vmatpush1.xpose.msra.mxu0 0.0
      %3498 = vmatprep.subr.mxu0 0.0
      %3499 = vmatpush1.xpose.msra.mxu0 0.0
      %3500 = vmatprep.subr.mxu0 0.0
      %3501 = vmatpush1.xpose.msra.mxu0 0.0
      %3502 = vmatprep.subr.mxu0 0.0
      %3503 = vmatpush1.xpose.msra.mxu0 0.0
      %3504 = vmatprep.subr.mxu0 0.0
      %3505 = vmatpush1.xpose.msra.mxu0 0.0
      %3506 = vmatprep.subr.mxu0 0.0
      %3507 = vmatpush1.xpose.msra.mxu0 0.0
      %3508 = vmatprep.subr.mxu0 0.0
      %3509 = vmatpush1.xpose.msra.mxu0 0.0
      %3510 = vmatprep.subr.mxu0 0.0
      %3511 = vmatpush1.xpose.msra.mxu0 0.0
      %3512 = vmatprep.subr.mxu0 0.0
      %3513 = vmatpush1.xpose.msra.mxu0 0.0
      %3514 = vmatprep.subr.mxu0 0.0
      %3515 = vmatpush1.xpose.msra.mxu0 0.0
      %3516 = vmatprep.subr.mxu0 0.0
      %3517 = vmatpush1.xpose.msra.mxu0 0.0
      %3518 = vmatprep.subr.mxu0 0.0
      %3519 = vmatpush1.xpose.msra.mxu0 0.0
      %3520 = vmatprep.subr.mxu0 0.0
      %3521 = vmatpush1.xpose.msra.mxu0 0.0
      %3522 = vmatprep.subr.mxu0 0.0
      %3523 = vmatpush1.xpose.msra.mxu0 0.0
      %3524 = vmatprep.subr.mxu0 0.0
      %3525 = vmatpush1.xpose.msra.mxu0 0.0
      %3526 = vmatprep.subr.mxu0 0.0
      %3527 = vmatpush1.xpose.msra.mxu0 0.0
      %3528 = vmatprep.subr.mxu0 0.0
      %3529 = vmatpush1.xpose.msra.mxu0 0.0
      %3530 = vmatprep.subr.mxu0 0.0
      %3531 = vmatpush1.xpose.msra.mxu0 0.0
      %3532 = vmatprep.subr.mxu0 0.0
      %3533 = vmatpush1.xpose.msra.mxu0 0.0
      %3534 = vmatprep.subr.mxu0 0.0
      %3535 = vmatpush1.xpose.msra.mxu0 0.0
      %3536 = vmatprep.mubr.f32.mxu0 0.0
      %3537 = vmatmul.mubr.f32.gmra.mrb[0].mxu0 %v3467
      %v3538 = vpop.f32.mrb[0].mxu0
      %v3539 = vadd.f32 0.0, %v3538
      %v3540 = vpop.f32.mrb[0].mxu0
      %3541 = vmatprep.mubr.f32.mxu0 0.0
      %3542 = vmatmul.mubr.f32.gmra.mrb[0].mxu0 %v3470
      %v3543 = vpop.f32.mrb[0].mxu0
      %v3544 = vadd.f32 0.0, %v3543
      %v3545 = vpop.f32.mrb[0].mxu0
      %3546 = vdwg.mxu0
      %v3547 = vcombine.low %v3296, %v3458
      %v3548 = vcombine.high %v3296, %v3458
      %v3550 = vunpack.c.l.s4 1983009808
      %v3551 = vunpack.c.0.s8 %v3550
      %v3552 = vlaneseq
      %v3553 = vshrl.u32 %v3552, 7
      %v3554 = vsub.s32 %v3551, %v3553
      %v3555 = vrot.slane %v3547, %v3554
      %v3557 = vunpack.c.l.s4 1983009808
      %v3558 = vunpack.c.0.s8 %v3557
      %v3559 = vlaneseq
      %v3560 = vshrl.u32 %v3559, 7
      %v3561 = vsub.s32 %v3558, %v3560
      %v3562 = vrot.slane %v3548, %v3561
      %v3563 = vcombine.low %v3377, %v3539
      %v3564 = vcombine.high %v3377, %v3539
      %v3566 = vunpack.c.l.s4 1983009808
      %v3567 = vunpack.c.0.s8 %v3566
      %v3568 = vlaneseq
      %v3569 = vshrl.u32 %v3568, 7
      %v3570 = vsub.s32 %v3567, %v3569
      %v3571 = vrot.slane %v3563, %v3570
      %v3573 = vunpack.c.l.s4 1983009808
      %v3574 = vunpack.c.0.s8 %v3573
      %v3575 = vlaneseq
      %v3576 = vshrl.u32 %v3575, 7
      %v3577 = vsub.s32 %v3574, %v3576
      %v3578 = vrot.slane %v3564, %v3577
      %v3579 = vcombine.low %v3555, %v3571
      %v3580 = vcombine.high %v3555, %v3571
      %v3582 = vunpack.c.l.s4 1934713408
      %v3583 = vunpack.c.0.s8 %v3582
      %v3584 = vlaneseq
      %v3585 = vshrl.u32 %v3584, 7
      %v3586 = vsub.s32 %v3583, %v3585
      %v3587 = vrot.slane %v3579, %v3586
      %v3589 = vunpack.c.l.s4 1934713408
      %v3590 = vunpack.c.0.s8 %v3589
      %v3591 = vlaneseq
      %v3592 = vshrl.u32 %v3591, 7
      %v3593 = vsub.s32 %v3590, %v3592
      %v3594 = vrot.slane %v3580, %v3593
      %v3595 = vcombine.low %v3562, %v3578
      %v3596 = vcombine.high %v3562, %v3578
      %v3598 = vunpack.c.l.s4 1934713408
      %v3599 = vunpack.c.0.s8 %v3598
      %v3600 = vlaneseq
      %v3601 = vshrl.u32 %v3600, 7
      %v3602 = vsub.s32 %v3599, %v3601
      %v3603 = vrot.slane %v3595, %v3602
      %v3605 = vunpack.c.l.s4 1934713408
      %v3606 = vunpack.c.0.s8 %v3605
      %v3607 = vlaneseq
      %v3608 = vshrl.u32 %v3607, 7
      %v3609 = vsub.s32 %v3606, %v3608
      %v3610 = vrot.slane %v3596, %v3609
      %v3611 = vcombine.high %v3587, 0.0
      %v3612 = vcombine.high %v3594, 0.0
      %v3613 = vcombine.high %v3603, 0.0
      %v3614 = vcombine.high %v3610, 0.0
      %v3615 = vcombine.low %v3301, %v3463
      %v3616 = vcombine.high %v3301, %v3463
      %v3618 = vunpack.c.l.s4 1983009808
      %v3619 = vunpack.c.0.s8 %v3618
      %v3620 = vlaneseq
      %v3621 = vshrl.u32 %v3620, 7
      %v3622 = vsub.s32 %v3619, %v3621
      %v3623 = vrot.slane %v3615, %v3622
      %v3625 = vunpack.c.l.s4 1983009808
      %v3626 = vunpack.c.0.s8 %v3625
      %v3627 = vlaneseq
      %v3628 = vshrl.u32 %v3627, 7
      %v3629 = vsub.s32 %v3626, %v3628
      %v3630 = vrot.slane %v3616, %v3629
      %v3631 = vcombine.low %v3382, %v3544
      %v3632 = vcombine.high %v3382, %v3544
      %v3634 = vunpack.c.l.s4 1983009808
      %v3635 = vunpack.c.0.s8 %v3634
      %v3636 = vlaneseq
      %v3637 = vshrl.u32 %v3636, 7
      %v3638 = vsub.s32 %v3635, %v3637
      %v3639 = vrot.slane %v3631, %v3638
      %v3641 = vunpack.c.l.s4 1983009808
      %v3642 = vunpack.c.0.s8 %v3641
      %v3643 = vlaneseq
      %v3644 = vshrl.u32 %v3643, 7
      %v3645 = vsub.s32 %v3642, %v3644
      %v3646 = vrot.slane %v3632, %v3645
      %v3647 = vcombine.low %v3623, %v3639
      %v3648 = vcombine.high %v3623, %v3639
      %v3650 = vunpack.c.l.s4 1934713408
      %v3651 = vunpack.c.0.s8 %v3650
      %v3652 = vlaneseq
      %v3653 = vshrl.u32 %v3652, 7
      %v3654 = vsub.s32 %v3651, %v3653
      %v3655 = vrot.slane %v3647, %v3654
      %v3657 = vunpack.c.l.s4 1934713408
      %v3658 = vunpack.c.0.s8 %v3657
      %v3659 = vlaneseq
      %v3660 = vshrl.u32 %v3659, 7
      %v3661 = vsub.s32 %v3658, %v3660
      %v3662 = vrot.slane %v3648, %v3661
      %v3663 = vcombine.low %v3630, %v3646
      %v3664 = vcombine.high %v3630, %v3646
      %v3666 = vunpack.c.l.s4 1934713408
      %v3667 = vunpack.c.0.s8 %v3666
      %v3668 = vlaneseq
      %v3669 = vshrl.u32 %v3668, 7
      %v3670 = vsub.s32 %v3667, %v3669
      %v3671 = vrot.slane %v3663, %v3670
      %v3672 = vcombine.high %v3655, 0.0
      %v3673 = vcombine.high %v3662, 0.0
      %v3674 = vcombine.high %v3671, 0.0
      %v3676 = vunpack.c.l.s4 1934713408
      %v3677 = vunpack.c.0.s8 %v3676
      %v3678 = vlaneseq
      %v3679 = vshrl.u32 %v3678, 7
      %v3680 = vsub.s32 %v3677, %v3679
      %v3681 = vrot.slane %v3664, %v3680
      %3683 = vrot.lane.b32.xlu0 %v3611, 15
      %v3684 = vpop.permute.xlu0 %3683
      %3687 = vrot.lane.b32.xlu0 %v3594, 30
      %v3688 = vpop.permute.xlu0 %3687
      %3691 = vrot.lane.b32.xlu0 %v3612, 45
      %v3692 = vpop.permute.xlu0 %3691
      %3695 = vrot.lane.b32.xlu0 %v3603, 60
      %v3696 = vpop.permute.xlu0 %3695
      %3699 = vrot.lane.b32.xlu0 %v3613, 75
      %v3700 = vpop.permute.xlu0 %3699
      %3703 = vrot.lane.b32.xlu0 %v3610, 90
      %v3704 = vpop.permute.xlu0 %3703
      %3707 = vrot.lane.b32.xlu0 %v3614, 105
      %v3708 = vpop.permute.xlu0 %3707
      %3711 = vrot.lane.b32.xlu0 %v3655, 120
      %v3712 = vpop.permute.xlu0 %3711
      %3715 = vrot.lane.b32.xlu0 %v3672, 7
      %v3716 = vpop.permute.xlu0 %3715
      %3719 = vrot.lane.b32.xlu0 %v3662, 22
      %v3720 = vpop.permute.xlu0 %3719
      %3723 = vrot.lane.b32.xlu0 %v3673, 37
      %v3724 = vpop.permute.xlu0 %3723
      %3727 = vrot.lane.b32.xlu0 %v3671, 52
      %v3728 = vpop.permute.xlu0 %3727
      %3731 = vrot.lane.b32.xlu0 %v3674, 67
      %v3732 = vpop.permute.xlu0 %3731
      %3735 = vrot.lane.b32.xlu0 %v3681, 82
      %v3736 = vpop.permute.xlu0 %3735
      %v3738 = vsel %vm1988, %v3587, %v3684
      %v3739 = vsel %vm1990, %v3738, %v3688
      %v3740 = vsel %vm1992, %v3739, %v3692
      %v3741 = vsel %vm1994, %v3740, %v3696
      %v3742 = vsel %vm1996, %v3741, %v3700
      %v3743 = vsel %vm1998, %v3742, %v3704
      %v3744 = vsel %vm2000, %v3743, %v3708
      %v3745 = vsel %vm2002, %v3744, %v3712
      %v3746 = vsel %vm2004, %v3712, %v3716
      %v3747 = vsel %vm2006, %v3746, %v3720
      %v3748 = vsel %vm2008, %v3747, %v3724
      %v3749 = vsel %vm2010, %v3748, %v3728
      %v3750 = vsel %vm2012, %v3749, %v3732
      %v3751 = vsel %vm2014, %v3750, %v3736
      %vm3752 = vcmask 793600
      %v3753 = vsel %vm3752, %v3751, 0.0
      %v3754 = vld [vmem:[%s8] sm:$0xff]
      %v3755 = vld [vmem:[%s8 + $0x8] sm:$0xff]
      %v3756 = vld [vmem:[%s8 + $0x10] sm:$0xff]
      %v3757 = vld [vmem:[%s8 + $0x18] sm:$0xff]
      %v3758 = vld [vmem:[%s8 + $0x20] sm:$0xff]
      %v3759 = vld [vmem:[%s8 + $0x28] sm:$0xff]
      %v3760 = vld [vmem:[%s8 + $0x30] sm:$0xff]
      %v3761 = vld [vmem:[%s8 + $0x38] sm:$0xff]
      %v3762 = vld [vmem:[%s8 + $0x40] sm:$0xff]
      %v3763 = vld [vmem:[%s8 + $0x48] sm:$0xff]
      %v3764 = vld [vmem:[%s8 + $0x50] sm:$0xff]
      %v3765 = vld [vmem:[%s8 + $0x58] sm:$0xff]
      %v3766 = vld [vmem:[%s8 + $0x60] sm:$0xff]
      %v3767 = vld [vmem:[%s8 + $0x68] sm:$0xff]
      %v3768 = vld [vmem:[%s8 + $0x70] sm:$0xff]
      %v3769 = vld [vmem:[%s8 + $0x78] sm:$0xff]
      %v3770 = vld [vmem:[%s8 + $0x80] sm:$0xff]
      %v3771 = vld [vmem:[%s8 + $0x88] sm:$0xff]
      %v3772 = vld [vmem:[%s8 + $0x90] sm:$0xff]
      %v3773 = vld [vmem:[%s8 + $0x98] sm:$0xff]
      %v3774 = vld [vmem:[%s8 + $0xa0] sm:$0xff]
      %v3775 = vld [vmem:[%s8 + $0xa8] sm:$0xff]
      %v3776 = vld [vmem:[%s8 + $0xb0] sm:$0xff]
      %v3777 = vld [vmem:[%s8 + $0xb8] sm:$0xff]
      %v3778 = vld [vmem:[%s8 + $0xc0] sm:$0xff]
      %v3779 = vld [vmem:[%s8 + $0xc8] sm:$0xff]
      %v3780 = vld [vmem:[%s8 + $0xd0] sm:$0xff]
      %v3781 = vld [vmem:[%s8 + $0xd8] sm:$0xff]
      %v3782 = vld [vmem:[%s8 + $0xe0] sm:$0xff]
      %v3783 = vld [vmem:[%s8 + $0xe8] sm:$0xff]
      %v3784 = vld [vmem:[%s8 + $0xf0] sm:$0xff]
      %v3785 = vld [vmem:[%s8 + $0xf8] sm:$0xff]
      %v3786 = vld [vmem:[%s8 + $0x100] sm:$0xff]
      %v3787 = vld [vmem:[%s8 + $0x108] sm:$0xff]
      %v3788 = vld [vmem:[%s8 + $0x110] sm:$0xff]
      %v3789 = vld [vmem:[%s8 + $0x118] sm:$0xff]
      %v3790 = vld [vmem:[%s8 + $0x120] sm:$0xff]
      %v3791 = vld [vmem:[%s8 + $0x128] sm:$0xff]
      %v3792 = vld [vmem:[%s8 + $0x130] sm:$0xff]
      %v3793 = vld [vmem:[%s8 + $0x138] sm:$0xff]
      %v3794 = vld [vmem:[%s8 + $0x140] sm:$0xff]
      %v3795 = vld [vmem:[%s8 + $0x148] sm:$0xff]
      %v3796 = vld [vmem:[%s8 + $0x150] sm:$0xff]
      %v3797 = vld [vmem:[%s8 + $0x158] sm:$0xff]
      %v3798 = vld [vmem:[%s8 + $0x160] sm:$0xff]
      %v3799 = vld [vmem:[%s8 + $0x168] sm:$0xff]
      %v3800 = vld [vmem:[%s8 + $0x170] sm:$0xff]
      %v3801 = vld [vmem:[%s8 + $0x178] sm:$0xff]
      %v3802 = vld [vmem:[%s8 + $0x180] sm:$0xff]
      %v3803 = vld [vmem:[%s8 + $0x188] sm:$0xff]
      %v3804 = vld [vmem:[%s8 + $0x190] sm:$0xff]
      %v3805 = vld [vmem:[%s8 + $0x198] sm:$0xff]
      %v3806 = vld [vmem:[%s8 + $0x1a0] sm:$0xff]
      %v3807 = vld [vmem:[%s8 + $0x1a8] sm:$0xff]
      %v3808 = vld [vmem:[%s8 + $0x1b0] sm:$0xff]
      %v3809 = vld [vmem:[%s8 + $0x1b8] sm:$0xff]
      %v3810 = vld [vmem:[%s8 + $0x1c0] sm:$0xff]
      %v3811 = vld [vmem:[%s8 + $0x1c8] sm:$0xff]
      %v3812 = vld [vmem:[%s8 + $0x1d0] sm:$0xff]
      %v3813 = vld [vmem:[%s8 + $0x1d8] sm:$0xff]
      %v3814 = vld [vmem:[%s8 + $0x1e0] sm:$0xff]
      %v3815 = vld [vmem:[%s8 + $0x1e8] sm:$0xff]
      %v3816 = vld [vmem:[%s8 + $0x1f0] sm:$0xff]
      %v3817 = vld [vmem:[%s8 + $0x1f8] sm:$0xff]
      %v3818 = vld [vmem:[%s9] sm:$0x3]
      %v3820 = vlaneseq
      %v3821 = vshrl.u32 %v3820, 7
      %v3822 = vsub.s32 0, %v3821
      %v3823 = vrot.slane %v3818, %v3822
      %v3824 = vlaneseq
      %v3825 = vshrl.u32 %v3824, 7
      %v3826 = vsub.s32 1, %v3825
      %v3827 = vrot.slane %v3818, %v3826
      %3830 = vmatprep.subr.mxu0 %v3755
      %3831 = vmatpush1.xpose.msra.mxu0 %v3754
      %3832 = vmatprep.subr.mxu0 %v3757
      %3833 = vmatpush1.xpose.msra.mxu0 %v3756
      %3834 = vmatprep.subr.mxu0 %v3759
      %3835 = vmatpush1.xpose.msra.mxu0 %v3758
      %3836 = vmatprep.subr.mxu0 %v3761
      %3837 = vmatpush1.xpose.msra.mxu0 %v3760
      %3838 = vmatprep.subr.mxu0 %v3763
      %3839 = vmatpush1.xpose.msra.mxu0 %v3762
      %3840 = vmatprep.subr.mxu0 %v3765
      %3841 = vmatpush1.xpose.msra.mxu0 %v3764
      %3842 = vmatprep.subr.mxu0 %v3767
      %3843 = vmatpush1.xpose.msra.mxu0 %v3766
      %3844 = vmatprep.subr.mxu0 %v3769
      %3845 = vmatpush1.xpose.msra.mxu0 %v3768
      %3846 = vmatprep.subr.mxu0 %v3771
      %3847 = vmatpush1.xpose.msra.mxu0 %v3770
      %3848 = vmatprep.subr.mxu0 %v3773
      %3849 = vmatpush1.xpose.msra.mxu0 %v3772
      %3850 = vmatprep.subr.mxu0 %v3775
      %3851 = vmatpush1.xpose.msra.mxu0 %v3774
      %3852 = vmatprep.subr.mxu0 %v3777
      %3853 = vmatpush1.xpose.msra.mxu0 %v3776
      %3854 = vmatprep.subr.mxu0 %v3779
      %3855 = vmatpush1.xpose.msra.mxu0 %v3778
      %3856 = vmatprep.subr.mxu0 %v3781
      %3857 = vmatpush1.xpose.msra.mxu0 %v3780
      %3858 = vmatprep.subr.mxu0 %v3783
      %3859 = vmatpush1.xpose.msra.mxu0 %v3782
      %3860 = vmatprep.subr.mxu0 %v3785
      %3861 = vmatpush1.xpose.msra.mxu0 %v3784
      %3862 = vmatprep.subr.mxu0 %v3787
      %3863 = vmatpush1.xpose.msra.mxu0 %v3786
      %3864 = vmatprep.subr.mxu0 %v3789
      %3865 = vmatpush1.xpose.msra.mxu0 %v3788
      %3866 = vmatprep.subr.mxu0 %v3791
      %3867 = vmatpush1.xpose.msra.mxu0 %v3790
      %3868 = vmatprep.subr.mxu0 %v3793
      %3869 = vmatpush1.xpose.msra.mxu0 %v3792
      %3870 = vmatprep.subr.mxu0 %v3795
      %3871 = vmatpush1.xpose.msra.mxu0 %v3794
      %3872 = vmatprep.subr.mxu0 %v3797
      %3873 = vmatpush1.xpose.msra.mxu0 %v3796
      %3874 = vmatprep.subr.mxu0 %v3799
      %3875 = vmatpush1.xpose.msra.mxu0 %v3798
      %3876 = vmatprep.subr.mxu0 %v3801
      %3877 = vmatpush1.xpose.msra.mxu0 %v3800
      %3878 = vmatprep.subr.mxu0 %v3803
      %3879 = vmatpush1.xpose.msra.mxu0 %v3802
      %3880 = vmatprep.subr.mxu0 %v3805
      %3881 = vmatpush1.xpose.msra.mxu0 %v3804
      %3882 = vmatprep.subr.mxu0 %v3807
      %3883 = vmatpush1.xpose.msra.mxu0 %v3806
      %3884 = vmatprep.subr.mxu0 %v3809
      %3885 = vmatpush1.xpose.msra.mxu0 %v3808
      %3886 = vmatprep.subr.mxu0 %v3811
      %3887 = vmatpush1.xpose.msra.mxu0 %v3810
      %3888 = vmatprep.subr.mxu0 %v3813
      %3889 = vmatpush1.xpose.msra.mxu0 %v3812
      %3890 = vmatprep.subr.mxu0 %v3815
      %3891 = vmatpush1.xpose.msra.mxu0 %v3814
      %3892 = vmatprep.subr.mxu0 %v3817
      %3893 = vmatpush1.xpose.msra.mxu0 %v3816
      %3894 = vmatprep.mubr.f32.mxu0 %v3753
      %3895 = vmatmul.mubr.f32.gmra.mrb[0].mxu0 %v3745
      %v3896 = vpop.f32.mrb[0].mxu0
      %v3897 = vadd.f32 %v3823, %v3896
      %v3898 = vpop.f32.mrb[0].mxu0
      %v3899 = vadd.f32 %v3827, %v3898
      %3900 = vdwg.mxu0
      %v3901 = vadd.f32 %v3897, %v3745
      %v3902 = vadd.f32 %v3899, %v3753
      %v3903 = vmax.f32 %v3901, 0.0
      %v3904 = vmax.f32 %v3902, 0.0
      %v3905 = vld [vmem:[%s10] sm:$0xf]
      %v3907 = vsel %vm874, %v3905, 0
      %v3910 = vsel %vm878, %v3903, 0
      %v3913 = vsel %vm878, %v3904, 0
      %3915 = vmatprep.subr.mxu0 %v3913
      %3916 = vmatpush1.msra.mxu0 %v3910
      %3917 = vmatprep.subr.mxu0 0.0
      %3918 = vmatpush1.msra.mxu0 0.0
      %3919 = vmatprep.subr.mxu0 0.0
      %3920 = vmatpush1.msra.mxu0 0.0
      %3921 = vmatprep.subr.mxu0 0.0
      %3922 = vmatpush1.msra.mxu0 0.0
      %3923 = vmatprep.subr.mxu0 0.0
      %3924 = vmatpush1.msra.mxu0 0.0
      %3925 = vmatprep.subr.mxu0 0.0
      %3926 = vmatpush1.msra.mxu0 0.0
      %3927 = vmatprep.subr.mxu0 0.0
      %3928 = vmatpush1.msra.mxu0 0.0
      %3929 = vmatprep.subr.mxu0 0.0
      %3930 = vmatpush1.msra.mxu0 0.0
      %3931 = vmatprep.subr.mxu0 0.0
      %3932 = vmatpush1.msra.mxu0 0.0
      %3933 = vmatprep.subr.mxu0 0.0
      %3934 = vmatpush1.msra.mxu0 0.0
      %3935 = vmatprep.subr.mxu0 0.0
      %3936 = vmatpush1.msra.mxu0 0.0
      %3937 = vmatprep.subr.mxu0 0.0
      %3938 = vmatpush1.msra.mxu0 0.0
      %3939 = vmatprep.subr.mxu0 0.0
      %3940 = vmatpush1.msra.mxu0 0.0
      %3941 = vmatprep.subr.mxu0 0.0
      %3942 = vmatpush1.msra.mxu0 0.0
      %3943 = vmatprep.subr.mxu0 0.0
      %3944 = vmatpush1.msra.mxu0 0.0
      %3945 = vmatprep.subr.mxu0 0.0
      %3946 = vmatpush1.msra.mxu0 0.0
      %3947 = vmatprep.subr.mxu0 0.0
      %3948 = vmatpush1.msra.mxu0 0.0
      %3949 = vmatprep.subr.mxu0 0.0
      %3950 = vmatpush1.msra.mxu0 0.0
      %3951 = vmatprep.subr.mxu0 0.0
      %3952 = vmatpush1.msra.mxu0 0.0
      %3953 = vmatprep.subr.mxu0 0.0
      %3954 = vmatpush1.msra.mxu0 0.0
      %3955 = vmatprep.subr.mxu0 0.0
      %3956 = vmatpush1.msra.mxu0 0.0
      %3957 = vmatprep.subr.mxu0 0.0
      %3958 = vmatpush1.msra.mxu0 0.0
      %3959 = vmatprep.subr.mxu0 0.0
      %3960 = vmatpush1.msra.mxu0 0.0
      %3961 = vmatprep.subr.mxu0 0.0
      %3962 = vmatpush1.msra.mxu0 0.0
      %3963 = vmatprep.subr.mxu0 0.0
      %3964 = vmatpush1.msra.mxu0 0.0
      %3965 = vmatprep.subr.mxu0 0.0
      %3966 = vmatpush1.msra.mxu0 0.0
      %3967 = vmatprep.subr.mxu0 0.0
      %3968 = vmatpush1.msra.mxu0 0.0
      %3969 = vmatprep.subr.mxu0 0.0
      %3970 = vmatpush1.msra.mxu0 0.0
      %3971 = vmatprep.subr.mxu0 0.0
      %3972 = vmatpush1.msra.mxu0 0.0
      %3973 = vmatprep.subr.mxu0 0.0
      %3974 = vmatpush1.msra.mxu0 0.0
      %3975 = vmatprep.subr.mxu0 0.0
      %3976 = vmatpush1.msra.mxu0 0.0
      %3977 = vmatprep.subr.mxu0 0.0
      %3978 = vmatpush1.msra.mxu0 0.0
      %3979 = vmatprep.mubr.f32.mxu0 0.0
      %3980 = vmatmul.mubr.f32.gmra.mrb[0].mxu0 %v3907
      %v3981 = vpop.f32.mrb[0].mxu0
      %v3982 = vadd.f32 0.0, %v3981
      %v3983 = vpop.f32.mrb[0].mxu0
      %v3984 = vadd.f32 0.0, %v3983
      %3985 = vdwg.mxu0
      %v3986 = vsel %vm878, %v3982, -inf
      %v3987 = vrot.slane %v3986, 4
      %v3988 = vmax.f32 %v3986, %v3987
      %v3989 = vrot.slane %v3988, 2
      %v3990 = vmax.f32 %v3988, %v3989
      %v3991 = vrot.slane %v3990, 1
      %v3992 = vmax.f32 %v3990, %v3991
      %v3993 = vsel %vm878, %v3984, -inf
      %v3994 = vrot.slane %v3993, 4
      %v3995 = vmax.f32 %v3993, %v3994
      %v3996 = vrot.slane %v3995, 2
      %v3997 = vmax.f32 %v3995, %v3996
      %v3998 = vrot.slane %v3997, 1
      %v3999 = vmax.f32 %v3997, %v3998
      %v4000 = vsub.f32 %v3982, %v3992
      %v4001 = vsub.f32 %v3984, %v3999
      %v4002 = vmul.f32 %v4000, 1.442695
      %v4003 = vpow.pop %v4002
      %v4004 = vmul.f32 %v4001, 1.442695
      %v4005 = vpow.pop %v4004
      %v4006 = vsel %vm878, %v4003, 0.0
      %v4007 = vrot.slane %v4006, 4
      %v4008 = vadd.f32 %v4006, %v4007
      %v4009 = vrot.slane %v4008, 2
      %v4010 = vadd.f32 %v4008, %v4009
      %v4011 = vrot.slane %v4010, 1
      %v4012 = vadd.f32 %v4010, %v4011
      %v4013 = vsel %vm878, %v4005, 0.0
      %v4014 = vrot.slane %v4013, 4
      %v4015 = vadd.f32 %v4013, %v4014
      %v4016 = vrot.slane %v4015, 2
      %v4017 = vadd.f32 %v4015, %v4016
      %v4018 = vrot.slane %v4017, 1
      %v4019 = vadd.f32 %v4017, %v4018
      %v4020 = vrcp.pop %v4012
      %v4021 = vrcp.pop %v4019
      %v4022 = vmul.f32 %v4003, %v4020
      %v4023 = vmul.f32 %v4005, %v4021
      %v4026 = vcombine.low %v4022, %v4023
      %4028 = vst [vmem:[%s641] sm:$0xff] %v4026
      %v4029 = vld [vmem:[%s12] sm:$0xf]
      %v4030 = vld [vmem:[%s631] sm:$0xff]
      %v4031 = vld [vmem:[%s631 + $0x8] sm:$0xff]
      %v4032 = vld [vmem:[%s631 + $0x10] sm:$0xff]
      %v4033 = vld [vmem:[%s631 + $0x18] sm:$0xff]
      %v4034 = vld [vmem:[%s631 + $0x20] sm:$0xf]
      %v4035 = vld [vmem:[%s13] sm:$0xf]
      %4037 = vset.pattern.permute.xlu0 0
      %4038 = vperm.xlu0 %4037, %v4035
      %v4039 = vpop.permute.xlu0 %4038
      %vm4041 = vcmask 293888
      %v4043 = vsel %vm4041, %v4029, 0
      %v4046 = vsel %vm878, %v4034, 0
      %4048 = vmatprep.subr.mxu0 0.0
      %4049 = vmatpush1.msra.mxu0 %v4030
      %4050 = vmatprep.subr.mxu0 0.0
      %4051 = vmatpush1.msra.mxu0 %v4031
      %4052 = vmatprep.subr.mxu0 0.0
      %4053 = vmatpush1.msra.mxu0 %v4032
      %4054 = vmatprep.subr.mxu0 0.0
      %4055 = vmatpush1.msra.mxu0 %v4033
      %4056 = vmatprep.subr.mxu0 0.0
      %4057 = vmatpush1.msra.mxu0 %v4046
      %4058 = vmatprep.subr.mxu0 0.0
      %4059 = vmatpush1.msra.mxu0 0.0
      %4060 = vmatprep.subr.mxu0 0.0
      %4061 = vmatpush1.msra.mxu0 0.0
      %4062 = vmatprep.subr.mxu0 0.0
      %4063 = vmatpush1.msra.mxu0 0.0
      %4064 = vmatprep.subr.mxu0 0.0
      %4065 = vmatpush1.msra.mxu0 0.0
      %4066 = vmatprep.subr.mxu0 0.0
      %4067 = vmatpush1.msra.mxu0 0.0
      %4068 = vmatprep.subr.mxu0 0.0
      %4069 = vmatpush1.msra.mxu0 0.0
      %4070 = vmatprep.subr.mxu0 0.0
      %4071 = vmatpush1.msra.mxu0 0.0
      %4072 = vmatprep.subr.mxu0 0.0
      %4073 = vmatpush1.msra.mxu0 0.0
      %4074 = vmatprep.subr.mxu0 0.0
      %4075 = vmatpush1.msra.mxu0 0.0
      %4076 = vmatprep.subr.mxu0 0.0
      %4077 = vmatpush1.msra.mxu0 0.0
      %4078 = vmatprep.subr.mxu0 0.0
      %4079 = vmatpush1.msra.mxu0 0.0
      %4080 = vmatprep.subr.mxu0 0.0
      %4081 = vmatpush1.msra.mxu0 0.0
      %4082 = vmatprep.subr.mxu0 0.0
      %4083 = vmatpush1.msra.mxu0 0.0
      %4084 = vmatprep.subr.mxu0 0.0
      %4085 = vmatpush1.msra.mxu0 0.0
      %4086 = vmatprep.subr.mxu0 0.0
      %4087 = vmatpush1.msra.mxu0 0.0
      %4088 = vmatprep.subr.mxu0 0.0
      %4089 = vmatpush1.msra.mxu0 0.0
      %4090 = vmatprep.subr.mxu0 0.0
      %4091 = vmatpush1.msra.mxu0 0.0
      %4092 = vmatprep.subr.mxu0 0.0
      %4093 = vmatpush1.msra.mxu0 0.0
      %4094 = vmatprep.subr.mxu0 0.0
      %4095 = vmatpush1.msra.mxu0 0.0
      %4096 = vmatprep.subr.mxu0 0.0
      %4097 = vmatpush1.msra.mxu0 0.0
      %4098 = vmatprep.subr.mxu0 0.0
      %4099 = vmatpush1.msra.mxu0 0.0
      %4100 = vmatprep.subr.mxu0 0.0
      %4101 = vmatpush1.msra.mxu0 0.0
      %4102 = vmatprep.subr.mxu0 0.0
      %4103 = vmatpush1.msra.mxu0 0.0
      %4104 = vmatprep.subr.mxu0 0.0
      %4105 = vmatpush1.msra.mxu0 0.0
      %4106 = vmatprep.subr.mxu0 0.0
      %4107 = vmatpush1.msra.mxu0 0.0
      %4108 = vmatprep.subr.mxu0 0.0
      %4109 = vmatpush1.msra.mxu0 0.0
      %4110 = vmatprep.subr.mxu0 0.0
      %4111 = vmatpush1.msra.mxu0 0.0
      %4112 = vmatprep.mubr.f32.mxu0 0.0
      %4113 = vmatmul.mubr.f32.gmra.mrb[0].mxu0 %v4043
      %v4114 = vpop.f32.mrb[0].mxu0
      %v4115 = vadd.f32 %v4039, %v4114
      %v4116 = vpop.f32.mrb[0].mxu0
      %4117 = vdwg.mxu0
      %4119 = vrot.lane.b32.xlu0 %v4115, 121
      %v4120 = vpop.permute.xlu0 %4119
      %4122 = vrot.lane.b32.xlu0 %v4115, 114
      %v4123 = vpop.permute.xlu0 %4122
      %4125 = vrot.lane.b32.xlu0 %v4115, 107
      %v4126 = vpop.permute.xlu0 %4125
      %4128 = vrot.lane.b32.xlu0 %v4115, 100
      %v4129 = vpop.permute.xlu0 %4128
      %4131 = vrot.lane.b32.xlu0 %v4115, 93
      %v4132 = vpop.permute.xlu0 %4131
      %4133 = vrot.lane.b32.xlu0 %v4115, 86
      %v4134 = vpop.permute.xlu0 %4133
      %v4136 = vcombine.low %v4115, %v4123
      %v4138 = vunpack.c.l.s4 1983009808
      %v4139 = vunpack.c.0.s8 %v4138
      %v4140 = vlaneseq
      %v4141 = vshrl.u32 %v4140, 7
      %v4142 = vsub.s32 %v4139, %v4141
      %v4143 = vrot.slane %v4136, %v4142
      %v4144 = vcombine.low %v4120, %v4126
      %v4146 = vunpack.c.l.s4 1983009808
      %v4147 = vunpack.c.0.s8 %v4146
      %v4148 = vlaneseq
      %v4149 = vshrl.u32 %v4148, 7
      %v4150 = vsub.s32 %v4147, %v4149
      %v4151 = vrot.slane %v4144, %v4150
      %v4152 = vcombine.low %v4129, %v4134
      %v4154 = vunpack.c.l.s4 1983009808
      %v4155 = vunpack.c.0.s8 %v4154
      %v4156 = vlaneseq
      %v4157 = vshrl.u32 %v4156, 7
      %v4158 = vsub.s32 %v4155, %v4157
      %v4159 = vrot.slane %v4152, %v4158
      %v4162 = vunpack.c.l.s4 1983009808
      %v4163 = vunpack.c.0.s8 %v4162
      %v4164 = vlaneseq
      %v4165 = vshrl.u32 %v4164, 7
      %v4166 = vsub.s32 %v4163, %v4165
      %v4167 = vrot.slane %v4132, %v4166
      %v4168 = vcombine.low %v4143, %v4151
      %v4169 = vcombine.high %v4143, %v4151
      %v4171 = vunpack.c.l.s4 1934713408
      %v4172 = vunpack.c.0.s8 %v4171
      %v4173 = vlaneseq
      %v4174 = vshrl.u32 %v4173, 7
      %v4175 = vsub.s32 %v4172, %v4174
      %v4176 = vrot.slane %v4168, %v4175
      %v4178 = vunpack.c.l.s4 1934713408
      %v4179 = vunpack.c.0.s8 %v4178
      %v4180 = vlaneseq
      %v4181 = vshrl.u32 %v4180, 7
      %v4182 = vsub.s32 %v4179, %v4181
      %v4183 = vrot.slane %v4169, %v4182
      %v4184 = vcombine.low %v4159, %v4167
      %v4185 = vcombine.high %v4159, %v4167
      %v4187 = vunpack.c.l.s4 1934713408
      %v4188 = vunpack.c.0.s8 %v4187
      %v4189 = vlaneseq
      %v4190 = vshrl.u32 %v4189, 7
      %v4191 = vsub.s32 %v4188, %v4190
      %v4192 = vrot.slane %v4184, %v4191
      %v4194 = vunpack.c.l.s4 1934713408
      %v4195 = vunpack.c.0.s8 %v4194
      %v4196 = vlaneseq
      %v4197 = vshrl.u32 %v4196, 7
      %v4198 = vsub.s32 %v4195, %v4197
      %v4199 = vrot.slane %v4185, %v4198
      %v4200 = vcombine.low %v4176, %v4192
      %v4201 = vcombine.high %v4176, %v4192
      %v4202 = vcombine.low %v4183, %v4199
      %v4203 = vcombine.high %v4183, %v4199
      %v4205 = vsel %vm2004, %v4200, 0
      %4207 = vmatprep.subr.mxu0 0.0
      %4208 = vmatpush1.xpose.msra.mxu0 %v4205
      %4209 = vmatprep.subr.mxu0 0.0
      %4210 = vmatpush1.xpose.msra.mxu0 0.0
      %4211 = vmatprep.subr.mxu0 0.0
      %4212 = vmatpush1.xpose.msra.mxu0 0.0
      %4213 = vmatprep.subr.mxu0 0.0
      %4214 = vmatpush1.xpose.msra.mxu0 0.0
      %4215 = vmatprep.subr.mxu0 0.0
      %4216 = vmatpush1.xpose.msra.mxu0 0.0
      %4217 = vmatprep.subr.mxu0 0.0
      %4218 = vmatpush1.xpose.msra.mxu0 0.0
      %4219 = vmatprep.subr.mxu0 0.0
      %4220 = vmatpush1.xpose.msra.mxu0 0.0
      %4221 = vmatprep.subr.mxu0 0.0
      %4222 = vmatpush1.xpose.msra.mxu0 0.0
      %4223 = vmatprep.subr.mxu0 0.0
      %4224 = vmatpush1.xpose.msra.mxu0 0.0
      %4225 = vmatprep.subr.mxu0 0.0
      %4226 = vmatpush1.xpose.msra.mxu0 0.0
      %4227 = vmatprep.subr.mxu0 0.0
      %4228 = vmatpush1.xpose.msra.mxu0 0.0
      %4229 = vmatprep.subr.mxu0 0.0
      %4230 = vmatpush1.xpose.msra.mxu0 0.0
      %4231 = vmatprep.subr.mxu0 0.0
      %4232 = vmatpush1.xpose.msra.mxu0 0.0
      %4233 = vmatprep.subr.mxu0 0.0
      %4234 = vmatpush1.xpose.msra.mxu0 0.0
      %4235 = vmatprep.subr.mxu0 0.0
      %4236 = vmatpush1.xpose.msra.mxu0 0.0
      %4237 = vmatprep.subr.mxu0 0.0
      %4238 = vmatpush1.xpose.msra.mxu0 0.0
      %4239 = vmatprep.subr.mxu0 0.0
      %4240 = vmatpush1.xpose.msra.mxu0 0.0
      %4241 = vmatprep.subr.mxu0 0.0
      %4242 = vmatpush1.xpose.msra.mxu0 0.0
      %4243 = vmatprep.subr.mxu0 0.0
      %4244 = vmatpush1.xpose.msra.mxu0 0.0
      %4245 = vmatprep.subr.mxu0 0.0
      %4246 = vmatpush1.xpose.msra.mxu0 0.0
      %4247 = vmatprep.subr.mxu0 0.0
      %4248 = vmatpush1.xpose.msra.mxu0 0.0
      %4249 = vmatprep.subr.mxu0 0.0
      %4250 = vmatpush1.xpose.msra.mxu0 0.0
      %4251 = vmatprep.subr.mxu0 0.0
      %4252 = vmatpush1.xpose.msra.mxu0 0.0
      %4253 = vmatprep.subr.mxu0 0.0
      %4254 = vmatpush1.xpose.msra.mxu0 0.0
      %4255 = vmatprep.subr.mxu0 0.0
      %4256 = vmatpush1.xpose.msra.mxu0 0.0
      %4257 = vmatprep.subr.mxu0 0.0
      %4258 = vmatpush1.xpose.msra.mxu0 0.0
      %4259 = vmatprep.subr.mxu0 0.0
      %4260 = vmatpush1.xpose.msra.mxu0 0.0
      %4261 = vmatprep.subr.mxu0 0.0
      %4262 = vmatpush1.xpose.msra.mxu0 0.0
      %4263 = vmatprep.subr.mxu0 0.0
      %4264 = vmatpush1.xpose.msra.mxu0 0.0
      %4265 = vmatprep.subr.mxu0 0.0
      %4266 = vmatpush1.xpose.msra.mxu0 0.0
      %4267 = vmatprep.subr.mxu0 0.0
      %4268 = vmatpush1.xpose.msra.mxu0 0.0
      %4269 = vmatprep.subr.mxu0 0.0
      %4270 = vmatpush1.xpose.msra.mxu0 0.0
      %4271 = vmatprep.mubr.f32.mxu0 0.0
      %4272 = vmatmul.mubr.f32.gmra.mrb[0].mxu0 %v4205
      %v4273 = vpop.f32.mrb[0].mxu0
      %v4274 = vadd.f32 0.0, %v4273
      %v4275 = vpop.f32.mrb[0].mxu0
      %4276 = vdwg.mxu0
      %v4278 = vsel %vm2004, %v4201, 0
      %4280 = vmatprep.subr.mxu0 0.0
      %4281 = vmatpush1.xpose.msra.mxu0 %v4278
      %4282 = vmatprep.subr.mxu0 0.0
      %4283 = vmatpush1.xpose.msra.mxu0 0.0
      %4284 = vmatprep.subr.mxu0 0.0
      %4285 = vmatpush1.xpose.msra.mxu0 0.0
      %4286 = vmatprep.subr.mxu0 0.0
      %4287 = vmatpush1.xpose.msra.mxu0 0.0
      %4288 = vmatprep.subr.mxu0 0.0
      %4289 = vmatpush1.xpose.msra.mxu0 0.0
      %4290 = vmatprep.subr.mxu0 0.0
      %4291 = vmatpush1.xpose.msra.mxu0 0.0
      %4292 = vmatprep.subr.mxu0 0.0
      %4293 = vmatpush1.xpose.msra.mxu0 0.0
      %4294 = vmatprep.subr.mxu0 0.0
      %4295 = vmatpush1.xpose.msra.mxu0 0.0
      %4296 = vmatprep.subr.mxu0 0.0
      %4297 = vmatpush1.xpose.msra.mxu0 0.0
      %4298 = vmatprep.subr.mxu0 0.0
      %4299 = vmatpush1.xpose.msra.mxu0 0.0
      %4300 = vmatprep.subr.mxu0 0.0
      %4301 = vmatpush1.xpose.msra.mxu0 0.0
      %4302 = vmatprep.subr.mxu0 0.0
      %4303 = vmatpush1.xpose.msra.mxu0 0.0
      %4304 = vmatprep.subr.mxu0 0.0
      %4305 = vmatpush1.xpose.msra.mxu0 0.0
      %4306 = vmatprep.subr.mxu0 0.0
      %4307 = vmatpush1.xpose.msra.mxu0 0.0
      %4308 = vmatprep.subr.mxu0 0.0
      %4309 = vmatpush1.xpose.msra.mxu0 0.0
      %4310 = vmatprep.subr.mxu0 0.0
      %4311 = vmatpush1.xpose.msra.mxu0 0.0
      %4312 = vmatprep.subr.mxu0 0.0
      %4313 = vmatpush1.xpose.msra.mxu0 0.0
      %4314 = vmatprep.subr.mxu0 0.0
      %4315 = vmatpush1.xpose.msra.mxu0 0.0
      %4316 = vmatprep.subr.mxu0 0.0
      %4317 = vmatpush1.xpose.msra.mxu0 0.0
      %4318 = vmatprep.subr.mxu0 0.0
      %4319 = vmatpush1.xpose.msra.mxu0 0.0
      %4320 = vmatprep.subr.mxu0 0.0
      %4321 = vmatpush1.xpose.msra.mxu0 0.0
      %4322 = vmatprep.subr.mxu0 0.0
      %4323 = vmatpush1.xpose.msra.mxu0 0.0
      %4324 = vmatprep.subr.mxu0 0.0
      %4325 = vmatpush1.xpose.msra.mxu0 0.0
      %4326 = vmatprep.subr.mxu0 0.0
      %4327 = vmatpush1.xpose.msra.mxu0 0.0
      %4328 = vmatprep.subr.mxu0 0.0
      %4329 = vmatpush1.xpose.msra.mxu0 0.0
      %4330 = vmatprep.subr.mxu0 0.0
      %4331 = vmatpush1.xpose.msra.mxu0 0.0
      %4332 = vmatprep.subr.mxu0 0.0
      %4333 = vmatpush1.xpose.msra.mxu0 0.0
      %4334 = vmatprep.subr.mxu0 0.0
      %4335 = vmatpush1.xpose.msra.mxu0 0.0
      %4336 = vmatprep.subr.mxu0 0.0
      %4337 = vmatpush1.xpose.msra.mxu0 0.0
      %4338 = vmatprep.subr.mxu0 0.0
      %4339 = vmatpush1.xpose.msra.mxu0 0.0
      %4340 = vmatprep.subr.mxu0 0.0
      %4341 = vmatpush1.xpose.msra.mxu0 0.0
      %4342 = vmatprep.subr.mxu0 0.0
      %4343 = vmatpush1.xpose.msra.mxu0 0.0
      %4344 = vmatprep.mubr.f32.mxu0 0.0
      %4345 = vmatmul.mubr.f32.gmra.mrb[0].mxu0 %v4278
      %v4346 = vpop.f32.mrb[0].mxu0
      %v4347 = vadd.f32 0.0, %v4346
      %v4348 = vpop.f32.mrb[0].mxu0
      %4349 = vdwg.mxu0
      %v4351 = vsel %vm2004, %v4202, 0
      %4353 = vmatprep.subr.mxu0 0.0
      %4354 = vmatpush1.xpose.msra.mxu0 %v4351
      %4355 = vmatprep.subr.mxu0 0.0
      %4356 = vmatpush1.xpose.msra.mxu0 0.0
      %4357 = vmatprep.subr.mxu0 0.0
      %4358 = vmatpush1.xpose.msra.mxu0 0.0
      %4359 = vmatprep.subr.mxu0 0.0
      %4360 = vmatpush1.xpose.msra.mxu0 0.0
      %4361 = vmatprep.subr.mxu0 0.0
      %4362 = vmatpush1.xpose.msra.mxu0 0.0
      %4363 = vmatprep.subr.mxu0 0.0
      %4364 = vmatpush1.xpose.msra.mxu0 0.0
      %4365 = vmatprep.subr.mxu0 0.0
      %4366 = vmatpush1.xpose.msra.mxu0 0.0
      %4367 = vmatprep.subr.mxu0 0.0
      %4368 = vmatpush1.xpose.msra.mxu0 0.0
      %4369 = vmatprep.subr.mxu0 0.0
      %4370 = vmatpush1.xpose.msra.mxu0 0.0
      %4371 = vmatprep.subr.mxu0 0.0
      %4372 = vmatpush1.xpose.msra.mxu0 0.0
      %4373 = vmatprep.subr.mxu0 0.0
      %4374 = vmatpush1.xpose.msra.mxu0 0.0
      %4375 = vmatprep.subr.mxu0 0.0
      %4376 = vmatpush1.xpose.msra.mxu0 0.0
      %4377 = vmatprep.subr.mxu0 0.0
      %4378 = vmatpush1.xpose.msra.mxu0 0.0
      %4379 = vmatprep.subr.mxu0 0.0
      %4380 = vmatpush1.xpose.msra.mxu0 0.0
      %4381 = vmatprep.subr.mxu0 0.0
      %4382 = vmatpush1.xpose.msra.mxu0 0.0
      %4383 = vmatprep.subr.mxu0 0.0
      %4384 = vmatpush1.xpose.msra.mxu0 0.0
      %4385 = vmatprep.subr.mxu0 0.0
      %4386 = vmatpush1.xpose.msra.mxu0 0.0
      %4387 = vmatprep.subr.mxu0 0.0
      %4388 = vmatpush1.xpose.msra.mxu0 0.0
      %4389 = vmatprep.subr.mxu0 0.0
      %4390 = vmatpush1.xpose.msra.mxu0 0.0
      %4391 = vmatprep.subr.mxu0 0.0
      %4392 = vmatpush1.xpose.msra.mxu0 0.0
      %4393 = vmatprep.subr.mxu0 0.0
      %4394 = vmatpush1.xpose.msra.mxu0 0.0
      %4395 = vmatprep.subr.mxu0 0.0
      %4396 = vmatpush1.xpose.msra.mxu0 0.0
      %4397 = vmatprep.subr.mxu0 0.0
      %4398 = vmatpush1.xpose.msra.mxu0 0.0
      %4399 = vmatprep.subr.mxu0 0.0
      %4400 = vmatpush1.xpose.msra.mxu0 0.0
      %4401 = vmatprep.subr.mxu0 0.0
      %4402 = vmatpush1.xpose.msra.mxu0 0.0
      %4403 = vmatprep.subr.mxu0 0.0
      %4404 = vmatpush1.xpose.msra.mxu0 0.0
      %4405 = vmatprep.subr.mxu0 0.0
      %4406 = vmatpush1.xpose.msra.mxu0 0.0
      %4407 = vmatprep.subr.mxu0 0.0
      %4408 = vmatpush1.xpose.msra.mxu0 0.0
      %4409 = vmatprep.subr.mxu0 0.0
      %4410 = vmatpush1.xpose.msra.mxu0 0.0
      %4411 = vmatprep.subr.mxu0 0.0
      %4412 = vmatpush1.xpose.msra.mxu0 0.0
      %4413 = vmatprep.subr.mxu0 0.0
      %4414 = vmatpush1.xpose.msra.mxu0 0.0
      %4415 = vmatprep.subr.mxu0 0.0
      %4416 = vmatpush1.xpose.msra.mxu0 0.0
      %4417 = vmatprep.mubr.f32.mxu0 0.0
      %4418 = vmatmul.mubr.f32.gmra.mrb[0].mxu0 %v4351
      %v4419 = vpop.f32.mrb[0].mxu0
      %v4420 = vadd.f32 0.0, %v4419
      %v4421 = vpop.f32.mrb[0].mxu0
      %4422 = vdwg.mxu0
      %v4424 = vsel %vm2004, %v4203, 0
      %4426 = vmatprep.subr.mxu0 0.0
      %4427 = vmatpush1.xpose.msra.mxu0 %v4424
      %4428 = vmatprep.subr.mxu0 0.0
      %4429 = vmatpush1.xpose.msra.mxu0 0.0
      %4430 = vmatprep.subr.mxu0 0.0
      %4431 = vmatpush1.xpose.msra.mxu0 0.0
      %4432 = vmatprep.subr.mxu0 0.0
      %4433 = vmatpush1.xpose.msra.mxu0 0.0
      %4434 = vmatprep.subr.mxu0 0.0
      %4435 = vmatpush1.xpose.msra.mxu0 0.0
      %4436 = vmatprep.subr.mxu0 0.0
      %4437 = vmatpush1.xpose.msra.mxu0 0.0
      %4438 = vmatprep.subr.mxu0 0.0
      %4439 = vmatpush1.xpose.msra.mxu0 0.0
      %4440 = vmatprep.subr.mxu0 0.0
      %4441 = vmatpush1.xpose.msra.mxu0 0.0
      %4442 = vmatprep.subr.mxu0 0.0
      %4443 = vmatpush1.xpose.msra.mxu0 0.0
      %4444 = vmatprep.subr.mxu0 0.0
      %4445 = vmatpush1.xpose.msra.mxu0 0.0
      %4446 = vmatprep.subr.mxu0 0.0
      %4447 = vmatpush1.xpose.msra.mxu0 0.0
      %4448 = vmatprep.subr.mxu0 0.0
      %4449 = vmatpush1.xpose.msra.mxu0 0.0
      %4450 = vmatprep.subr.mxu0 0.0
      %4451 = vmatpush1.xpose.msra.mxu0 0.0
      %4452 = vmatprep.subr.mxu0 0.0
      %4453 = vmatpush1.xpose.msra.mxu0 0.0
      %4454 = vmatprep.subr.mxu0 0.0
      %4455 = vmatpush1.xpose.msra.mxu0 0.0
      %4456 = vmatprep.subr.mxu0 0.0
      %4457 = vmatpush1.xpose.msra.mxu0 0.0
      %4458 = vmatprep.subr.mxu0 0.0
      %4459 = vmatpush1.xpose.msra.mxu0 0.0
      %4460 = vmatprep.subr.mxu0 0.0
      %4461 = vmatpush1.xpose.msra.mxu0 0.0
      %4462 = vmatprep.subr.mxu0 0.0
      %4463 = vmatpush1.xpose.msra.mxu0 0.0
      %4464 = vmatprep.subr.mxu0 0.0
      %4465 = vmatpush1.xpose.msra.mxu0 0.0
      %4466 = vmatprep.subr.mxu0 0.0
      %4467 = vmatpush1.xpose.msra.mxu0 0.0
      %4468 = vmatprep.subr.mxu0 0.0
      %4469 = vmatpush1.xpose.msra.mxu0 0.0
      %4470 = vmatprep.subr.mxu0 0.0
      %4471 = vmatpush1.xpose.msra.mxu0 0.0
      %4472 = vmatprep.subr.mxu0 0.0
      %4473 = vmatpush1.xpose.msra.mxu0 0.0
      %4474 = vmatprep.subr.mxu0 0.0
      %4475 = vmatpush1.xpose.msra.mxu0 0.0
      %4476 = vmatprep.subr.mxu0 0.0
      %4477 = vmatpush1.xpose.msra.mxu0 0.0
      %4478 = vmatprep.subr.mxu0 0.0
      %4479 = vmatpush1.xpose.msra.mxu0 0.0
      %4480 = vmatprep.subr.mxu0 0.0
      %4481 = vmatpush1.xpose.msra.mxu0 0.0
      %4482 = vmatprep.subr.mxu0 0.0
      %4483 = vmatpush1.xpose.msra.mxu0 0.0
      %4484 = vmatprep.subr.mxu0 0.0
      %4485 = vmatpush1.xpose.msra.mxu0 0.0
      %4486 = vmatprep.subr.mxu0 0.0
      %4487 = vmatpush1.xpose.msra.mxu0 0.0
      %4488 = vmatprep.subr.mxu0 0.0
      %4489 = vmatpush1.xpose.msra.mxu0 0.0
      %4490 = vmatprep.mubr.f32.mxu0 0.0
      %4491 = vmatmul.mubr.f32.gmra.mrb[0].mxu0 %v4424
      %v4492 = vpop.f32.mrb[0].mxu0
      %v4493 = vadd.f32 0.0, %v4492
      %v4494 = vpop.f32.mrb[0].mxu0
      %4495 = vdwg.mxu0
      %v4496 = vcombine.low %v4274, %v4420
      %v4497 = vcombine.high %v4274, %v4420
      %v4499 = vunpack.c.l.s4 1983009808
      %v4500 = vunpack.c.0.s8 %v4499
      %v4501 = vlaneseq
      %v4502 = vshrl.u32 %v4501, 7
      %v4503 = vsub.s32 %v4500, %v4502
      %v4504 = vrot.slane %v4496, %v4503
      %v4506 = vunpack.c.l.s4 1983009808
      %v4507 = vunpack.c.0.s8 %v4506
      %v4508 = vlaneseq
      %v4509 = vshrl.u32 %v4508, 7
      %v4510 = vsub.s32 %v4507, %v4509
      %v4511 = vrot.slane %v4497, %v4510
      %v4512 = vcombine.low %v4347, %v4493
      %v4513 = vcombine.high %v4347, %v4493
      %v4515 = vunpack.c.l.s4 1983009808
      %v4516 = vunpack.c.0.s8 %v4515
      %v4517 = vlaneseq
      %v4518 = vshrl.u32 %v4517, 7
      %v4519 = vsub.s32 %v4516, %v4518
      %v4520 = vrot.slane %v4512, %v4519
      %v4522 = vunpack.c.l.s4 1983009808
      %v4523 = vunpack.c.0.s8 %v4522
      %v4524 = vlaneseq
      %v4525 = vshrl.u32 %v4524, 7
      %v4526 = vsub.s32 %v4523, %v4525
      %v4527 = vrot.slane %v4513, %v4526
      %v4528 = vcombine.low %v4504, %v4520
      %v4529 = vcombine.high %v4504, %v4520
      %v4531 = vunpack.c.l.s4 1934713408
      %v4532 = vunpack.c.0.s8 %v4531
      %v4533 = vlaneseq
      %v4534 = vshrl.u32 %v4533, 7
      %v4535 = vsub.s32 %v4532, %v4534
      %v4536 = vrot.slane %v4528, %v4535
      %v4538 = vunpack.c.l.s4 1934713408
      %v4539 = vunpack.c.0.s8 %v4538
      %v4540 = vlaneseq
      %v4541 = vshrl.u32 %v4540, 7
      %v4542 = vsub.s32 %v4539, %v4541
      %v4543 = vrot.slane %v4529, %v4542
      %v4544 = vcombine.low %v4511, %v4527
      %v4545 = vcombine.high %v4511, %v4527
      %v4547 = vunpack.c.l.s4 1934713408
      %v4548 = vunpack.c.0.s8 %v4547
      %v4549 = vlaneseq
      %v4550 = vshrl.u32 %v4549, 7
      %v4551 = vsub.s32 %v4548, %v4550
      %v4552 = vrot.slane %v4544, %v4551
      %v4553 = vcombine.high %v4536, 0.0
      %v4554 = vcombine.high %v4543, 0.0
      %v4555 = vcombine.high %v4552, 0.0
      %v4557 = vunpack.c.l.s4 1934713408
      %v4558 = vunpack.c.0.s8 %v4557
      %v4559 = vlaneseq
      %v4560 = vshrl.u32 %v4559, 7
      %v4561 = vsub.s32 %v4558, %v4560
      %v4562 = vrot.slane %v4545, %v4561
      %4564 = vrot.lane.b32.xlu0 %v4553, 7
      %v4565 = vpop.permute.xlu0 %4564
      %4568 = vrot.lane.b32.xlu0 %v4543, 14
      %v4569 = vpop.permute.xlu0 %4568
      %4572 = vrot.lane.b32.xlu0 %v4554, 21
      %v4573 = vpop.permute.xlu0 %4572
      %4576 = vrot.lane.b32.xlu0 %v4552, 28
      %v4577 = vpop.permute.xlu0 %4576
      %4580 = vrot.lane.b32.xlu0 %v4555, 35
      %v4581 = vpop.permute.xlu0 %4580
      %4584 = vrot.lane.b32.xlu0 %v4562, 42
      %v4585 = vpop.permute.xlu0 %4584
      %v4587 = vsel %vm2004, %v4536, %v4565
      %vm4588 = vcmask 113664
      %v4589 = vsel %vm4588, %v4587, %v4569
      %vm4590 = vcmask 171008
      %v4591 = vsel %vm4590, %v4589, %v4573
      %vm4592 = vcmask 228352
      %v4593 = vsel %vm4592, %v4591, %v4577
      %vm4594 = vcmask 285696
      %v4595 = vsel %vm4594, %v4593, %v4581
      %vm4596 = vcmask 343040
      %v4597 = vsel %vm4596, %v4595, %v4585
      %vm4598 = vcmask 400384
      %v4599 = vsel %vm4598, %v4597, 0.0
      %v4600 = vld [vmem:[%s14] sm:$0xff]
      %v4601 = vld [vmem:[%s14 + $0x8] sm:$0xff]
      %v4602 = vld [vmem:[%s14 + $0x10] sm:$0xff]
      %v4603 = vld [vmem:[%s14 + $0x18] sm:$0xff]
      %v4604 = vld [vmem:[%s14 + $0x20] sm:$0xff]
      %v4605 = vld [vmem:[%s14 + $0x28] sm:$0xff]
      %v4606 = vld [vmem:[%s14 + $0x30] sm:$0xff]
      %v4607 = vld [vmem:[%s14 + $0x38] sm:$0xff]
      %v4608 = vld [vmem:[%s14 + $0x40] sm:$0xff]
      %v4609 = vld [vmem:[%s14 + $0x48] sm:$0xff]
      %v4610 = vld [vmem:[%s14 + $0x50] sm:$0xff]
      %v4611 = vld [vmem:[%s14 + $0x58] sm:$0xff]
      %v4612 = vld [vmem:[%s14 + $0x60] sm:$0xff]
      %v4613 = vld [vmem:[%s14 + $0x68] sm:$0xff]
      %v4614 = vld [vmem:[%s14 + $0x70] sm:$0xff]
      %v4615 = vld [vmem:[%s14 + $0x78] sm:$0xff]
      %v4616 = vld [vmem:[%s15] sm:$0x1]
      %v4618 = vlaneseq
      %v4619 = vshrl.u32 %v4618, 7
      %v4620 = vsub.s32 0, %v4619
      %v4621 = vrot.slane %v4616, %v4620
      %4623 = vmatprep.subr.mxu0 0.0
      %4624 = vmatpush1.xpose.msra.mxu0 %v4600
      %4625 = vmatprep.subr.mxu0 0.0
      %4626 = vmatpush1.xpose.msra.mxu0 %v4601
      %4627 = vmatprep.subr.mxu0 0.0
      %4628 = vmatpush1.xpose.msra.mxu0 %v4602
      %4629 = vmatprep.subr.mxu0 0.0
      %4630 = vmatpush1.xpose.msra.mxu0 %v4603
      %4631 = vmatprep.subr.mxu0 0.0
      %4632 = vmatpush1.xpose.msra.mxu0 %v4604
      %4633 = vmatprep.subr.mxu0 0.0
      %4634 = vmatpush1.xpose.msra.mxu0 %v4605
      %4635 = vmatprep.subr.mxu0 0.0
      %4636 = vmatpush1.xpose.msra.mxu0 %v4606
      %4637 = vmatprep.subr.mxu0 0.0
      %4638 = vmatpush1.xpose.msra.mxu0 %v4607
      %4639 = vmatprep.subr.mxu0 0.0
      %4640 = vmatpush1.xpose.msra.mxu0 %v4608
      %4641 = vmatprep.subr.mxu0 0.0
      %4642 = vmatpush1.xpose.msra.mxu0 %v4609
      %4643 = vmatprep.subr.mxu0 0.0
      %4644 = vmatpush1.xpose.msra.mxu0 %v4610
      %4645 = vmatprep.subr.mxu0 0.0
      %4646 = vmatpush1.xpose.msra.mxu0 %v4611
      %4647 = vmatprep.subr.mxu0 0.0
      %4648 = vmatpush1.xpose.msra.mxu0 %v4612
      %4649 = vmatprep.subr.mxu0 0.0
      %4650 = vmatpush1.xpose.msra.mxu0 %v4613
      %4651 = vmatprep.subr.mxu0 0.0
      %4652 = vmatpush1.xpose.msra.mxu0 %v4614
      %4653 = vmatprep.subr.mxu0 0.0
      %4654 = vmatpush1.xpose.msra.mxu0 %v4615
      %4655 = vmatprep.subr.mxu0 0.0
      %4656 = vmatpush1.xpose.msra.mxu0 0.0
      %4657 = vmatprep.subr.mxu0 0.0
      %4658 = vmatpush1.xpose.msra.mxu0 0.0
      %4659 = vmatprep.subr.mxu0 0.0
      %4660 = vmatpush1.xpose.msra.mxu0 0.0
      %4661 = vmatprep.subr.mxu0 0.0
      %4662 = vmatpush1.xpose.msra.mxu0 0.0
      %4663 = vmatprep.subr.mxu0 0.0
      %4664 = vmatpush1.xpose.msra.mxu0 0.0
      %4665 = vmatprep.subr.mxu0 0.0
      %4666 = vmatpush1.xpose.msra.mxu0 0.0
      %4667 = vmatprep.subr.mxu0 0.0
      %4668 = vmatpush1.xpose.msra.mxu0 0.0
      %4669 = vmatprep.subr.mxu0 0.0
      %4670 = vmatpush1.xpose.msra.mxu0 0.0
      %4671 = vmatprep.subr.mxu0 0.0
      %4672 = vmatpush1.xpose.msra.mxu0 0.0
      %4673 = vmatprep.subr.mxu0 0.0
      %4674 = vmatpush1.xpose.msra.mxu0 0.0
      %4675 = vmatprep.subr.mxu0 0.0
      %4676 = vmatpush1.xpose.msra.mxu0 0.0
      %4677 = vmatprep.subr.mxu0 0.0
      %4678 = vmatpush1.xpose.msra.mxu0 0.0
      %4679 = vmatprep.subr.mxu0 0.0
      %4680 = vmatpush1.xpose.msra.mxu0 0.0
      %4681 = vmatprep.subr.mxu0 0.0
      %4682 = vmatpush1.xpose.msra.mxu0 0.0
      %4683 = vmatprep.subr.mxu0 0.0
      %4684 = vmatpush1.xpose.msra.mxu0 0.0
      %4685 = vmatprep.subr.mxu0 0.0
      %4686 = vmatpush1.xpose.msra.mxu0 0.0
      %4687 = vmatprep.mubr.f32.mxu0 0.0
      %4688 = vmatmul.mubr.f32.gmra.mrb[0].mxu0 %v4599
      %v4689 = vpop.f32.mrb[0].mxu0
      %v4690 = vadd.f32 %v4621, %v4689
      %v4691 = vpop.f32.mrb[0].mxu0
      %4692 = vdwg.mxu0
      %v4693 = vadd.f32 %v4690, %v4599
      %v4694 = vmax.f32 %v4693, 0.0
      %v4695 = vld [vmem:[%s16] sm:$0xf]
      %v4697 = vsel %vm874, %v4695, 0
      %v4700 = vsel %vm878, %v4694, 0
      %4702 = vmatprep.subr.mxu0 0.0
      %4703 = vmatpush1.msra.mxu0 %v4700
      %4704 = vmatprep.subr.mxu0 0.0
      %4705 = vmatpush1.msra.mxu0 0.0
      %4706 = vmatprep.subr.mxu0 0.0
      %4707 = vmatpush1.msra.mxu0 0.0
      %4708 = vmatprep.subr.mxu0 0.0
      %4709 = vmatpush1.msra.mxu0 0.0
      %4710 = vmatprep.subr.mxu0 0.0
      %4711 = vmatpush1.msra.mxu0 0.0
      %4712 = vmatprep.subr.mxu0 0.0
      %4713 = vmatpush1.msra.mxu0 0.0
      %4714 = vmatprep.subr.mxu0 0.0
      %4715 = vmatpush1.msra.mxu0 0.0
      %4716 = vmatprep.subr.mxu0 0.0
      %4717 = vmatpush1.msra.mxu0 0.0
      %4718 = vmatprep.subr.mxu0 0.0
      %4719 = vmatpush1.msra.mxu0 0.0
      %4720 = vmatprep.subr.mxu0 0.0
      %4721 = vmatpush1.msra.mxu0 0.0
      %4722 = vmatprep.subr.mxu0 0.0
      %4723 = vmatpush1.msra.mxu0 0.0
      %4724 = vmatprep.subr.mxu0 0.0
      %4725 = vmatpush1.msra.mxu0 0.0
      %4726 = vmatprep.subr.mxu0 0.0
      %4727 = vmatpush1.msra.mxu0 0.0
      %4728 = vmatprep.subr.mxu0 0.0
      %4729 = vmatpush1.msra.mxu0 0.0
      %4730 = vmatprep.subr.mxu0 0.0
      %4731 = vmatpush1.msra.mxu0 0.0
      %4732 = vmatprep.subr.mxu0 0.0
      %4733 = vmatpush1.msra.mxu0 0.0
      %4734 = vmatprep.subr.mxu0 0.0
      %4735 = vmatpush1.msra.mxu0 0.0
      %4736 = vmatprep.subr.mxu0 0.0
      %4737 = vmatpush1.msra.mxu0 0.0
      %4738 = vmatprep.subr.mxu0 0.0
      %4739 = vmatpush1.msra.mxu0 0.0
      %4740 = vmatprep.subr.mxu0 0.0
      %4741 = vmatpush1.msra.mxu0 0.0
      %4742 = vmatprep.subr.mxu0 0.0
      %4743 = vmatpush1.msra.mxu0 0.0
      %4744 = vmatprep.subr.mxu0 0.0
      %4745 = vmatpush1.msra.mxu0 0.0
      %4746 = vmatprep.subr.mxu0 0.0
      %4747 = vmatpush1.msra.mxu0 0.0
      %4748 = vmatprep.subr.mxu0 0.0
      %4749 = vmatpush1.msra.mxu0 0.0
      %4750 = vmatprep.subr.mxu0 0.0
      %4751 = vmatpush1.msra.mxu0 0.0
      %4752 = vmatprep.subr.mxu0 0.0
      %4753 = vmatpush1.msra.mxu0 0.0
      %4754 = vmatprep.subr.mxu0 0.0
      %4755 = vmatpush1.msra.mxu0 0.0
      %4756 = vmatprep.subr.mxu0 0.0
      %4757 = vmatpush1.msra.mxu0 0.0
      %4758 = vmatprep.subr.mxu0 0.0
      %4759 = vmatpush1.msra.mxu0 0.0
      %4760 = vmatprep.subr.mxu0 0.0
      %4761 = vmatpush1.msra.mxu0 0.0
      %4762 = vmatprep.subr.mxu0 0.0
      %4763 = vmatpush1.msra.mxu0 0.0
      %4764 = vmatprep.subr.mxu0 0.0
      %4765 = vmatpush1.msra.mxu0 0.0
      %4766 = vmatprep.mubr.f32.mxu0 0.0
      %4767 = vmatmul.mubr.f32.gmra.mrb[0].mxu0 %v4697
      %v4768 = vpop.f32.mrb[0].mxu0
      %v4769 = vadd.f32 0.0, %v4768
      %v4770 = vpop.f32.mrb[0].mxu0
      %4771 = vdwg.mxu0
      %v4772 = vsel %vm878, %v4769, -inf
      %v4773 = vrot.slane %v4772, 4
      %v4774 = vmax.f32 %v4772, %v4773
      %v4775 = vrot.slane %v4774, 2
      %v4776 = vmax.f32 %v4774, %v4775
      %v4777 = vrot.slane %v4776, 1
      %v4778 = vmax.f32 %v4776, %v4777
      %v4779 = vsub.f32 %v4769, %v4778
      %v4780 = vmul.f32 %v4779, 1.442695
      %v4781 = vpow.pop %v4780
      %v4782 = vsel %vm878, %v4781, 0.0
      %v4783 = vrot.slane %v4782, 4
      %v4784 = vadd.f32 %v4782, %v4783
      %v4785 = vrot.slane %v4784, 2
      %v4786 = vadd.f32 %v4784, %v4785
      %v4787 = vrot.slane %v4786, 1
      %v4788 = vadd.f32 %v4786, %v4787
      %v4789 = vrcp.pop %v4788
      %v4790 = vmul.f32 %v4781, %v4789
      %4791 = vst [vmem:[%s645] sm:$0xf] %v4790
      %p4792 = scmp.lt.s32.totalorder %s31, 1
      %s4793 = scalar_select %p4792, %s31, 1
      %s4794 = smul.addr %s4793, 2
      %s4795 = smul.addr %s4794, 4
      %s4796 = scalar_lea.vmem %s17, %s4795
      %p4797 = scmp.lt.s32.totalorder %s31, 1
      %s4798 = scalar_select %p4797, %s31, 1
      %s4799 = smul.addr %s4798, 2
      %s4800 = smul.addr %s4799, 4
      %s4801 = scalar_lea.vmem %s18, %s4800
      %p4802 = scmp.lt.s32.totalorder %s31, 1
      %s4803 = scalar_select %p4802, %s31, 1
      %s4804 = smul.addr %s4803, 4
      %s4805 = scalar_lea.vmem %s19, %s4804
      // Predicated region
      $region89: #{region_unit_forward.3} parent=87 // pred_check
        %p4806 = pneg %p416
      $region90: #{region_unit_forward.3} parent=87 // pred_check_branch
        %4808 = sbr.rel (%p4806) target = $region92
      $region91: #{region_unit_forward.3} parent=87 // pred_region
        _
      $region92: #{region_unit_forward.3} parent=87 // pred_fallthru
        _
      // Predicated region
      $region93: #{region_unit_forward.3} parent=87 // pred_check
        %p4809 = pneg %p442
      $region94: #{region_unit_forward.3} parent=87 // pred_check_branch
        %4811 = sbr.rel (%p4809) target = $region96
      $region95: #{region_unit_forward.3} parent=87 // pred_region
        _
      $region96: #{region_unit_forward.3} parent=87 // pred_fallthru
        _
      // Predicated region
      $region97: #{region_unit_forward.3} parent=87 // pred_check
        %p4812 = pneg %p468
      $region98: #{region_unit_forward.3} parent=87 // pred_check_branch
        %4814 = sbr.rel (%p4812) target = $region100
      $region99: #{region_unit_forward.3} parent=87 // pred_region
        _
      $region100: #{region_unit_forward.3} parent=87 // pred_fallthru
        _
    $region88: #{region_unit_forward.3} parent=5 // pred_fallthru
      _
    %p4815 = scmp.le.s32.totalorder 2, %s26
    // Predicated region
    $region101: #{region_unit_forward.3} parent=5 // pred_check
      %p4816 = pneg %p4815
    $region102: #{region_unit_forward.3} parent=5 // pred_check_branch
      %4818 = sbr.rel (%p4816) target = $region104
    $region103: #{region_unit_forward.3} parent=5 // pred_region
      %s4819 = ssub.s32 %s26, 2
      // Predicated region
      $region105: #{region_unit_forward.3} parent=103 // pred_check
        %p4820 = pneg %p422
      $region106: #{region_unit_forward.3} parent=103 // pred_check_branch
        %4822 = sbr.rel (%p4820) target = $region108
      $region107: #{region_unit_forward.3} parent=103 // pred_region
        %p4823 = scmp.lt.s32.totalorder %s32, 1
        %s4824 = scalar_select %p4823, %s32, 1
        %s4825 = smul.addr %s4824, 2
        %s4826 = smul.addr %s4825, 4
        %s4827 = scalar_lea.vmem %s17, %s4826
      $region108: #{region_unit_forward.3} parent=103 // pred_fallthru
        _
      // Predicated region
      $region109: #{region_unit_forward.3} parent=103 // pred_check
        %p4828 = pneg %p448
      $region110: #{region_unit_forward.3} parent=103 // pred_check_branch
        %4830 = sbr.rel (%p4828) target = $region112
      $region111: #{region_unit_forward.3} parent=103 // pred_region
        %p4831 = scmp.lt.s32.totalorder %s32, 1
        %s4832 = scalar_select %p4831, %s32, 1
        %s4833 = smul.addr %s4832, 2
        %s4834 = smul.addr %s4833, 4
        %s4835 = scalar_lea.vmem %s18, %s4834
      $region112: #{region_unit_forward.3} parent=103 // pred_fallthru
        _
      // Predicated region
      $region113: #{region_unit_forward.3} parent=103 // pred_check
        %p4836 = pneg %p474
      $region114: #{region_unit_forward.3} parent=103 // pred_check_branch
        %4838 = sbr.rel (%p4836) target = $region116
      $region115: #{region_unit_forward.3} parent=103 // pred_region
        %p4839 = scmp.lt.s32.totalorder %s32, 1
        %s4840 = scalar_select %p4839, %s32, 1
        %s4841 = smul.addr %s4840, 4
        %s4842 = scalar_lea.vmem %s19, %s4841
      $region116: #{region_unit_forward.3} parent=103 // pred_fallthru
        _
    $region104: #{region_unit_forward.3} parent=5 // pred_fallthru
      _
  $region6: #{region_unit_forward.3} parent=0 // loop_footer
    %s30 = sadd.s32 1, %s26
  $region7: #{region_unit_forward.3} parent=0 // loop_footer_branch
    %25 = sbr.rel target = $region3
  $region8: #{region_unit_forward.3} parent=0 // loop_exit
    _

</llo_original>
